<compile_context>
chip_gen: v6e
topology: v6e:2x2x1
jax: 0.10.0
libtpu: 0.0.40
codegen_flags: <defaults>
</compile_context>

<pallas_src>
import itertools
import numpy as np

import jax
import jax.numpy as jnp
from jax import lax
from jax.experimental import pallas as pl
from jax.experimental.pallas import tpu as pltpu


def _round_up(v, m):
    return (v + m - 1) // m * m


# -----------------------------------------------------------------------------
# Kernel
# -----------------------------------------------------------------------------
def _make_graphnet_kernel(dims, woffs, boffs):
    """Builds the kernel, closing over all static shape constants / slab offsets."""
    Bt = dims['Bt']
    N = dims['N']          # true number of constituents
    Np = dims['Np']        # padded to a multiple of 8
    Nvp = dims['Nvp']      # padded number of SVs
    P = dims['P']
    S = dims['S']
    H = dims['H']
    De = dims['De']
    Do = dims['Do']
    Nrp = dims['Nrp']      # padded number of edges
    kv_col = dims['kv_col']

    def kernel(x_ref, y_ref, rel_ref, rr_ref, w_ref, b_ref, out_ref):
        cdt = w_ref.dtype                       # operand dtype of the MXU matmuls
        relu = lambda v: jnp.maximum(v, 0.0)

        W = w_ref[...]                          # packed weight slab (kmax, Cpad)
        Bsl = b_ref[...]                        # packed bias slab (8, 128+), f32

        def wmat(name):                         # static, 128-aligned slab slice
            k, c0, c1 = woffs[name]
            return W[0:k, c0:c1]

        def bias(i):
            r, wd = boffs[i]
            return Bsl[r:r + 1, 0:wd]

        def mm(a, wm):                          # 2-D matmul, f32 accumulation
            return jnp.dot(a.astype(cdt), wm.astype(cdt),
                           preferred_element_type=jnp.float32)

        # fold:   rows (Bt*R, feat) jet-major  ->  lanes (R, Bt*w) jet-major
        def fold(rows, R, c0, c1):
            return jnp.concatenate(
                [rows[b * R:(b + 1) * R, c0:c1] for b in range(Bt)], axis=1)

        # unfold: lanes (R, Bt*w) jet-major    ->  rows (Bt*R, w) jet-major
        def unfold(folded, w):
            return jnp.concatenate(
                [folded[:, b * w:(b + 1) * w] for b in range(Bt)], axis=0)

        # ---- per-object input projections (one fused big-M matmul each) ---------
        x_rows = x_ref[...].reshape(Bt * Np, P)       # (Bt*N, P)  jet-major rows
        y_rows = y_ref[...].reshape(Bt * Nvp, S)      # (Bt*Nv, S)
        XP = mm(x_rows, wmat('wx'))                   # (Bt*N, 3H) = [x@Wr | x@Ws | x@Wk]
        YP = mm(y_rows, wmat('wy'))                   # (Bt*Nv, H) =  y@Wv

        # ---- K-fused one-hot gathers: batch folded into lanes, 2-D matmuls ------
        rel = rel_ref[...]
        rel_rs = rel[:, 0:2 * Np]                     # [Rr^T | Rs^T]   (Nrp, 2Np)
        rel_kv = rel[:, kv_col:kv_col + Np + Nvp]     # [Rk^T | Rv^T]   (Nrp, Np+Nvp)

        rhs_tt = jnp.concatenate(                     # (2Np, Bt*H)
            [fold(XP, Np, 0, H), fold(XP, Np, H, 2 * H)], axis=0)
        rhs_sv = jnp.concatenate(                     # (Np+Nvp, Bt*H)
            [fold(XP, Np, 2 * H, 3 * H), fold(YP, Nvp, 0, H)], axis=0)
        gat_tt = mm(rel_rs, rhs_tt)                   # (Nrp, Bt*H)
        gat_sv = mm(rel_kv, rhs_sv)                   # (Nrp, Bt*H)

        h_tt = relu(unfold(gat_tt, H) + bias(0)).astype(cdt)   # (Bt*Nr, H)
        h_sv = relu(unfold(gat_sv, H) + bias(1)).astype(cdt)   # (Bt*Nr, H)

        # ---- shared fr2/fr3 applied to BOTH branches in one stacked matmul ------
        hcat = jnp.concatenate([h_tt, h_sv], axis=0)            # (2*Bt*Nr, H)
        gmid = relu(mm(hcat, wmat('fr2')) + bias(2))            # (2*Bt*Nr, H/2)
        E = relu(mm(gmid, wmat('fr3')) + bias(3))               # (2*Bt*Nr, De)

        # ---- fused aggregation (PyTorch quirk: Rr aggregates BOTH branches) -----
        e_cols = []
        for b in range(Bt):
            e_cols.append(E[b * Nrp:(b + 1) * Nrp, :])               # tt edges, jet b
            e_cols.append(E[(Bt + b) * Nrp:(Bt + b + 1) * Nrp, :])   # sv edges, jet b
        E_fold = jnp.concatenate(e_cols, axis=1)       # (Nrp, Bt*2De)
        Ebar_fold = mm(rr_ref[...], E_fold)            # (Np, Bt*2De), one matmul
        Ebar = unfold(Ebar_fold, 2 * De)               # (Bt*N, 2De) = [Ebar | Ebar_sv]

        # ---- object MLP: fo1(cat[x, Ebar, Ebar_sv]) as two summed matmuls -------
        o = relu(mm(x_rows, wmat('fo1x')) + mm(Ebar, wmat('fo1e')) + bias(4))
        o = relu(mm(o, wmat('fo2')) + bias(5))                   # (Bt*N, H/2)
        O = relu(mm(o, wmat('fo3')) + bias(6))                   # (Bt*N, Do)

        O3 = O.reshape(Bt, Np, Do)
        if Np != N:   # padded tracks picked up biases; zero them before the sum
            keep = lax.broadcasted_iota(jnp.int32, (Bt, Np, Do), 1) < N
            O3 = jnp.where(keep, O3, 0.0)
        Osum = jnp.sum(O3, axis=1)                               # (Bt, Do)

        # lane-dense final layer: fcf weights/bias are zero-padded to 128 columns
        out = relu(mm(Osum, wmat('fcf')) + bias(7))              # (Bt, 128)
        out_ref[...] = out.astype(out_ref.dtype)

    return kernel


# -----------------------------------------------------------------------------
# Wrapper
# -----------------------------------------------------------------------------
def _default_vmem_limit():
    try:
        cap = int(getattr(pltpu.get_tpu_info(), 'vmem_capacity_bytes'))
        return int(max(32 * 1024 * 1024, min(int(cap * 0.75), 100 * 1024 * 1024)))
    except Exception:
        return 64 * 1024 * 1024


def graphnet_forward(x, y, consts, w, *, batch_tile=8, compute_dtype=jnp.bfloat16):
    """x: (B, P, N) f32, y: (B, S, Nv) f32 (PyTorch layout). Returns (B, n_targets).

    batch_tile: jets per grid step. Guidance: 32-128 on v5e/v6e, roughly half on
    v7x (64 MiB VMEM/TC); keep (padded B)//batch_tile >= 2 so both v7x
    TensorCores get work.  compute_dtype=bfloat16 (default) runs the MXU matmuls
    with bf16 operands and f32 accumulation; pass float32 for exact semantics.
    """
    B, P, N = x.shape
    _, S, Nv = y.shape
    H = int(w['fr2_w'].shape[0])
    De = int(w['fr3_w'].shape[1])
    Do = int(w['fo3_w'].shape[1])
    NT = int(w['fcf_w'].shape[1])
    Nr = int(consts['Rr'].shape[1])

    Bt = _round_up(max(1, min(batch_tile, B)), 8)
    Np = _round_up(N, 8)
    Nvp = _round_up(Nv, 8)
    Nrp = _round_up(Nr, 8)
    Bp = _round_up(B, Bt)
    NTp = _round_up(NT, 128)                    # lane-dense output block

    # ---- layout glue: (B, feat, obj) -> (B, obj, feat) + zero padding -----------
    xT = jnp.pad(jnp.swapaxes(x, 1, 2).astype(jnp.float32),
                 ((0, Bp - B), (0, Np - N), (0, 0)))
    yT = jnp.pad(jnp.swapaxes(y, 1, 2).astype(jnp.float32),
                 ((0, Bp - B), (0, Nvp - Nv), (0, 0)))

    # ---- relation slab: [Rr^T|Rs^T] and [Rk^T|Rv^T] (128-aligned column blocks) -
    kv_col = _round_up(2 * Np, 128)
    rel_cols = _round_up(kv_col + Np + Nvp, 128)
    rel_np = np.zeros((Nrp, rel_cols), np.float32)
    rel_np[:Nr, 0:N] = np.asarray(consts['Rr']).T
    rel_np[:Nr, Np:Np + N] = np.asarray(consts['Rs']).T
    rel_np[:Nr, kv_col:kv_col + N] = np.asarray(consts['Rk']).T
    rel_np[:Nr, kv_col + Np:kv_col + Np + Nv] = np.asarray(consts['Rv']).T
    rel = jnp.asarray(rel_np, compute_dtype)    # 0/1 entries: exact in bf16

    rr_np = np.zeros((Np, Nrp), np.float32)
    rr_np[:N, :Nr] = np.asarray(consts['Rr'])
    rr = jnp.asarray(rr_np, compute_dtype)

    # ---- weight slab: all matrices packed, column starts 128-aligned -----------
    fcf_pad = np.zeros((Do, NTp), np.float32)
    fcf_pad[:, :NT] = np.asarray(w['fcf_w'], np.float32)
    wmats = {
        'wx':  jnp.concatenate([w['fr1_w'][:P], w['fr1_w'][P:], w['fr1sv_w'][:P]], axis=1),
        'wy':  w['fr1sv_w'][P:],
        'fr2': w['fr2_w'], 'fr3': w['fr3_w'],
        'fo1x': w['fo1_w'][:P], 'fo1e': w['fo1_w'][P:],     # stacked (2De, H) block
        'fo2': w['fo2_w'], 'fo3': w['fo3_w'],
        'fcf': jnp.asarray(fcf_pad),                         # lane-dense final layer
    }
    kmax = _round_up(max(int(m.shape[0]) for m in wmats.values()), 8)
    woffs, col = {}, 0
    for nme, m in wmats.items():
        kdim, cdim = int(m.shape[0]), int(m.shape[1])
        woffs[nme] = (kdim, col, col + cdim)
        col = _round_up(col + cdim, 128)
    wslab_np = np.zeros((kmax, col), np.float32)
    for nme, m in wmats.items():
        kdim, c0, c1 = woffs[nme]
        wslab_np[:kdim, c0:c1] = np.asarray(m, np.float32)
    wslab = jnp.asarray(wslab_np, compute_dtype)

    # ---- bias slab: one bias per row, f32 (bias/ReLU stay f32 on all chips) -----
    bnames = ['fr1_b', 'fr1sv_b', 'fr2_b', 'fr3_b', 'fo1_b', 'fo2_b', 'fo3_b', 'fcf_b']
    bw = [int(np.asarray(w[nme]).reshape(-1).shape[0]) for nme in bnames]
    bcols = _round_up(max(max(bw), NTp), 128)
    bslab_np = np.zeros((8, bcols), np.float32)
    for i, nme in enumerate(bnames):
        bslab_np[i, :bw[i]] = np.asarray(w[nme], np.float32).reshape(-1)
    boffs = [(i, bw[i]) for i in range(8)]
    boffs[7] = (7, NTp)          # final bias slice is lane-dense (zeros past NT)
    bslab = jnp.asarray(bslab_np)

    dims = dict(Bt=Bt, N=N, Np=Np, Nvp=Nvp, P=P, S=S, H=H, De=De, Do=Do,
                Nrp=Nrp, kv_col=kv_col)
    kernel = _make_graphnet_kernel(dims, woffs, boffs)

    # Grid-invariant inputs (rel/rr/wslab/bslab) keep block index (0,0), so they
    # are DMA'd once and never re-fetched across grid steps.
    in_specs = [
        pl.BlockSpec((Bt, Np, P), lambda g: (g, 0, 0)),
        pl.BlockSpec((Bt, Nvp, S), lambda g: (g, 0, 0)),
        pl.BlockSpec(rel.shape, lambda g: (0, 0)),
        pl.BlockSpec(rr.shape, lambda g: (0, 0)),
        pl.BlockSpec(wslab.shape, lambda g: (0, 0)),
        pl.BlockSpec(bslab.shape, lambda g: (0, 0)),
    ]

    flops = 2 * Bp * (
        Np * P * 3 * H + Nvp * S * H
        + Nrp * (2 * Np) * H + Nrp * (Np + Nvp) * H
        + 2 * Nrp * H * (H // 2) + 2 * Nrp * (H // 2) * De
        + Np * Nrp * 2 * De
        + Np * (P + 2 * De) * H + Np * H * (H // 2) + Np * (H // 2) * Do
        + Do * NTp)
    bytes_accessed = int(
        xT.size * 4 + yT.size * 4
        + rel.size * rel.dtype.itemsize + rr.size * rr.dtype.itemsize
        + wslab.size * wslab.dtype.itemsize + bslab.size * 4 + Bp * NTp * 4)

    out = pl.pallas_call(
        kernel,
        out_shape=jax.ShapeDtypeStruct((Bp, NTp), jnp.float32),
        grid=(Bp // Bt,),
        in_specs=in_specs,
        out_specs=pl.BlockSpec((Bt, NTp), lambda g: (g, 0)),
        compiler_params=pltpu.CompilerParams(
            dimension_semantics=("parallel",),
            vmem_limit_bytes=_default_vmem_limit()),
        cost_estimate=pl.CostEstimate(flops=int(flops),
                                      transcendentals=0,
                                      bytes_accessed=bytes_accessed),
    )(xT, yT, rel, rr, wslab, bslab)

    return out[:B, :NT]


# -----------------------------------------------------------------------------
# Module constants / weights (mirrors GraphNet.__init__, including its quirks)
# -----------------------------------------------------------------------------
def build_relation_matrices(N, Nv):
    Nr = N * (N - 1)
    Rr = np.zeros((N, Nr), np.float32)
    Rs = np.zeros((N, Nr), np.float32)
    for i, (r, s) in enumerate(p for p in itertools.product(range(N), range(N)) if p[0] != p[1]):
        Rr[r, i] = 1.0
        Rs[s, i] = 1.0
    # NOTE: intentionally identical to GraphNet.assign_matrices_SV (same Nr-wide
    # matrices, same i[0]!=i[1] filter), so the kernel matches PyTorch forward().
    sv_pairs = [p for p in itertools.product(range(N), range(Nv)) if p[0] != p[1]]
    assert len(sv_pairs) <= Nr, "SV pair list would overflow the Nr-wide Rk/Rv"
    Rk = np.zeros((N, Nr), np.float32)
    Rv = np.zeros((Nv, Nr), np.float32)
    for i, (k, v) in enumerate(sv_pairs):
        Rk[k, i] = 1.0
        Rv[v, i] = 1.0
    return {'Rr': jnp.asarray(Rr), 'Rs': jnp.asarray(Rs),
            'Rk': jnp.asarray(Rk), 'Rv': jnp.asarray(Rv)}


def init_weights(key, P, S, hidden, De, Do, n_targets):
    hh = hidden // 2
    shapes = dict(
        fr1_w=(2 * P, hidden), fr1_b=(1, hidden),
        fr1sv_w=(P + S, hidden), fr1sv_b=(1, hidden),
        fr2_w=(hidden, hh), fr2_b=(1, hh),
        fr3_w=(hh, De), fr3_b=(1, De),
        fo1_w=(P + 2 * De, hidden), fo1_b=(1, hidden),
        fo2_w=(hidden, hh), fo2_b=(1, hh),
        fo3_w=(hh, Do), fo3_b=(1, Do),
        fcf_w=(Do, n_targets), fcf_b=(1, n_targets),
    )
    names = sorted(shapes)
    keys = jax.random.split(key, len(names))
    return {name: (0.1 * jax.random.normal(k, shapes[name])).astype(jnp.float32)
            for name, k in zip(names, keys)}


# -----------------------------------------------------------------------------
# Pure-JAX reference (mirror of the PyTorch forward, with optional operand cast)
# -----------------------------------------------------------------------------
def graphnet_reference(x, y, consts, w, compute_dtype=jnp.float32):
    relu = jax.nn.relu
    cd = compute_dtype
    Rr, Rs, Rk, Rv = consts['Rr'], consts['Rs'], consts['Rk'], consts['Rv']

    def tmul(a, m):                     # torch tmul: batched a @ m (one-hot gathers, f32)
        return jnp.einsum('bij,jk->bik', a, m, preferred_element_type=jnp.float32)

    def lin(a, wk, bk):                 # nn.Linear with operands in compute dtype, f32 accum
        return jnp.dot(a.astype(cd), w[wk].astype(cd),
                       preferred_element_type=jnp.float32) + w[bk]

    Orr, Ors = tmul(x, Rr), tmul(x, Rs)
    Bm = jnp.swapaxes(jnp.concatenate([Orr, Ors], axis=1), 1, 2)
    Bm = relu(lin(Bm, 'fr1_w', 'fr1_b'))
    Bm = relu(lin(Bm, 'fr2_w', 'fr2_b'))
    E = relu(lin(Bm, 'fr3_w', 'fr3_b'))
    Ebar = tmul(jnp.swapaxes(E, 1, 2), Rr.T)

    Ork, Orv = tmul(x, Rk), tmul(y, Rv)
    Bm = jnp.swapaxes(jnp.concatenate([Ork, Orv], axis=1), 1, 2)
    Bm = relu(lin(Bm, 'fr1sv_w', 'fr1sv_b'))
    Bm = relu(lin(Bm, 'fr2_w', 'fr2_b'))
    E = relu(lin(Bm, 'fr3_w', 'fr3_b'))
    Ebar_sv = tmul(jnp.swapaxes(E, 1, 2), Rr.T)

    C = jnp.swapaxes(jnp.concatenate([x, Ebar, Ebar_sv], axis=1), 1, 2)
    C = relu(lin(C, 'fo1_w', 'fo1_b'))
    C = relu(lin(C, 'fo2_w', 'fo2_b'))
    O = relu(lin(C, 'fo3_w', 'fo3_b'))
    Osum = jnp.sum(O, axis=1)
    return relu(jnp.dot(Osum.astype(cd), w['fcf_w'].astype(cd),
                        preferred_element_type=jnp.float32) + w['fcf_b'])


if __name__ == "__main__":
    # Small shapes consistent with the module: N constituents, P track features,
    # S SV features, Nv secondary vertices; De=5, Do=6, n_targets=2 as in __init__.
    B, Ncon, P, S, Nv = 12, 8, 6, 4, 4
    hidden, De, Do, n_targets = 32, 5, 6, 2

    key = jax.random.PRNGKey(0)
    kx, ky, kw = jax.random.split(key, 3)
    x = jax.random.normal(kx, (B, P, Ncon), dtype=jnp.float32)
    y = jax.random.normal(ky, (B, S, Nv), dtype=jnp.float32)

    consts = build_relation_matrices(Ncon, Nv)
    weights = init_weights(kw, P, S, hidden, De, Do, n_targets)

    # float32 path (exact module semantics)
    out32 = jax.block_until_ready(
        graphnet_forward(x, y, consts, weights, batch_tile=8, compute_dtype=jnp.float32))
    ref32 = graphnet_reference(x, y, consts, weights, compute_dtype=jnp.float32)
    np.testing.assert_allclose(np.asarray(out32), np.asarray(ref32), rtol=1e-2, atol=1e-3)

    # bfloat16-operand path (v6e/v7x MXU default), checked against a cast-mirrored reference
    outbf = jax.block_until_ready(
        graphnet_forward(x, y, consts, weights, batch_tile=8, compute_dtype=jnp.bfloat16))
    refbf = graphnet_reference(x, y, consts, weights, compute_dtype=jnp.bfloat16)
    np.testing.assert_allclose(np.asarray(outbf), np.asarray(refbf), rtol=1e-1, atol=2e-2)

    print("KERNEL_OK")
</pallas_src>

<mosaic_0001>
module attributes {stable_mosaic.version = 11 : i64} {
  func.func @kernel(%arg0: i32, %arg1: memref<8x8x6xf32, #tpu.memory_space<vmem>>, %arg2: memref<8x8x4xf32, #tpu.memory_space<vmem>>, %arg3: memref<56x256xf32, #tpu.memory_space<vmem>>, %arg4: memref<8x56xf32, #tpu.memory_space<vmem>>, %arg5: memref<32x1152xf32, #tpu.memory_space<vmem>>, %arg6: memref<8x128xf32, #tpu.memory_space<vmem>>, %arg7: memref<8x128xf32, #tpu.memory_space<vmem>>) attributes {dimension_semantics = [#tpu.dimension_semantics<parallel>], iteration_bounds = array<i64: 2>, scalar_prefetch = 0 : i64, scratch_operands = 0 : i64, tpu.core_type = #tpu.core_type<tc>, window_params = [{transform_indices = @transform_0, window_bounds = array<i64: 8, 8, 6>}, {transform_indices = @transform_1, window_bounds = array<i64: 8, 8, 4>}, {pipeline_mode = #tpu.pipeline_mode<synchronous>, transform_indices = @transform_2, window_bounds = array<i64: 56, 256>}, {pipeline_mode = #tpu.pipeline_mode<synchronous>, transform_indices = @transform_3, window_bounds = array<i64: 8, 56>}, {pipeline_mode = #tpu.pipeline_mode<synchronous>, transform_indices = @transform_4, window_bounds = array<i64: 32, 1152>}, {pipeline_mode = #tpu.pipeline_mode<synchronous>, transform_indices = @transform_5, window_bounds = array<i64: 8, 128>}, {transform_indices = @transform_6, window_bounds = array<i64: 8, 128>}]} {
    %c0 = arith.constant 0 : index
    %c0_0 = arith.constant 0 : index
    %0 = vector.load %arg5[%c0, %c0_0] : memref<32x1152xf32, #tpu.memory_space<vmem>>, vector<32x1152xf32>
    %c0_1 = arith.constant 0 : index
    %c0_2 = arith.constant 0 : index
    %1 = vector.load %arg6[%c0_1, %c0_2] : memref<8x128xf32, #tpu.memory_space<vmem>>, vector<8x128xf32>
    %c0_3 = arith.constant 0 : index
    %c0_4 = arith.constant 0 : index
    %c0_5 = arith.constant 0 : index
    %2 = vector.load %arg1[%c0_3, %c0_4, %c0_5] : memref<8x8x6xf32, #tpu.memory_space<vmem>>, vector<8x8x6xf32>
    %3 = vector.shape_cast %2 : vector<8x8x6xf32> to vector<64x6xf32>
    %c0_6 = arith.constant 0 : index
    %c0_7 = arith.constant 0 : index
    %c0_8 = arith.constant 0 : index
    %4 = vector.load %arg2[%c0_6, %c0_7, %c0_8] : memref<8x8x4xf32, #tpu.memory_space<vmem>>, vector<8x8x4xf32>
    %5 = vector.shape_cast %4 : vector<8x8x4xf32> to vector<64x4xf32>
    %6 = vector.extract_strided_slice %0 {offsets = [0, 0], sizes = [6, 96], strides = [1, 1]} : vector<32x1152xf32> to vector<6x96xf32>
    %cst = arith.constant dense<0.000000e+00> : vector<64x96xf32>
    %7 = tpu.matmul %3, %6, %cst {dimension_numbers = #tpu.dot_dimension_numbers<[1], [0], [0], [1], [0, 0, 1, 1], [], []>} : vector<64x6xf32>, vector<6x96xf32>, vector<64x96xf32> -> vector<64x96xf32>
    %8 = vector.extract_strided_slice %0 {offsets = [0, 128], sizes = [4, 32], strides = [1, 1]} : vector<32x1152xf32> to vector<4x32xf32>
    %cst_9 = arith.constant dense<0.000000e+00> : vector<64x32xf32>
    %9 = tpu.matmul %5, %8, %cst_9 {dimension_numbers = #tpu.dot_dimension_numbers<[1], [0], [0], [1], [0, 0, 1, 1], [], []>} : vector<64x4xf32>, vector<4x32xf32>, vector<64x32xf32> -> vector<64x32xf32>
    %c0_10 = arith.constant 0 : index
    %c0_11 = arith.constant 0 : index
    %10 = vector.load %arg3[%c0_10, %c0_11] : memref<56x256xf32, #tpu.memory_space<vmem>>, vector<56x256xf32>
    %11 = vector.extract_strided_slice %10 {offsets = [0, 0], sizes = [56, 16], strides = [1, 1]} : vector<56x256xf32> to vector<56x16xf32>
    %12 = vector.extract_strided_slice %10 {offsets = [0, 128], sizes = [56, 16], strides = [1, 1]} : vector<56x256xf32> to vector<56x16xf32>
    %13 = vector.extract_strided_slice %7 {offsets = [0, 0], sizes = [8, 32], strides = [1, 1]} : vector<64x96xf32> to vector<8x32xf32>
    %14 = vector.extract_strided_slice %7 {offsets = [8, 0], sizes = [8, 32], strides = [1, 1]} : vector<64x96xf32> to vector<8x32xf32>
    %15 = vector.extract_strided_slice %7 {offsets = [16, 0], sizes = [8, 32], strides = [1, 1]} : vector<64x96xf32> to vector<8x32xf32>
    %16 = vector.extract_strided_slice %7 {offsets = [24, 0], sizes = [8, 32], strides = [1, 1]} : vector<64x96xf32> to vector<8x32xf32>
    %17 = vector.extract_strided_slice %7 {offsets = [32, 0], sizes = [8, 32], strides = [1, 1]} : vector<64x96xf32> to vector<8x32xf32>
    %18 = vector.extract_strided_slice %7 {offsets = [40, 0], sizes = [8, 32], strides = [1, 1]} : vector<64x96xf32> to vector<8x32xf32>
    %19 = vector.extract_strided_slice %7 {offsets = [48, 0], sizes = [8, 32], strides = [1, 1]} : vector<64x96xf32> to vector<8x32xf32>
    %20 = vector.extract_strided_slice %7 {offsets = [56, 0], sizes = [8, 32], strides = [1, 1]} : vector<64x96xf32> to vector<8x32xf32>
    %21 = tpu.concatenate %13, %14, %15, %16, %17, %18, %19, %20 in 1 : vector<8x32xf32>, vector<8x32xf32>, vector<8x32xf32>, vector<8x32xf32>, vector<8x32xf32>, vector<8x32xf32>, vector<8x32xf32>, vector<8x32xf32> -> vector<8x256xf32>
    %22 = vector.extract_strided_slice %7 {offsets = [0, 32], sizes = [8, 32], strides = [1, 1]} : vector<64x96xf32> to vector<8x32xf32>
    %23 = vector.extract_strided_slice %7 {offsets = [8, 32], sizes = [8, 32], strides = [1, 1]} : vector<64x96xf32> to vector<8x32xf32>
    %24 = vector.extract_strided_slice %7 {offsets = [16, 32], sizes = [8, 32], strides = [1, 1]} : vector<64x96xf32> to vector<8x32xf32>
    %25 = vector.extract_strided_slice %7 {offsets = [24, 32], sizes = [8, 32], strides = [1, 1]} : vector<64x96xf32> to vector<8x32xf32>
    %26 = vector.extract_strided_slice %7 {offsets = [32, 32], sizes = [8, 32], strides = [1, 1]} : vector<64x96xf32> to vector<8x32xf32>
    %27 = vector.extract_strided_slice %7 {offsets = [40, 32], sizes = [8, 32], strides = [1, 1]} : vector<64x96xf32> to vector<8x32xf32>
    %28 = vector.extract_strided_slice %7 {offsets = [48, 32], sizes = [8, 32], strides = [1, 1]} : vector<64x96xf32> to vector<8x32xf32>
    %29 = vector.extract_strided_slice %7 {offsets = [56, 32], sizes = [8, 32], strides = [1, 1]} : vector<64x96xf32> to vector<8x32xf32>
    %30 = tpu.concatenate %22, %23, %24, %25, %26, %27, %28, %29 in 1 : vector<8x32xf32>, vector<8x32xf32>, vector<8x32xf32>, vector<8x32xf32>, vector<8x32xf32>, vector<8x32xf32>, vector<8x32xf32>, vector<8x32xf32> -> vector<8x256xf32>
    %31 = tpu.concatenate %21, %30 in 0 : vector<8x256xf32>, vector<8x256xf32> -> vector<16x256xf32>
    %32 = vector.extract_strided_slice %7 {offsets = [0, 64], sizes = [8, 32], strides = [1, 1]} : vector<64x96xf32> to vector<8x32xf32>
    %33 = vector.extract_strided_slice %7 {offsets = [8, 64], sizes = [8, 32], strides = [1, 1]} : vector<64x96xf32> to vector<8x32xf32>
    %34 = vector.extract_strided_slice %7 {offsets = [16, 64], sizes = [8, 32], strides = [1, 1]} : vector<64x96xf32> to vector<8x32xf32>
    %35 = vector.extract_strided_slice %7 {offsets = [24, 64], sizes = [8, 32], strides = [1, 1]} : vector<64x96xf32> to vector<8x32xf32>
    %36 = vector.extract_strided_slice %7 {offsets = [32, 64], sizes = [8, 32], strides = [1, 1]} : vector<64x96xf32> to vector<8x32xf32>
    %37 = vector.extract_strided_slice %7 {offsets = [40, 64], sizes = [8, 32], strides = [1, 1]} : vector<64x96xf32> to vector<8x32xf32>
    %38 = vector.extract_strided_slice %7 {offsets = [48, 64], sizes = [8, 32], strides = [1, 1]} : vector<64x96xf32> to vector<8x32xf32>
    %39 = vector.extract_strided_slice %7 {offsets = [56, 64], sizes = [8, 32], strides = [1, 1]} : vector<64x96xf32> to vector<8x32xf32>
    %40 = tpu.concatenate %32, %33, %34, %35, %36, %37, %38, %39 in 1 : vector<8x32xf32>, vector<8x32xf32>, vector<8x32xf32>, vector<8x32xf32>, vector<8x32xf32>, vector<8x32xf32>, vector<8x32xf32>, vector<8x32xf32> -> vector<8x256xf32>
    %41 = vector.extract_strided_slice %9 {offsets = [0, 0], sizes = [8, 32], strides = [1, 1]} : vector<64x32xf32> to vector<8x32xf32>
    %42 = vector.extract_strided_slice %9 {offsets = [8, 0], sizes = [8, 32], strides = [1, 1]} : vector<64x32xf32> to vector<8x32xf32>
    %43 = vector.extract_strided_slice %9 {offsets = [16, 0], sizes = [8, 32], strides = [1, 1]} : vector<64x32xf32> to vector<8x32xf32>
    %44 = vector.extract_strided_slice %9 {offsets = [24, 0], sizes = [8, 32], strides = [1, 1]} : vector<64x32xf32> to vector<8x32xf32>
    %45 = vector.extract_strided_slice %9 {offsets = [32, 0], sizes = [8, 32], strides = [1, 1]} : vector<64x32xf32> to vector<8x32xf32>
    %46 = vector.extract_strided_slice %9 {offsets = [40, 0], sizes = [8, 32], strides = [1, 1]} : vector<64x32xf32> to vector<8x32xf32>
    %47 = vector.extract_strided_slice %9 {offsets = [48, 0], sizes = [8, 32], strides = [1, 1]} : vector<64x32xf32> to vector<8x32xf32>
    %48 = vector.extract_strided_slice %9 {offsets = [56, 0], sizes = [8, 32], strides = [1, 1]} : vector<64x32xf32> to vector<8x32xf32>
    %49 = tpu.concatenate %41, %42, %43, %44, %45, %46, %47, %48 in 1 : vector<8x32xf32>, vector<8x32xf32>, vector<8x32xf32>, vector<8x32xf32>, vector<8x32xf32>, vector<8x32xf32>, vector<8x32xf32>, vector<8x32xf32> -> vector<8x256xf32>
    %50 = tpu.concatenate %40, %49 in 0 : vector<8x256xf32>, vector<8x256xf32> -> vector<16x256xf32>
    %cst_12 = arith.constant dense<0.000000e+00> : vector<56x256xf32>
    %51 = tpu.matmul %11, %31, %cst_12 {dimension_numbers = #tpu.dot_dimension_numbers<[1], [0], [0], [1], [0, 0, 1, 1], [], []>} : vector<56x16xf32>, vector<16x256xf32>, vector<56x256xf32> -> vector<56x256xf32>
    %cst_13 = arith.constant dense<0.000000e+00> : vector<56x256xf32>
    %52 = tpu.matmul %12, %50, %cst_13 {dimension_numbers = #tpu.dot_dimension_numbers<[1], [0], [0], [1], [0, 0, 1, 1], [], []>} : vector<56x16xf32>, vector<16x256xf32>, vector<56x256xf32> -> vector<56x256xf32>
    %53 = vector.extract_strided_slice %51 {offsets = [0, 0], sizes = [56, 32], strides = [1, 1]} : vector<56x256xf32> to vector<56x32xf32>
    %54 = vector.extract_strided_slice %51 {offsets = [0, 32], sizes = [56, 32], strides = [1, 1]} : vector<56x256xf32> to vector<56x32xf32>
    %55 = vector.extract_strided_slice %51 {offsets = [0, 64], sizes = [56, 32], strides = [1, 1]} : vector<56x256xf32> to vector<56x32xf32>
    %56 = vector.extract_strided_slice %51 {offsets = [0, 96], sizes = [56, 32], strides = [1, 1]} : vector<56x256xf32> to vector<56x32xf32>
    %57 = vector.extract_strided_slice %51 {offsets = [0, 128], sizes = [56, 32], strides = [1, 1]} : vector<56x256xf32> to vector<56x32xf32>
    %58 = vector.extract_strided_slice %51 {offsets = [0, 160], sizes = [56, 32], strides = [1, 1]} : vector<56x256xf32> to vector<56x32xf32>
    %59 = vector.extract_strided_slice %51 {offsets = [0, 192], sizes = [56, 32], strides = [1, 1]} : vector<56x256xf32> to vector<56x32xf32>
    %60 = vector.extract_strided_slice %51 {offsets = [0, 224], sizes = [56, 32], strides = [1, 1]} : vector<56x256xf32> to vector<56x32xf32>
    %61 = tpu.concatenate %53, %54, %55, %56, %57, %58, %59, %60 in 0 : vector<56x32xf32>, vector<56x32xf32>, vector<56x32xf32>, vector<56x32xf32>, vector<56x32xf32>, vector<56x32xf32>, vector<56x32xf32>, vector<56x32xf32> -> vector<448x32xf32>
    %62 = vector.extract_strided_slice %1 {offsets = [0, 0], sizes = [1, 32], strides = [1, 1]} : vector<8x128xf32> to vector<1x32xf32>
    %63 = vector.broadcast %62 : vector<1x32xf32> to vector<448x32xf32>
    %64 = arith.addf %61, %63 : vector<448x32xf32>
    %cst_14 = arith.constant 0.000000e+00 : f32
    %65 = vector.broadcast %cst_14 : f32 to vector<448x32xf32>
    %66 = arith.maximumf %64, %65 : vector<448x32xf32>
    %67 = vector.extract_strided_slice %52 {offsets = [0, 0], sizes = [56, 32], strides = [1, 1]} : vector<56x256xf32> to vector<56x32xf32>
    %68 = vector.extract_strided_slice %52 {offsets = [0, 32], sizes = [56, 32], strides = [1, 1]} : vector<56x256xf32> to vector<56x32xf32>
    %69 = vector.extract_strided_slice %52 {offsets = [0, 64], sizes = [56, 32], strides = [1, 1]} : vector<56x256xf32> to vector<56x32xf32>
    %70 = vector.extract_strided_slice %52 {offsets = [0, 96], sizes = [56, 32], strides = [1, 1]} : vector<56x256xf32> to vector<56x32xf32>
    %71 = vector.extract_strided_slice %52 {offsets = [0, 128], sizes = [56, 32], strides = [1, 1]} : vector<56x256xf32> to vector<56x32xf32>
    %72 = vector.extract_strided_slice %52 {offsets = [0, 160], sizes = [56, 32], strides = [1, 1]} : vector<56x256xf32> to vector<56x32xf32>
    %73 = vector.extract_strided_slice %52 {offsets = [0, 192], sizes = [56, 32], strides = [1, 1]} : vector<56x256xf32> to vector<56x32xf32>
    %74 = vector.extract_strided_slice %52 {offsets = [0, 224], sizes = [56, 32], strides = [1, 1]} : vector<56x256xf32> to vector<56x32xf32>
    %75 = tpu.concatenate %67, %68, %69, %70, %71, %72, %73, %74 in 0 : vector<56x32xf32>, vector<56x32xf32>, vector<56x32xf32>, vector<56x32xf32>, vector<56x32xf32>, vector<56x32xf32>, vector<56x32xf32>, vector<56x32xf32> -> vector<448x32xf32>
    %76 = vector.extract_strided_slice %1 {offsets = [1, 0], sizes = [1, 32], strides = [1, 1]} : vector<8x128xf32> to vector<1x32xf32>
    %77 = vector.broadcast %76 : vector<1x32xf32> to vector<448x32xf32>
    %78 = arith.addf %75, %77 : vector<448x32xf32>
    %cst_15 = arith.constant 0.000000e+00 : f32
    %79 = vector.broadcast %cst_15 : f32 to vector<448x32xf32>
    %80 = arith.maximumf %78, %79 : vector<448x32xf32>
    %81 = tpu.concatenate %66, %80 in 0 : vector<448x32xf32>, vector<448x32xf32> -> vector<896x32xf32>
    %82 = vector.extract_strided_slice %0 {offsets = [0, 256], sizes = [32, 16], strides = [1, 1]} : vector<32x1152xf32> to vector<32x16xf32>
    %cst_16 = arith.constant dense<0.000000e+00> : vector<896x16xf32>
    %83 = tpu.matmul %81, %82, %cst_16 {dimension_numbers = #tpu.dot_dimension_numbers<[1], [0], [0], [1], [0, 0, 1, 1], [], []>} : vector<896x32xf32>, vector<32x16xf32>, vector<896x16xf32> -> vector<896x16xf32>
    %84 = vector.extract_strided_slice %1 {offsets = [2, 0], sizes = [1, 16], strides = [1, 1]} : vector<8x128xf32> to vector<1x16xf32>
    %85 = vector.broadcast %84 : vector<1x16xf32> to vector<896x16xf32>
    %86 = arith.addf %83, %85 : vector<896x16xf32>
    %cst_17 = arith.constant 0.000000e+00 : f32
    %87 = vector.broadcast %cst_17 : f32 to vector<896x16xf32>
    %88 = arith.maximumf %86, %87 : vector<896x16xf32>
    %89 = vector.extract_strided_slice %0 {offsets = [0, 384], sizes = [16, 5], strides = [1, 1]} : vector<32x1152xf32> to vector<16x5xf32>
    %cst_18 = arith.constant dense<0.000000e+00> : vector<896x5xf32>
    %90 = tpu.matmul %88, %89, %cst_18 {dimension_numbers = #tpu.dot_dimension_numbers<[1], [0], [0], [1], [0, 0, 1, 1], [], []>} : vector<896x16xf32>, vector<16x5xf32>, vector<896x5xf32> -> vector<896x5xf32>
    %91 = vector.extract_strided_slice %1 {offsets = [3, 0], sizes = [1, 5], strides = [1, 1]} : vector<8x128xf32> to vector<1x5xf32>
    %92 = vector.broadcast %91 : vector<1x5xf32> to vector<896x5xf32>
    %93 = arith.addf %90, %92 : vector<896x5xf32>
    %cst_19 = arith.constant 0.000000e+00 : f32
    %94 = vector.broadcast %cst_19 : f32 to vector<896x5xf32>
    %95 = arith.maximumf %93, %94 : vector<896x5xf32>
    %96 = vector.extract_strided_slice %95 {offsets = [0, 0], sizes = [56, 5], strides = [1, 1]} : vector<896x5xf32> to vector<56x5xf32>
    %97 = vector.extract_strided_slice %95 {offsets = [448, 0], sizes = [56, 5], strides = [1, 1]} : vector<896x5xf32> to vector<56x5xf32>
    %98 = vector.extract_strided_slice %95 {offsets = [56, 0], sizes = [56, 5], strides = [1, 1]} : vector<896x5xf32> to vector<56x5xf32>
    %99 = vector.extract_strided_slice %95 {offsets = [504, 0], sizes = [56, 5], strides = [1, 1]} : vector<896x5xf32> to vector<56x5xf32>
    %100 = vector.extract_strided_slice %95 {offsets = [112, 0], sizes = [56, 5], strides = [1, 1]} : vector<896x5xf32> to vector<56x5xf32>
    %101 = vector.extract_strided_slice %95 {offsets = [560, 0], sizes = [56, 5], strides = [1, 1]} : vector<896x5xf32> to vector<56x5xf32>
    %102 = vector.extract_strided_slice %95 {offsets = [168, 0], sizes = [56, 5], strides = [1, 1]} : vector<896x5xf32> to vector<56x5xf32>
    %103 = vector.extract_strided_slice %95 {offsets = [616, 0], sizes = [56, 5], strides = [1, 1]} : vector<896x5xf32> to vector<56x5xf32>
    %104 = vector.extract_strided_slice %95 {offsets = [224, 0], sizes = [56, 5], strides = [1, 1]} : vector<896x5xf32> to vector<56x5xf32>
    %105 = vector.extract_strided_slice %95 {offsets = [672, 0], sizes = [56, 5], strides = [1, 1]} : vector<896x5xf32> to vector<56x5xf32>
    %106 = vector.extract_strided_slice %95 {offsets = [280, 0], sizes = [56, 5], strides = [1, 1]} : vector<896x5xf32> to vector<56x5xf32>
    %107 = vector.extract_strided_slice %95 {offsets = [728, 0], sizes = [56, 5], strides = [1, 1]} : vector<896x5xf32> to vector<56x5xf32>
    %108 = vector.extract_strided_slice %95 {offsets = [336, 0], sizes = [56, 5], strides = [1, 1]} : vector<896x5xf32> to vector<56x5xf32>
    %109 = vector.extract_strided_slice %95 {offsets = [784, 0], sizes = [56, 5], strides = [1, 1]} : vector<896x5xf32> to vector<56x5xf32>
    %110 = vector.extract_strided_slice %95 {offsets = [392, 0], sizes = [56, 5], strides = [1, 1]} : vector<896x5xf32> to vector<56x5xf32>
    %111 = vector.extract_strided_slice %95 {offsets = [840, 0], sizes = [56, 5], strides = [1, 1]} : vector<896x5xf32> to vector<56x5xf32>
    %112 = tpu.concatenate %96, %97, %98, %99, %100, %101, %102, %103, %104, %105, %106, %107, %108, %109, %110, %111 in 1 : vector<56x5xf32>, vector<56x5xf32>, vector<56x5xf32>, vector<56x5xf32>, vector<56x5xf32>, vector<56x5xf32>, vector<56x5xf32>, vector<56x5xf32>, vector<56x5xf32>, vector<56x5xf32>, vector<56x5xf32>, vector<56x5xf32>, vector<56x5xf32>, vector<56x5xf32>, vector<56x5xf32>, vector<56x5xf32> -> vector<56x80xf32>
    %c0_20 = arith.constant 0 : index
    %c0_21 = arith.constant 0 : index
    %113 = vector.load %arg4[%c0_20, %c0_21] : memref<8x56xf32, #tpu.memory_space<vmem>>, vector<8x56xf32>
    %cst_22 = arith.constant dense<0.000000e+00> : vector<8x80xf32>
    %114 = tpu.matmul %113, %112, %cst_22 {dimension_numbers = #tpu.dot_dimension_numbers<[1], [0], [0], [1], [0, 0, 1, 1], [], []>} : vector<8x56xf32>, vector<56x80xf32>, vector<8x80xf32> -> vector<8x80xf32>
    %115 = vector.extract_strided_slice %114 {offsets = [0, 0], sizes = [8, 10], strides = [1, 1]} : vector<8x80xf32> to vector<8x10xf32>
    %116 = vector.extract_strided_slice %114 {offsets = [0, 10], sizes = [8, 10], strides = [1, 1]} : vector<8x80xf32> to vector<8x10xf32>
    %117 = vector.extract_strided_slice %114 {offsets = [0, 20], sizes = [8, 10], strides = [1, 1]} : vector<8x80xf32> to vector<8x10xf32>
    %118 = vector.extract_strided_slice %114 {offsets = [0, 30], sizes = [8, 10], strides = [1, 1]} : vector<8x80xf32> to vector<8x10xf32>
    %119 = vector.extract_strided_slice %114 {offsets = [0, 40], sizes = [8, 10], strides = [1, 1]} : vector<8x80xf32> to vector<8x10xf32>
    %120 = vector.extract_strided_slice %114 {offsets = [0, 50], sizes = [8, 10], strides = [1, 1]} : vector<8x80xf32> to vector<8x10xf32>
    %121 = vector.extract_strided_slice %114 {offsets = [0, 60], sizes = [8, 10], strides = [1, 1]} : vector<8x80xf32> to vector<8x10xf32>
    %122 = vector.extract_strided_slice %114 {offsets = [0, 70], sizes = [8, 10], strides = [1, 1]} : vector<8x80xf32> to vector<8x10xf32>
    %123 = tpu.concatenate %115, %116, %117, %118, %119, %120, %121, %122 in 0 : vector<8x10xf32>, vector<8x10xf32>, vector<8x10xf32>, vector<8x10xf32>, vector<8x10xf32>, vector<8x10xf32>, vector<8x10xf32>, vector<8x10xf32> -> vector<64x10xf32>
    %124 = vector.extract_strided_slice %0 {offsets = [0, 512], sizes = [6, 32], strides = [1, 1]} : vector<32x1152xf32> to vector<6x32xf32>
    %cst_23 = arith.constant dense<0.000000e+00> : vector<64x32xf32>
    %125 = tpu.matmul %3, %124, %cst_23 {dimension_numbers = #tpu.dot_dimension_numbers<[1], [0], [0], [1], [0, 0, 1, 1], [], []>} : vector<64x6xf32>, vector<6x32xf32>, vector<64x32xf32> -> vector<64x32xf32>
    %126 = vector.extract_strided_slice %0 {offsets = [0, 640], sizes = [10, 32], strides = [1, 1]} : vector<32x1152xf32> to vector<10x32xf32>
    %cst_24 = arith.constant dense<0.000000e+00> : vector<64x32xf32>
    %127 = tpu.matmul %123, %126, %cst_24 {dimension_numbers = #tpu.dot_dimension_numbers<[1], [0], [0], [1], [0, 0, 1, 1], [], []>} : vector<64x10xf32>, vector<10x32xf32>, vector<64x32xf32> -> vector<64x32xf32>
    %128 = arith.addf %125, %127 : vector<64x32xf32>
    %129 = vector.extract_strided_slice %1 {offsets = [4, 0], sizes = [1, 32], strides = [1, 1]} : vector<8x128xf32> to vector<1x32xf32>
    %130 = vector.broadcast %129 : vector<1x32xf32> to vector<64x32xf32>
    %131 = arith.addf %128, %130 : vector<64x32xf32>
    %cst_25 = arith.constant 0.000000e+00 : f32
    %132 = vector.broadcast %cst_25 : f32 to vector<64x32xf32>
    %133 = arith.maximumf %131, %132 : vector<64x32xf32>
    %134 = vector.extract_strided_slice %0 {offsets = [0, 768], sizes = [32, 16], strides = [1, 1]} : vector<32x1152xf32> to vector<32x16xf32>
    %cst_26 = arith.constant dense<0.000000e+00> : vector<64x16xf32>
    %135 = tpu.matmul %133, %134, %cst_26 {dimension_numbers = #tpu.dot_dimension_numbers<[1], [0], [0], [1], [0, 0, 1, 1], [], []>} : vector<64x32xf32>, vector<32x16xf32>, vector<64x16xf32> -> vector<64x16xf32>
    %136 = vector.extract_strided_slice %1 {offsets = [5, 0], sizes = [1, 16], strides = [1, 1]} : vector<8x128xf32> to vector<1x16xf32>
    %137 = vector.broadcast %136 : vector<1x16xf32> to vector<64x16xf32>
    %138 = arith.addf %135, %137 : vector<64x16xf32>
    %cst_27 = arith.constant 0.000000e+00 : f32
    %139 = vector.broadcast %cst_27 : f32 to vector<64x16xf32>
    %140 = arith.maximumf %138, %139 : vector<64x16xf32>
    %141 = vector.extract_strided_slice %0 {offsets = [0, 896], sizes = [16, 6], strides = [1, 1]} : vector<32x1152xf32> to vector<16x6xf32>
    %cst_28 = arith.constant dense<0.000000e+00> : vector<64x6xf32>
    %142 = tpu.matmul %140, %141, %cst_28 {dimension_numbers = #tpu.dot_dimension_numbers<[1], [0], [0], [1], [0, 0, 1, 1], [], []>} : vector<64x16xf32>, vector<16x6xf32>, vector<64x6xf32> -> vector<64x6xf32>
    %143 = vector.extract_strided_slice %1 {offsets = [6, 0], sizes = [1, 6], strides = [1, 1]} : vector<8x128xf32> to vector<1x6xf32>
    %144 = vector.broadcast %143 : vector<1x6xf32> to vector<64x6xf32>
    %145 = arith.addf %142, %144 : vector<64x6xf32>
    %cst_29 = arith.constant 0.000000e+00 : f32
    %146 = vector.broadcast %cst_29 : f32 to vector<64x6xf32>
    %147 = arith.maximumf %145, %146 : vector<64x6xf32>
    %148 = vector.shape_cast %147 : vector<64x6xf32> to vector<8x8x6xf32>
    %cst_30 = arith.constant dense<0.000000e+00> : vector<8x6xf32>
    %149 = vector.multi_reduction <add>, %148, %cst_30 [1] : vector<8x8x6xf32> to vector<8x6xf32>
    %150 = vector.extract_strided_slice %0 {offsets = [0, 1024], sizes = [6, 128], strides = [1, 1]} : vector<32x1152xf32> to vector<6x128xf32>
    %cst_31 = arith.constant dense<0.000000e+00> : vector<8x128xf32>
    %151 = tpu.matmul %149, %150, %cst_31 {dimension_numbers = #tpu.dot_dimension_numbers<[1], [0], [0], [1], [0, 0, 1, 1], [], []>} : vector<8x6xf32>, vector<6x128xf32>, vector<8x128xf32> -> vector<8x128xf32>
    %152 = vector.extract_strided_slice %1 {offsets = [7, 0], sizes = [1, 128], strides = [1, 1]} : vector<8x128xf32> to vector<1x128xf32>
    %153 = vector.broadcast %152 : vector<1x128xf32> to vector<8x128xf32>
    %154 = arith.addf %151, %153 : vector<8x128xf32>
    %cst_32 = arith.constant 0.000000e+00 : f32
    %155 = vector.broadcast %cst_32 : f32 to vector<8x128xf32>
    %156 = arith.maximumf %154, %155 : vector<8x128xf32>
    %c0_33 = arith.constant 0 : index
    %c0_34 = arith.constant 0 : index
    %157 = vector.load %arg7[%c0_33, %c0_34] : memref<8x128xf32, #tpu.memory_space<vmem>>, vector<8x128xf32>
    tpu.vector_store %arg7[%c0_33, %c0_34], %156 {strides = array<i32>} : memref<8x128xf32, #tpu.memory_space<vmem>>, vector<8x128xf32>,
    return
  }
  func.func @transform_0(%arg0: i32) -> (i32, i32, i32) {
    %c0_i32 = arith.constant 0 : i32
    %c0_i32_0 = arith.constant 0 : i32
    %c0_i32_1 = arith.constant 0 : i32
    return %arg0, %c0_i32, %c0_i32_0 : i32, i32, i32
  }
  func.func @transform_1(%arg0: i32) -> (i32, i32, i32) {
    %c0_i32 = arith.constant 0 : i32
    %c0_i32_0 = arith.constant 0 : i32
    %c0_i32_1 = arith.constant 0 : i32
    return %arg0, %c0_i32, %c0_i32_0 : i32, i32, i32
  }
  func.func @transform_2(%arg0: i32) -> (i32, i32) {
    %c0_i32 = arith.constant 0 : i32
    %c0_i32_0 = arith.constant 0 : i32
    %c0_i32_1 = arith.constant 0 : i32
    return %c0_i32, %c0_i32_0 : i32, i32
  }
  func.func @transform_3(%arg0: i32) -> (i32, i32) {
    %c0_i32 = arith.constant 0 : i32
    %c0_i32_0 = arith.constant 0 : i32
    %c0_i32_1 = arith.constant 0 : i32
    return %c0_i32, %c0_i32_0 : i32, i32
  }
  func.func @transform_4(%arg0: i32) -> (i32, i32) {
    %c0_i32 = arith.constant 0 : i32
    %c0_i32_0 = arith.constant 0 : i32
    %c0_i32_1 = arith.constant 0 : i32
    return %c0_i32, %c0_i32_0 : i32, i32
  }
  func.func @transform_5(%arg0: i32) -> (i32, i32) {
    %c0_i32 = arith.constant 0 : i32
    %c0_i32_0 = arith.constant 0 : i32
    %c0_i32_1 = arith.constant 0 : i32
    return %c0_i32, %c0_i32_0 : i32, i32
  }
  func.func @transform_6(%arg0: i32) -> (i32, i32) {
    %c0_i32 = arith.constant 0 : i32
    %c0_i32_0 = arith.constant 0 : i32
    return %arg0, %c0_i32 : i32, i32
  }
}

</mosaic_0001>

<llo_original>
// kernel: tpu_custom_call.1
$region0: #{tpu_custom_call.1}
  #allocation0 [shape = 'u32[]', space=smem, size = 0x4, offset = 0x4, fixed_abs, tag = 'smem constant byte address 0x4 - core index']
  #allocation1 [shape = 'u32[144,128]{1,0:T(1,128)}', space=vmem, size = 0x12000, scoped, tag = 'internal scratch']
  %s0 = inlined_call_operand.vmem [shape: f32[16,8,6], index: 0, kind: input, shape index: {}]
  %s1 = inlined_call_operand.vmem [shape: f32[16,8,4], index: 1, kind: input, shape index: {}]
  %s2 = inlined_call_operand.hbm [shape: f32[56,256], index: 2, kind: input, shape index: {}]
  %s3 = inlined_call_operand.vmem [shape: f32[8,56], index: 3, kind: input, shape index: {}]
  %s4 = inlined_call_operand.vmem [shape: f32[32,1152], index: 4, kind: input, shape index: {}]
  %s5 = inlined_call_operand.vmem [shape: f32[8,128], index: 5, kind: input, shape index: {}]
  %s6 = inlined_call_operand.hbm [shape: f32[16,128], index: 6, kind: output, shape index: {}]
  %s7 = sld [smem:[#allocation0]]
  $region61: #{tpu_custom_call.1} parent=0
    _
  %s9 = ssub.s32 1, %s7
  %s10 = scalar_select 0, %s9, %s7
  $region1: #{tpu_custom_call.1} parent=0
    #allocation2 [shape = 'u8[57344]{0}', space=vmem, size = 0xe000, scoped, tag = 'input window, operand 2, single buffered']
    #allocation3 [shape = 's32[2]{0}', space=sflag, size = 0x8, scoped, tag = 'scoped memory for tpu_custom_call.1']
    #allocation4 [shape = 's32[2]{0}', space=sflag, size = 0x8, scoped, tag = 'scoped memory for tpu_custom_call.1']
    #allocation5 [shape = 'u8[8192]{0}', space=vmem, size = 0x2000, scoped, tag = 'output window, operand 0']
    %11 = vsyncpa [#allocation3], 0
    %12 = vsyncpa [#allocation4], 0
    %s13 = scalar_lea.sflag [#allocation4], 1
    %14 = vsyncpa %s13, 0
    loop: start=0, step=1, limit=4
    $region2: #{tpu_custom_call.1} parent=1 // loop_pre_header
      _
    $region3: #{tpu_custom_call.1} parent=1 // loop_header
      %s16 = sphi 0, %s20
      %p17 = scmp.ge.s32.totalorder %s16, 4
      %s26 = sphi 0, %s28
      %s29 = sphi 0, %s26
      %s30 = sphi 0, %s29
      %s46 = sphi 0, %s30
      %s52 = sphi 0, %s54
      %s55 = sphi 0, %s52
      %s56 = sphi 0, %s55
      %s72 = sphi 0, %s56
      %s76 = sphi 0, %s76
      %s78 = sphi 0, %s76
      %s79 = sphi 0, %s78
      %s93 = sphi 0, %s79
      %s97 = sphi 0, %s97
      %s99 = sphi 0, %s97
      %s100 = sphi 0, %s99
      %s114 = sphi 0, %s100
      %s118 = sphi 0, %s118
      %s120 = sphi 0, %s118
      %s121 = sphi 0, %s120
      %s135 = sphi 0, %s121
      %s139 = sphi 0, %s139
      %s141 = sphi 0, %s139
      %s142 = sphi 0, %s141
      %s156 = sphi 0, %s142
      %s162 = sphi 0, %s164
      %s165 = sphi 0, %s162
      %s166 = sphi 0, %s165
      %s182 = sphi 0, %s166
    $region4: #{tpu_custom_call.1} parent=1 // loop_header_branch
      %19 = sbr.rel (%p17) target = $region8
    $region5: #{tpu_custom_call.1} parent=1 // loop_body
      %s21 = ssub.s32 %s16, 1
      %s22 = ssub.s32 %s16, 2
      %s23 = sadd.s32 %s16, 1
      %s24 = ssub.s32 %s16, %s23
      %p25 = scmp.eq.s32.totalorder %s24, 0
      %s27 = sadd.s32 %s26, 1
      %s28 = scalar_select %p25, %s26, %s27
      %p31 = pneg %p25
      %p32 = scmp.eq.s32.totalorder %s16, 1
      %p33 = por %p31, %p32
      %p34 = scmp.ne.s32.totalorder %s26, %s29
      %p35 = scmp.eq.s32.totalorder %s16, 0
      %p36 = por %p34, %p35
      %p37 = scmp.ne.s32.totalorder %s26, %s29
      %p38 = scmp.eq.s32.totalorder %s21, 1
      %p39 = por %p37, %p38
      %p40 = scmp.ne.s32.totalorder %s29, %s30
      %p41 = scmp.eq.s32.totalorder %s21, 0
      %p42 = por %p40, %p41
      %p43 = scmp.ne.s32.totalorder %s29, %s30
      %p44 = scmp.eq.s32.totalorder %s22, 1
      %p45 = por %p43, %p44
      %p47 = scmp.ne.s32.totalorder %s30, %s46
      %p48 = scmp.eq.s32.totalorder %s22, 0
      %p49 = por %p47, %p48
      %s50 = ssub.s32 %s16, %s23
      %p51 = scmp.eq.s32.totalorder %s50, 0
      %s53 = sadd.s32 %s52, 1
      %s54 = scalar_select %p51, %s52, %s53
      %p57 = pneg %p51
      %p58 = scmp.eq.s32.totalorder %s16, 1
      %p59 = por %p57, %p58
      %p60 = scmp.ne.s32.totalorder %s52, %s55
      %p61 = scmp.eq.s32.totalorder %s16, 0
      %p62 = por %p60, %p61
      %p63 = scmp.ne.s32.totalorder %s52, %s55
      %p64 = scmp.eq.s32.totalorder %s21, 1
      %p65 = por %p63, %p64
      %p66 = scmp.ne.s32.totalorder %s55, %s56
      %p67 = scmp.eq.s32.totalorder %s21, 0
      %p68 = por %p66, %p67
      %p69 = scmp.ne.s32.totalorder %s55, %s56
      %p70 = scmp.eq.s32.totalorder %s22, 1
      %p71 = por %p69, %p70
      %p73 = scmp.ne.s32.totalorder %s56, %s72
      %p74 = scmp.eq.s32.totalorder %s22, 0
      %p75 = por %p73, %p74
      %s77 = sadd.s32 %s76, 1
      %p80 = scmp.eq.s32.totalorder %s16, 1
      %p81 = scmp.ne.s32.totalorder %s76, %s78
      %p82 = scmp.eq.s32.totalorder %s16, 0
      %p83 = por %p81, %p82
      %p84 = scmp.ne.s32.totalorder %s76, %s78
      %p85 = scmp.eq.s32.totalorder %s21, 1
      %p86 = por %p84, %p85
      %p87 = scmp.ne.s32.totalorder %s78, %s79
      %p88 = scmp.eq.s32.totalorder %s21, 0
      %p89 = por %p87, %p88
      %p90 = scmp.ne.s32.totalorder %s78, %s79
      %p91 = scmp.eq.s32.totalorder %s22, 1
      %p92 = por %p90, %p91
      %p94 = scmp.ne.s32.totalorder %s79, %s93
      %p95 = scmp.eq.s32.totalorder %s22, 0
      %p96 = por %p94, %p95
      %s98 = sadd.s32 %s97, 1
      %p101 = scmp.eq.s32.totalorder %s16, 1
      %p102 = scmp.ne.s32.totalorder %s97, %s99
      %p103 = scmp.eq.s32.totalorder %s16, 0
      %p104 = por %p102, %p103
      %p105 = scmp.ne.s32.totalorder %s97, %s99
      %p106 = scmp.eq.s32.totalorder %s21, 1
      %p107 = por %p105, %p106
      %p108 = scmp.ne.s32.totalorder %s99, %s100
      %p109 = scmp.eq.s32.totalorder %s21, 0
      %p110 = por %p108, %p109
      %p111 = scmp.ne.s32.totalorder %s99, %s100
      %p112 = scmp.eq.s32.totalorder %s22, 1
      %p113 = por %p111, %p112
      %p115 = scmp.ne.s32.totalorder %s100, %s114
      %p116 = scmp.eq.s32.totalorder %s22, 0
      %p117 = por %p115, %p116
      %s119 = sadd.s32 %s118, 1
      %p122 = scmp.eq.s32.totalorder %s16, 1
      %p123 = scmp.ne.s32.totalorder %s118, %s120
      %p124 = scmp.eq.s32.totalorder %s16, 0
      %p125 = por %p123, %p124
      %p126 = scmp.ne.s32.totalorder %s118, %s120
      %p127 = scmp.eq.s32.totalorder %s21, 1
      %p128 = por %p126, %p127
      %p129 = scmp.ne.s32.totalorder %s120, %s121
      %p130 = scmp.eq.s32.totalorder %s21, 0
      %p131 = por %p129, %p130
      %p132 = scmp.ne.s32.totalorder %s120, %s121
      %p133 = scmp.eq.s32.totalorder %s22, 1
      %p134 = por %p132, %p133
      %p136 = scmp.ne.s32.totalorder %s121, %s135
      %p137 = scmp.eq.s32.totalorder %s22, 0
      %p138 = por %p136, %p137
      %s140 = sadd.s32 %s139, 1
      %p143 = scmp.eq.s32.totalorder %s16, 1
      %p144 = scmp.ne.s32.totalorder %s139, %s141
      %p145 = scmp.eq.s32.totalorder %s16, 0
      %p146 = por %p144, %p145
      %p147 = scmp.ne.s32.totalorder %s139, %s141
      %p148 = scmp.eq.s32.totalorder %s21, 1
      %p149 = por %p147, %p148
      %p150 = scmp.ne.s32.totalorder %s141, %s142
      %p151 = scmp.eq.s32.totalorder %s21, 0
      %p152 = por %p150, %p151
      %p153 = scmp.ne.s32.totalorder %s141, %s142
      %p154 = scmp.eq.s32.totalorder %s22, 1
      %p155 = por %p153, %p154
      %p157 = scmp.ne.s32.totalorder %s142, %s156
      %p158 = scmp.eq.s32.totalorder %s22, 0
      %p159 = por %p157, %p158
      %s160 = ssub.s32 %s16, %s23
      %p161 = scmp.eq.s32.totalorder %s160, 0
      %s163 = sadd.s32 %s162, 1
      %s164 = scalar_select %p161, %s162, %s163
      %p167 = pneg %p161
      %p168 = scmp.eq.s32.totalorder %s16, 1
      %p169 = por %p167, %p168
      %p170 = scmp.ne.s32.totalorder %s162, %s165
      %p171 = scmp.eq.s32.totalorder %s16, 0
      %p172 = por %p170, %p171
      %p173 = scmp.ne.s32.totalorder %s162, %s165
      %p174 = scmp.eq.s32.totalorder %s21, 1
      %p175 = por %p173, %p174
      %p176 = scmp.ne.s32.totalorder %s165, %s166
      %p177 = scmp.eq.s32.totalorder %s21, 0
      %p178 = por %p176, %p177
      %p179 = scmp.ne.s32.totalorder %s165, %s166
      %p180 = scmp.eq.s32.totalorder %s22, 1
      %p181 = por %p179, %p180
      %p183 = scmp.ne.s32.totalorder %s166, %s182
      %p184 = scmp.eq.s32.totalorder %s22, 0
      %p185 = por %p183, %p184
      %p186 = scmp.le.s32.totalorder 1, %s16
      %p187 = scmp.lt.s32.totalorder %s16, 3
      %p188 = pnand %p186, %p187
      %p189 = pneg %p188
      // Predicated region
      $region9: #{tpu_custom_call.1} parent=5 // pred_check
        _
      $region10: #{tpu_custom_call.1} parent=5 // pred_check_branch
        %191 = sbr.rel (%p188) target = $region12
      $region11: #{tpu_custom_call.1} parent=5 // pred_region
        %s192 = ssub.s32 %s16, 1
        // Predicated region
        $region13: #{tpu_custom_call.1} parent=11 // pred_check
          %p193 = pneg %p89
        $region14: #{tpu_custom_call.1} parent=11 // pred_check_branch
          %195 = sbr.rel (%p193) target = $region16
        $region15: #{tpu_custom_call.1} parent=11 // pred_region
          %s197 = ssub.s32 1792, 1792
          %198 = vsyncadd [#allocation3], %s197
          %s199 = sshll.u32 [#allocation2], 4
          %s200 = int_to_ptr.vmem [resolvable:$true] %s199
          %205 = dma.hbm_to_vmem [thread:$0]  %s2, 1792, %s200, [#allocation3], 256, 256, 16
        $region16: #{tpu_custom_call.1} parent=11 // pred_fallthru
          _
        // Predicated region
        $region17: #{tpu_custom_call.1} parent=11 // pred_check
          %p206 = pneg %p110
        $region18: #{tpu_custom_call.1} parent=11 // pred_check_branch
          %208 = sbr.rel (%p206) target = $region20
        $region19: #{tpu_custom_call.1} parent=11 // pred_region
          _
        $region20: #{tpu_custom_call.1} parent=11 // pred_fallthru
          _
        // Predicated region
        $region21: #{tpu_custom_call.1} parent=11 // pred_check
          %p209 = pneg %p131
        $region22: #{tpu_custom_call.1} parent=11 // pred_check_branch
          %211 = sbr.rel (%p209) target = $region24
        $region23: #{tpu_custom_call.1} parent=11 // pred_region
          _
        $region24: #{tpu_custom_call.1} parent=11 // pred_fallthru
          _
        // Predicated region
        $region25: #{tpu_custom_call.1} parent=11 // pred_check
          %p212 = pneg %p152
        $region26: #{tpu_custom_call.1} parent=11 // pred_check_branch
          %214 = sbr.rel (%p212) target = $region28
        $region27: #{tpu_custom_call.1} parent=11 // pred_region
          _
        $region28: #{tpu_custom_call.1} parent=11 // pred_fallthru
          _
      $region12: #{tpu_custom_call.1} parent=5 // pred_fallthru
        _
      %p215 = scmp.lt.s32.totalorder %s16, 2
      // Predicated region
      $region29: #{tpu_custom_call.1} parent=5 // pred_check
        %p216 = pneg %p215
      $region30: #{tpu_custom_call.1} parent=5 // pred_check_branch
        %218 = sbr.rel (%p216) target = $region32
      $region31: #{tpu_custom_call.1} parent=5 // pred_region
        // Predicated region
        $region33: #{tpu_custom_call.1} parent=31 // pred_check
          %p219 = pneg %p36
        $region34: #{tpu_custom_call.1} parent=31 // pred_check_branch
          %221 = sbr.rel (%p219) target = $region36
        $region35: #{tpu_custom_call.1} parent=31 // pred_region
          %s222 = smul.u32 8, %s16
          %p223 = scmp.lt.s32.totalorder %s222, 15
          %s224 = scalar_select %p223, %s222, 15
          %s225 = smul.addr %s224, 8
          %s226 = scalar_lea.vmem %s0, %s225
          %s227 = smul.u32 8, %s16
        $region36: #{tpu_custom_call.1} parent=31 // pred_fallthru
          _
        // Predicated region
        $region37: #{tpu_custom_call.1} parent=31 // pred_check
          %p228 = pneg %p62
        $region38: #{tpu_custom_call.1} parent=31 // pred_check_branch
          %230 = sbr.rel (%p228) target = $region40
        $region39: #{tpu_custom_call.1} parent=31 // pred_region
          %s231 = smul.u32 8, %s16
          %p232 = scmp.lt.s32.totalorder %s231, 15
          %s233 = scalar_select %p232, %s231, 15
          %s234 = smul.addr %s233, 8
          %s235 = scalar_lea.vmem %s1, %s234
          %s236 = smul.u32 8, %s16
        $region40: #{tpu_custom_call.1} parent=31 // pred_fallthru
          _
      $region32: #{tpu_custom_call.1} parent=5 // pred_fallthru
        _
      %p237 = scmp.le.s32.totalorder 1, %s16
      %p238 = scmp.lt.s32.totalorder %s16, 3
      %p239 = pnand %p237, %p238
      %p240 = pneg %p239
      // Predicated region
      $region41: #{tpu_custom_call.1} parent=5 // pred_check
        _
      $region42: #{tpu_custom_call.1} parent=5 // pred_check_branch
        %242 = sbr.rel (%p239) target = $region44
      $region43: #{tpu_custom_call.1} parent=5 // pred_region
        %s243 = ssub.s32 %s16, 1
        // Predicated region
        $region45: #{tpu_custom_call.1} parent=43 // pred_check
          %p244 = pneg %p89
        $region46: #{tpu_custom_call.1} parent=43 // pred_check_branch
          %246 = sbr.rel (%p244) target = $region48
        $region47: #{tpu_custom_call.1} parent=43 // pred_region
          %247 = dma.done [#allocation3], 1792
        $region48: #{tpu_custom_call.1} parent=43 // pred_fallthru
          _
        %s248 = smul.u32 8, %s21
        %p249 = scmp.lt.s32.totalorder %s248, 15
        %s250 = scalar_select %p249, %s248, 15
        %s251 = smul.addr %s250, 8
        %s252 = scalar_lea.vmem %s0, %s251
        %p253 = pneg %p42
        %p254 = pneg %p39
        %s255 = smul.u32 8, %s21
        %p256 = scmp.lt.s32.totalorder %s255, 15
        %s257 = scalar_select %p256, %s255, 15
        %s258 = smul.addr %s257, 8
        %s259 = scalar_lea.vmem %s1, %s258
        %p260 = pneg %p68
        %p261 = pneg %p65
        %p262 = pneg %p89
        %p263 = pneg %p86
        %p264 = pneg %p110
        %p265 = pneg %p107
        %p266 = pneg %p131
        %p267 = pneg %p128
        %p268 = pneg %p152
        %p269 = pneg %p149
        %p270 = pneg %p178
        %p271 = pneg %p175
        %s272 = sand.u32 %s165, 1
        %s273 = scalar_lea.sflag [#allocation4], %s272
        %s274 = sand.u32 %s165, 1
        %s275 = smul.addr %s274, 8
        %s276 = scalar_lea.vmem [#allocation5], %s275
        %s277 = smul.u32 8, %s21
        %p278 = scmp.lt.s32.totalorder %s277, 15
        %s279 = scalar_select %p278, %s277, 15
        %s280 = smul.addr %s279, 8
        %s281 = scalar_lea.vmem %s0, %s280
        %s282 = smul.u32 8, %s21
        %s283 = smul.u32 8, %s21
        %p284 = scmp.lt.s32.totalorder %s283, 15
        %s285 = scalar_select %p284, %s283, 15
        %s286 = smul.addr %s285, 8
        %s287 = scalar_lea.vmem %s1, %s286
        %s288 = smul.u32 8, %s21
        %v289 = vld [vmem:[%s4] sm:$0xff]
        %v290 = vld [vmem:[%s4 + $0x8] sm:$0xff]
        %v291 = vld [vmem:[%s4 + $0x10] sm:$0xff]
        %v292 = vld [vmem:[%s4 + $0x18] sm:$0xff]
        %v293 = vld [vmem:[%s4 + $0x20] sm:$0xff]
        %v294 = vld [vmem:[%s4 + $0x28] sm:$0xff]
        %v295 = vld [vmem:[%s4 + $0x30] sm:$0xff]
        %v296 = vld [vmem:[%s4 + $0x38] sm:$0xff]
        %v297 = vld [vmem:[%s4 + $0x40] sm:$0xff]
        %v298 = vld [vmem:[%s4 + $0x58] sm:$0xff]
        %v299 = vld [vmem:[%s4 + $0x60] sm:$0xff]
        %v300 = vld [vmem:[%s4 + $0x70] sm:$0xff]
        %v301 = vld [vmem:[%s4 + $0x78] sm:$0xff]
        %v302 = vld [vmem:[%s4 + $0x80] sm:$0xff]
        %v303 = vld [vmem:[%s4 + $0xa0] sm:$0xff]
        %v304 = vld [vmem:[%s4 + $0xc0] sm:$0xff]
        %v305 = vld [vmem:[%s4 + $0xe8] sm:$0xff]
        %v306 = vld [vmem:[%s4 + $0x108] sm:$0xff]
        %v307 = vld [vmem:[%s5] sm:$0xff]
        %v308 = vld [vmem:[%s281] sm:$0xff]
        %v309 = vld [vmem:[%s281 + $0x8] sm:$0xff]
        %v310 = vld [vmem:[%s281 + $0x10] sm:$0xff]
        %v311 = vld [vmem:[%s281 + $0x18] sm:$0xff]
        %v312 = vld [vmem:[%s281 + $0x20] sm:$0xff]
        %v313 = vld [vmem:[%s281 + $0x28] sm:$0xff]
        %v314 = vld [vmem:[%s281 + $0x30] sm:$0xff]
        %v315 = vld [vmem:[%s281 + $0x38] sm:$0xff]
        %v316 = vld [vmem:[%s287] sm:$0xff]
        %v317 = vld [vmem:[%s287 + $0x8] sm:$0xff]
        %v318 = vld [vmem:[%s287 + $0x10] sm:$0xff]
        %v319 = vld [vmem:[%s287 + $0x18] sm:$0xff]
        %v320 = vld [vmem:[%s287 + $0x20] sm:$0xff]
        %v321 = vld [vmem:[%s287 + $0x28] sm:$0xff]
        %v322 = vld [vmem:[%s287 + $0x30] sm:$0xff]
        %v323 = vld [vmem:[%s287 + $0x38] sm:$0xff]
        %vm324 = vcmask 48128
        %v326 = vsel %vm324, %v308, 0
        %v329 = vsel %vm324, %v309, 0
        %v332 = vsel %vm324, %v310, 0
        %v335 = vsel %vm324, %v311, 0
        %v338 = vsel %vm324, %v312, 0
        %v341 = vsel %vm324, %v313, 0
        %v344 = vsel %vm324, %v314, 0
        %v347 = vsel %vm324, %v315, 0
        %vm349 = vcmask 1045504
        %v351 = vsel %vm349, %v289, 0
        %353 = vmatprep.subr.mxu0 0.0
        %354 = vmatpush1.msra.mxu0 0.0
        %355 = vmatprep.subr.mxu0 0.0
        %356 = vmatpush1.msra.mxu0 0.0
        %357 = vmatprep.subr.mxu0 0.0
        %358 = vmatpush1.msra.mxu0 0.0
        %359 = vmatprep.subr.mxu0 0.0
        %360 = vmatpush1.msra.mxu0 0.0
        %361 = vmatprep.subr.mxu0 0.0
        %362 = vmatpush1.msra.mxu0 0.0
        %363 = vmatprep.subr.mxu0 0.0
        %364 = vmatpush1.msra.mxu0 0.0
        %365 = vmatprep.subr.mxu0 0.0
        %366 = vmatpush1.msra.mxu0 0.0
        %367 = vmatprep.subr.mxu0 0.0
        %368 = vmatpush1.msra.mxu0 0.0
        %369 = vmatprep.subr.mxu0 0.0
        %370 = vmatpush1.msra.mxu0 0.0
        %371 = vmatprep.subr.mxu0 0.0
        %372 = vmatpush1.msra.mxu0 0.0
        %373 = vmatprep.subr.mxu0 0.0
        %374 = vmatpush1.msra.mxu0 0.0
        %375 = vmatprep.subr.mxu0 0.0
        %376 = vmatpush1.msra.mxu0 0.0
        %377 = vmatprep.subr.mxu0 0.0
        %378 = vmatpush1.msra.mxu0 0.0
        %379 = vmatprep.subr.mxu0 0.0
        %380 = vmatpush1.msra.mxu0 0.0
        %381 = vmatprep.subr.mxu0 0.0
        %382 = vmatpush1.msra.mxu0 0.0
        %383 = vmatprep.subr.mxu0 0.0
        %384 = vmatpush1.msra.mxu0 %v351
        %385 = vmatprep.subr.mxu0 0.0
        %386 = vmatpush2.msra.mxu0 0.0
        %387 = vmatprep.subr.mxu0 0.0
        %388 = vmatpush2.msra.mxu0 0.0
        %389 = vmatprep.subr.mxu0 0.0
        %390 = vmatpush2.msra.mxu0 0.0
        %391 = vmatprep.subr.mxu0 0.0
        %392 = vmatpush2.msra.mxu0 0.0
        %393 = vmatprep.subr.mxu0 0.0
        %394 = vmatpush2.msra.mxu0 0.0
        %395 = vmatprep.subr.mxu0 0.0
        %396 = vmatpush2.msra.mxu0 0.0
        %397 = vmatprep.subr.mxu0 0.0
        %398 = vmatpush2.msra.mxu0 0.0
        %399 = vmatprep.subr.mxu0 0.0
        %400 = vmatpush2.msra.mxu0 0.0
        %401 = vmatprep.subr.mxu0 0.0
        %402 = vmatpush2.msra.mxu0 0.0
        %403 = vmatprep.subr.mxu0 0.0
        %404 = vmatpush2.msra.mxu0 0.0
        %405 = vmatprep.subr.mxu0 0.0
        %406 = vmatpush2.msra.mxu0 0.0
        %407 = vmatprep.subr.mxu0 0.0
        %408 = vmatpush2.msra.mxu0 0.0
        %409 = vmatprep.subr.mxu0 0.0
        %410 = vmatpush2.msra.mxu0 0.0
        %411 = vmatprep.subr.mxu0 0.0
        %412 = vmatpush2.msra.mxu0 0.0
        %413 = vmatprep.subr.mxu0 0.0
        %414 = vmatpush2.msra.mxu0 0.0
        %415 = vmatprep.subr.mxu0 0.0
        %416 = vmatpush2.msra.mxu0 0.0
        %417 = vmatprep.mubr.f32.mxu0 0.0
        %418 = vmatmul.mubr.f32.gmra.mxu0 %v326
        %v419 = vpop.f32.mrf.mxu0
        %v420 = vadd.f32 0.0, %v419
        %v421 = vpop.f32.mrf.mxu0
        %422 = vmatprep.mubr.f32.mxu0 0.0
        %423 = vmatmul.mubr.f32.gmra.mxu0 %v329
        %v424 = vpop.f32.mrf.mxu0
        %v425 = vadd.f32 0.0, %v424
        %v426 = vpop.f32.mrf.mxu0
        %427 = vmatprep.mubr.f32.mxu0 0.0
        %428 = vmatmul.mubr.f32.gmra.mxu0 %v332
        %v429 = vpop.f32.mrf.mxu0
        %v430 = vadd.f32 0.0, %v429
        %v431 = vpop.f32.mrf.mxu0
        %432 = vmatprep.mubr.f32.mxu0 0.0
        %433 = vmatmul.mubr.f32.gmra.mxu0 %v335
        %v434 = vpop.f32.mrf.mxu0
        %v435 = vadd.f32 0.0, %v434
        %v436 = vpop.f32.mrf.mxu0
        %437 = vmatprep.mubr.f32.mxu0 0.0
        %438 = vmatmul.mubr.f32.gmra.mxu0 %v338
        %v439 = vpop.f32.mrf.mxu0
        %v440 = vadd.f32 0.0, %v439
        %v441 = vpop.f32.mrf.mxu0
        %442 = vmatprep.mubr.f32.mxu0 0.0
        %443 = vmatmul.mubr.f32.gmra.mxu0 %v341
        %v444 = vpop.f32.mrf.mxu0
        %v445 = vadd.f32 0.0, %v444
        %v446 = vpop.f32.mrf.mxu0
        %447 = vmatprep.mubr.f32.mxu0 0.0
        %448 = vmatmul.mubr.f32.gmra.mxu0 %v344
        %v449 = vpop.f32.mrf.mxu0
        %v450 = vadd.f32 0.0, %v449
        %v451 = vpop.f32.mrf.mxu0
        %452 = vmatprep.mubr.f32.mxu0 0.0
        %453 = vmatmul.mubr.f32.gmra.mxu0 %v347
        %v454 = vpop.f32.mrf.mxu0
        %v455 = vadd.f32 0.0, %v454
        %v456 = vpop.f32.mrf.mxu0
        %457 = vdwg.mxu0
        %vm458 = vcmask 31744
        %v460 = vsel %vm458, %v316, 0
        %v463 = vsel %vm458, %v317, 0
        %v466 = vsel %vm458, %v318, 0
        %v469 = vsel %vm458, %v319, 0
        %v472 = vsel %vm458, %v320, 0
        %v475 = vsel %vm458, %v321, 0
        %v478 = vsel %vm458, %v322, 0
        %v481 = vsel %vm458, %v323, 0
        %vm483 = vcmask 1043456
        %v485 = vsel %vm483, %v290, 0
        %487 = vmatprep.subr.mxu0 0.0
        %488 = vmatpush1.msra.mxu0 0.0
        %489 = vmatprep.subr.mxu0 0.0
        %490 = vmatpush1.msra.mxu0 0.0
        %491 = vmatprep.subr.mxu0 0.0
        %492 = vmatpush1.msra.mxu0 0.0
        %493 = vmatprep.subr.mxu0 0.0
        %494 = vmatpush1.msra.mxu0 0.0
        %495 = vmatprep.subr.mxu0 0.0
        %496 = vmatpush1.msra.mxu0 0.0
        %497 = vmatprep.subr.mxu0 0.0
        %498 = vmatpush1.msra.mxu0 0.0
        %499 = vmatprep.subr.mxu0 0.0
        %500 = vmatpush1.msra.mxu0 0.0
        %501 = vmatprep.subr.mxu0 0.0
        %502 = vmatpush1.msra.mxu0 0.0
        %503 = vmatprep.subr.mxu0 0.0
        %504 = vmatpush1.msra.mxu0 0.0
        %505 = vmatprep.subr.mxu0 0.0
        %506 = vmatpush1.msra.mxu0 0.0
        %507 = vmatprep.subr.mxu0 0.0
        %508 = vmatpush1.msra.mxu0 0.0
        %509 = vmatprep.subr.mxu0 0.0
        %510 = vmatpush1.msra.mxu0 0.0
        %511 = vmatprep.subr.mxu0 0.0
        %512 = vmatpush1.msra.mxu0 0.0
        %513 = vmatprep.subr.mxu0 0.0
        %514 = vmatpush1.msra.mxu0 0.0
        %515 = vmatprep.subr.mxu0 0.0
        %516 = vmatpush1.msra.mxu0 0.0
        %517 = vmatprep.subr.mxu0 0.0
        %518 = vmatpush1.msra.mxu0 %v485
        %519 = vmatprep.subr.mxu0 0.0
        %520 = vmatpush2.msra.mxu0 0.0
        %521 = vmatprep.subr.mxu0 0.0
        %522 = vmatpush2.msra.mxu0 0.0
        %523 = vmatprep.subr.mxu0 0.0
        %524 = vmatpush2.msra.mxu0 0.0
        %525 = vmatprep.subr.mxu0 0.0
        %526 = vmatpush2.msra.mxu0 0.0
        %527 = vmatprep.subr.mxu0 0.0
        %528 = vmatpush2.msra.mxu0 0.0
        %529 = vmatprep.subr.mxu0 0.0
        %530 = vmatpush2.msra.mxu0 0.0
        %531 = vmatprep.subr.mxu0 0.0
        %532 = vmatpush2.msra.mxu0 0.0
        %533 = vmatprep.subr.mxu0 0.0
        %534 = vmatpush2.msra.mxu0 0.0
        %535 = vmatprep.subr.mxu0 0.0
        %536 = vmatpush2.msra.mxu0 0.0
        %537 = vmatprep.subr.mxu0 0.0
        %538 = vmatpush2.msra.mxu0 0.0
        %539 = vmatprep.subr.mxu0 0.0
        %540 = vmatpush2.msra.mxu0 0.0
        %541 = vmatprep.subr.mxu0 0.0
        %542 = vmatpush2.msra.mxu0 0.0
        %543 = vmatprep.subr.mxu0 0.0
        %544 = vmatpush2.msra.mxu0 0.0
        %545 = vmatprep.subr.mxu0 0.0
        %546 = vmatpush2.msra.mxu0 0.0
        %547 = vmatprep.subr.mxu0 0.0
        %548 = vmatpush2.msra.mxu0 0.0
        %549 = vmatprep.subr.mxu0 0.0
        %550 = vmatpush2.msra.mxu0 0.0
        %551 = vmatprep.mubr.f32.mxu0 0.0
        %552 = vmatmul.mubr.f32.gmra.mxu0 %v460
        %v553 = vpop.f32.mrf.mxu0
        %v554 = vadd.f32 0.0, %v553
        %v555 = vpop.f32.mrf.mxu0
        %556 = vmatprep.mubr.f32.mxu0 0.0
        %557 = vmatmul.mubr.f32.gmra.mxu0 %v463
        %v558 = vpop.f32.mrf.mxu0
        %v559 = vadd.f32 0.0, %v558
        %v560 = vpop.f32.mrf.mxu0
        %561 = vmatprep.mubr.f32.mxu0 0.0
        %562 = vmatmul.mubr.f32.gmra.mxu0 %v466
        %v563 = vpop.f32.mrf.mxu0
        %v564 = vadd.f32 0.0, %v563
        %v565 = vpop.f32.mrf.mxu0
        %566 = vmatprep.mubr.f32.mxu0 0.0
        %567 = vmatmul.mubr.f32.gmra.mxu0 %v469
        %v568 = vpop.f32.mrf.mxu0
        %v569 = vadd.f32 0.0, %v568
        %v570 = vpop.f32.mrf.mxu0
        %571 = vmatprep.mubr.f32.mxu0 0.0
        %572 = vmatmul.mubr.f32.gmra.mxu0 %v472
        %v573 = vpop.f32.mrf.mxu0
        %v574 = vadd.f32 0.0, %v573
        %v575 = vpop.f32.mrf.mxu0
        %576 = vmatprep.mubr.f32.mxu0 0.0
        %577 = vmatmul.mubr.f32.gmra.mxu0 %v475
        %v578 = vpop.f32.mrf.mxu0
        %v579 = vadd.f32 0.0, %v578
        %v580 = vpop.f32.mrf.mxu0
        %581 = vmatprep.mubr.f32.mxu0 0.0
        %582 = vmatmul.mubr.f32.gmra.mxu0 %v478
        %v583 = vpop.f32.mrf.mxu0
        %v584 = vadd.f32 0.0, %v583
        %v585 = vpop.f32.mrf.mxu0
        %586 = vmatprep.mubr.f32.mxu0 0.0
        %587 = vmatmul.mubr.f32.gmra.mxu0 %v481
        %v588 = vpop.f32.mrf.mxu0
        %v589 = vadd.f32 0.0, %v588
        %v590 = vpop.f32.mrf.mxu0
        %591 = vdwg.mxu0
        %v592 = vld [vmem:[#allocation2] sm:$0xff]
        %v593 = vld [vmem:[#allocation2 + $0x8] sm:$0xff]
        %v594 = vld [vmem:[#allocation2 + $0x10] sm:$0xff]
        %v595 = vld [vmem:[#allocation2 + $0x18] sm:$0xff]
        %v596 = vld [vmem:[#allocation2 + $0x20] sm:$0xff]
        %v597 = vld [vmem:[#allocation2 + $0x28] sm:$0xff]
        %v598 = vld [vmem:[#allocation2 + $0x30] sm:$0xff]
        %v599 = vld [vmem:[#allocation2 + $0x38] sm:$0xff]
        %v600 = vld [vmem:[#allocation2 + $0x40] sm:$0xff]
        %v601 = vld [vmem:[#allocation2 + $0x48] sm:$0xff]
        %v602 = vld [vmem:[#allocation2 + $0x50] sm:$0xff]
        %v603 = vld [vmem:[#allocation2 + $0x58] sm:$0xff]
        %v604 = vld [vmem:[#allocation2 + $0x60] sm:$0xff]
        %v605 = vld [vmem:[#allocation2 + $0x68] sm:$0xff]
        %607 = vrot.lane.b32.xlu0 %v425, 32
        %v608 = vpop.permute.xlu0 %607
        %611 = vrot.lane.b32.xlu0 %v430, 64
        %v612 = vpop.permute.xlu0 %611
        %615 = vrot.lane.b32.xlu0 %v435, 96
        %v616 = vpop.permute.xlu0 %615
        %619 = vrot.lane.b32.xlu0 %v445, 32
        %v620 = vpop.permute.xlu0 %619
        %623 = vrot.lane.b32.xlu0 %v450, 64
        %v624 = vpop.permute.xlu0 %623
        %627 = vrot.lane.b32.xlu0 %v455, 96
        %v628 = vpop.permute.xlu0 %627
        %vm630 = vcmask 261120
        %v631 = vsel %vm630, %v420, %v608
        %vm632 = vcmask 523264
        %v633 = vsel %vm632, %v631, %v612
        %vm634 = vcmask 785408
        %v635 = vsel %vm634, %v633, %v616
        %v636 = vsel %vm630, %v440, %v620
        %v637 = vsel %vm632, %v636, %v624
        %v638 = vsel %vm634, %v637, %v628
        %640 = vrot.lane.b32.xlu0 %v420, 96
        %v641 = vpop.permute.xlu0 %640
        %643 = vrot.lane.b32.xlu0 %v430, 32
        %v644 = vpop.permute.xlu0 %643
        %646 = vrot.lane.b32.xlu0 %v435, 64
        %v647 = vpop.permute.xlu0 %646
        %650 = vrot.lane.b32.xlu0 %v440, 96
        %v651 = vpop.permute.xlu0 %650
        %653 = vrot.lane.b32.xlu0 %v450, 32
        %v654 = vpop.permute.xlu0 %653
        %656 = vrot.lane.b32.xlu0 %v455, 64
        %v657 = vpop.permute.xlu0 %656
        %v659 = vsel %vm630, %v641, %v425
        %v660 = vsel %vm632, %v659, %v644
        %v661 = vsel %vm634, %v660, %v647
        %v662 = vsel %vm630, %v651, %v445
        %v663 = vsel %vm632, %v662, %v654
        %v664 = vsel %vm634, %v663, %v657
        %665 = vrot.lane.b32.xlu0 %v420, 64
        %v666 = vpop.permute.xlu0 %665
        %668 = vrot.lane.b32.xlu0 %v425, 96
        %v669 = vpop.permute.xlu0 %668
        %671 = vrot.lane.b32.xlu0 %v435, 32
        %v672 = vpop.permute.xlu0 %671
        %674 = vrot.lane.b32.xlu0 %v440, 64
        %v675 = vpop.permute.xlu0 %674
        %677 = vrot.lane.b32.xlu0 %v445, 96
        %v678 = vpop.permute.xlu0 %677
        %680 = vrot.lane.b32.xlu0 %v455, 32
        %v681 = vpop.permute.xlu0 %680
        %v683 = vsel %vm630, %v666, %v669
        %v684 = vsel %vm632, %v683, %v430
        %v685 = vsel %vm634, %v684, %v672
        %v686 = vsel %vm630, %v675, %v678
        %v687 = vsel %vm632, %v686, %v450
        %v688 = vsel %vm634, %v687, %v681
        %690 = vrot.lane.b32.xlu0 %v559, 32
        %v691 = vpop.permute.xlu0 %690
        %694 = vrot.lane.b32.xlu0 %v564, 64
        %v695 = vpop.permute.xlu0 %694
        %698 = vrot.lane.b32.xlu0 %v569, 96
        %v699 = vpop.permute.xlu0 %698
        %702 = vrot.lane.b32.xlu0 %v579, 32
        %v703 = vpop.permute.xlu0 %702
        %706 = vrot.lane.b32.xlu0 %v584, 64
        %v707 = vpop.permute.xlu0 %706
        %710 = vrot.lane.b32.xlu0 %v589, 96
        %v711 = vpop.permute.xlu0 %710
        %v713 = vsel %vm630, %v554, %v691
        %v714 = vsel %vm632, %v713, %v695
        %v715 = vsel %vm634, %v714, %v699
        %v716 = vsel %vm630, %v574, %v703
        %v717 = vsel %vm632, %v716, %v707
        %v718 = vsel %vm634, %v717, %v711
        %vm719 = vcmask 130048
        %v721 = vsel %vm719, %v592, 0
        %v724 = vsel %vm719, %v594, 0
        %v727 = vsel %vm719, %v596, 0
        %v730 = vsel %vm719, %v598, 0
        %v733 = vsel %vm719, %v600, 0
        %v736 = vsel %vm719, %v602, 0
        %v739 = vsel %vm719, %v604, 0
        %741 = vmatprep.subr.mxu0 0.0
        %742 = vmatpush1.msra.mxu0 0.0
        %743 = vmatprep.subr.mxu0 0.0
        %744 = vmatpush1.msra.mxu0 0.0
        %745 = vmatprep.subr.mxu0 0.0
        %746 = vmatpush1.msra.mxu0 0.0
        %747 = vmatprep.subr.mxu0 0.0
        %748 = vmatpush1.msra.mxu0 0.0
        %749 = vmatprep.subr.mxu0 0.0
        %750 = vmatpush1.msra.mxu0 0.0
        %751 = vmatprep.subr.mxu0 0.0
        %752 = vmatpush1.msra.mxu0 0.0
        %753 = vmatprep.subr.mxu0 0.0
        %754 = vmatpush1.msra.mxu0 0.0
        %755 = vmatprep.subr.mxu0 0.0
        %756 = vmatpush1.msra.mxu0 0.0
        %757 = vmatprep.subr.mxu0 0.0
        %758 = vmatpush1.msra.mxu0 0.0
        %759 = vmatprep.subr.mxu0 0.0
        %760 = vmatpush1.msra.mxu0 0.0
        %761 = vmatprep.subr.mxu0 0.0
        %762 = vmatpush1.msra.mxu0 0.0
        %763 = vmatprep.subr.mxu0 0.0
        %764 = vmatpush1.msra.mxu0 0.0
        %765 = vmatprep.subr.mxu0 0.0
        %766 = vmatpush1.msra.mxu0 0.0
        %767 = vmatprep.subr.mxu0 0.0
        %768 = vmatpush1.msra.mxu0 0.0
        %769 = vmatprep.subr.mxu0 %v664
        %770 = vmatpush1.msra.mxu0 %v661
        %771 = vmatprep.subr.mxu0 %v638
        %772 = vmatpush1.msra.mxu0 %v635
        %773 = vmatprep.subr.mxu0 0.0
        %774 = vmatpush2.msra.mxu0 0.0
        %775 = vmatprep.subr.mxu0 0.0
        %776 = vmatpush2.msra.mxu0 0.0
        %777 = vmatprep.subr.mxu0 0.0
        %778 = vmatpush2.msra.mxu0 0.0
        %779 = vmatprep.subr.mxu0 0.0
        %780 = vmatpush2.msra.mxu0 0.0
        %781 = vmatprep.subr.mxu0 0.0
        %782 = vmatpush2.msra.mxu0 0.0
        %783 = vmatprep.subr.mxu0 0.0
        %784 = vmatpush2.msra.mxu0 0.0
        %785 = vmatprep.subr.mxu0 0.0
        %786 = vmatpush2.msra.mxu0 0.0
        %787 = vmatprep.subr.mxu0 0.0
        %788 = vmatpush2.msra.mxu0 0.0
        %789 = vmatprep.subr.mxu0 0.0
        %790 = vmatpush2.msra.mxu0 0.0
        %791 = vmatprep.subr.mxu0 0.0
        %792 = vmatpush2.msra.mxu0 0.0
        %793 = vmatprep.subr.mxu0 0.0
        %794 = vmatpush2.msra.mxu0 0.0
        %795 = vmatprep.subr.mxu0 0.0
        %796 = vmatpush2.msra.mxu0 0.0
        %797 = vmatprep.subr.mxu0 0.0
        %798 = vmatpush2.msra.mxu0 0.0
        %799 = vmatprep.subr.mxu0 0.0
        %800 = vmatpush2.msra.mxu0 0.0
        %801 = vmatprep.subr.mxu0 0.0
        %802 = vmatpush2.msra.mxu0 0.0
        %803 = vmatprep.subr.mxu0 0.0
        %804 = vmatpush2.msra.mxu0 0.0
        %805 = vmatprep.mubr.f32.mxu0 0.0
        %806 = vmatmul.mubr.f32.gmra.mxu0 %v721
        %v807 = vpop.f32.mrf.mxu0
        %v808 = vadd.f32 0.0, %v807
        %v809 = vpop.f32.mrf.mxu0
        %v810 = vadd.f32 0.0, %v809
        %811 = vmatprep.mubr.f32.mxu0 0.0
        %812 = vmatmul.mubr.f32.gmra.mxu0 %v724
        %v813 = vpop.f32.mrf.mxu0
        %v814 = vadd.f32 0.0, %v813
        %v815 = vpop.f32.mrf.mxu0
        %v816 = vadd.f32 0.0, %v815
        %817 = vmatprep.mubr.f32.mxu0 0.0
        %818 = vmatmul.mubr.f32.gmra.mxu0 %v727
        %v819 = vpop.f32.mrf.mxu0
        %v820 = vadd.f32 0.0, %v819
        %v821 = vpop.f32.mrf.mxu0
        %v822 = vadd.f32 0.0, %v821
        %823 = vmatprep.mubr.f32.mxu0 0.0
        %824 = vmatmul.mubr.f32.gmra.mxu0 %v730
        %v825 = vpop.f32.mrf.mxu0
        %v826 = vadd.f32 0.0, %v825
        %v827 = vpop.f32.mrf.mxu0
        %v828 = vadd.f32 0.0, %v827
        %829 = vmatprep.mubr.f32.mxu0 0.0
        %830 = vmatmul.mubr.f32.gmra.mxu0 %v733
        %v831 = vpop.f32.mrf.mxu0
        %v832 = vadd.f32 0.0, %v831
        %v833 = vpop.f32.mrf.mxu0
        %v834 = vadd.f32 0.0, %v833
        %835 = vmatprep.mubr.f32.mxu0 0.0
        %836 = vmatmul.mubr.f32.gmra.mxu0 %v736
        %v837 = vpop.f32.mrf.mxu0
        %v838 = vadd.f32 0.0, %v837
        %v839 = vpop.f32.mrf.mxu0
        %v840 = vadd.f32 0.0, %v839
        %841 = vmatprep.mubr.f32.mxu0 0.0
        %842 = vmatmul.mubr.f32.gmra.mxu0 %v739
        %v843 = vpop.f32.mrf.mxu0
        %v844 = vadd.f32 0.0, %v843
        %v845 = vpop.f32.mrf.mxu0
        %v846 = vadd.f32 0.0, %v845
        %847 = vdwg.mxu0
        %v849 = vsel %vm719, %v593, 0
        %v852 = vsel %vm719, %v595, 0
        %v855 = vsel %vm719, %v597, 0
        %v858 = vsel %vm719, %v599, 0
        %v861 = vsel %vm719, %v601, 0
        %v864 = vsel %vm719, %v603, 0
        %v867 = vsel %vm719, %v605, 0
        %869 = vmatprep.subr.mxu0 0.0
        %870 = vmatpush1.msra.mxu0 0.0
        %871 = vmatprep.subr.mxu0 0.0
        %872 = vmatpush1.msra.mxu0 0.0
        %873 = vmatprep.subr.mxu0 0.0
        %874 = vmatpush1.msra.mxu0 0.0
        %875 = vmatprep.subr.mxu0 0.0
        %876 = vmatpush1.msra.mxu0 0.0
        %877 = vmatprep.subr.mxu0 0.0
        %878 = vmatpush1.msra.mxu0 0.0
        %879 = vmatprep.subr.mxu0 0.0
        %880 = vmatpush1.msra.mxu0 0.0
        %881 = vmatprep.subr.mxu0 0.0
        %882 = vmatpush1.msra.mxu0 0.0
        %883 = vmatprep.subr.mxu0 0.0
        %884 = vmatpush1.msra.mxu0 0.0
        %885 = vmatprep.subr.mxu0 0.0
        %886 = vmatpush1.msra.mxu0 0.0
        %887 = vmatprep.subr.mxu0 0.0
        %888 = vmatpush1.msra.mxu0 0.0
        %889 = vmatprep.subr.mxu0 0.0
        %890 = vmatpush1.msra.mxu0 0.0
        %891 = vmatprep.subr.mxu0 0.0
        %892 = vmatpush1.msra.mxu0 0.0
        %893 = vmatprep.subr.mxu0 0.0
        %894 = vmatpush1.msra.mxu0 0.0
        %895 = vmatprep.subr.mxu0 0.0
        %896 = vmatpush1.msra.mxu0 0.0
        %897 = vmatprep.subr.mxu0 %v718
        %898 = vmatpush1.msra.mxu0 %v715
        %899 = vmatprep.subr.mxu0 %v688
        %900 = vmatpush1.msra.mxu0 %v685
        %901 = vmatprep.subr.mxu0 0.0
        %902 = vmatpush2.msra.mxu0 0.0
        %903 = vmatprep.subr.mxu0 0.0
        %904 = vmatpush2.msra.mxu0 0.0
        %905 = vmatprep.subr.mxu0 0.0
        %906 = vmatpush2.msra.mxu0 0.0
        %907 = vmatprep.subr.mxu0 0.0
        %908 = vmatpush2.msra.mxu0 0.0
        %909 = vmatprep.subr.mxu0 0.0
        %910 = vmatpush2.msra.mxu0 0.0
        %911 = vmatprep.subr.mxu0 0.0
        %912 = vmatpush2.msra.mxu0 0.0
        %913 = vmatprep.subr.mxu0 0.0
        %914 = vmatpush2.msra.mxu0 0.0
        %915 = vmatprep.subr.mxu0 0.0
        %916 = vmatpush2.msra.mxu0 0.0
        %917 = vmatprep.subr.mxu0 0.0
        %918 = vmatpush2.msra.mxu0 0.0
        %919 = vmatprep.subr.mxu0 0.0
        %920 = vmatpush2.msra.mxu0 0.0
        %921 = vmatprep.subr.mxu0 0.0
        %922 = vmatpush2.msra.mxu0 0.0
        %923 = vmatprep.subr.mxu0 0.0
        %924 = vmatpush2.msra.mxu0 0.0
        %925 = vmatprep.subr.mxu0 0.0
        %926 = vmatpush2.msra.mxu0 0.0
        %927 = vmatprep.subr.mxu0 0.0
        %928 = vmatpush2.msra.mxu0 0.0
        %929 = vmatprep.subr.mxu0 0.0
        %930 = vmatpush2.msra.mxu0 0.0
        %931 = vmatprep.subr.mxu0 0.0
        %932 = vmatpush2.msra.mxu0 0.0
        %933 = vmatprep.mubr.f32.mxu0 0.0
        %934 = vmatmul.mubr.f32.gmra.mxu0 %v849
        %v935 = vpop.f32.mrf.mxu0
        %v936 = vadd.f32 0.0, %v935
        %v937 = vpop.f32.mrf.mxu0
        %v938 = vadd.f32 0.0, %v937
        %939 = vmatprep.mubr.f32.mxu0 0.0
        %940 = vmatmul.mubr.f32.gmra.mxu0 %v852
        %v941 = vpop.f32.mrf.mxu0
        %v942 = vadd.f32 0.0, %v941
        %v943 = vpop.f32.mrf.mxu0
        %v944 = vadd.f32 0.0, %v943
        %945 = vmatprep.mubr.f32.mxu0 0.0
        %946 = vmatmul.mubr.f32.gmra.mxu0 %v855
        %v947 = vpop.f32.mrf.mxu0
        %v948 = vadd.f32 0.0, %v947
        %v949 = vpop.f32.mrf.mxu0
        %v950 = vadd.f32 0.0, %v949
        %951 = vmatprep.mubr.f32.mxu0 0.0
        %952 = vmatmul.mubr.f32.gmra.mxu0 %v858
        %v953 = vpop.f32.mrf.mxu0
        %v954 = vadd.f32 0.0, %v953
        %v955 = vpop.f32.mrf.mxu0
        %v956 = vadd.f32 0.0, %v955
        %957 = vmatprep.mubr.f32.mxu0 0.0
        %958 = vmatmul.mubr.f32.gmra.mxu0 %v861
        %v959 = vpop.f32.mrf.mxu0
        %v960 = vadd.f32 0.0, %v959
        %v961 = vpop.f32.mrf.mxu0
        %v962 = vadd.f32 0.0, %v961
        %963 = vmatprep.mubr.f32.mxu0 0.0
        %964 = vmatmul.mubr.f32.gmra.mxu0 %v864
        %v965 = vpop.f32.mrf.mxu0
        %v966 = vadd.f32 0.0, %v965
        %v967 = vpop.f32.mrf.mxu0
        %v968 = vadd.f32 0.0, %v967
        %969 = vmatprep.mubr.f32.mxu0 0.0
        %970 = vmatmul.mubr.f32.gmra.mxu0 %v867
        %v971 = vpop.f32.mrf.mxu0
        %v972 = vadd.f32 0.0, %v971
        %v973 = vpop.f32.mrf.mxu0
        %v974 = vadd.f32 0.0, %v973
        %975 = vdwg.mxu0
        %983 = vrot.lane.b32.xlu0 %v808, 96
        %v984 = vpop.permute.xlu0 %983
        %985 = vrot.lane.b32.xlu0 %v814, 96
        %v986 = vpop.permute.xlu0 %985
        %987 = vrot.lane.b32.xlu0 %v820, 96
        %v988 = vpop.permute.xlu0 %987
        %989 = vrot.lane.b32.xlu0 %v826, 96
        %v990 = vpop.permute.xlu0 %989
        %991 = vrot.lane.b32.xlu0 %v832, 96
        %v992 = vpop.permute.xlu0 %991
        %993 = vrot.lane.b32.xlu0 %v838, 96
        %v994 = vpop.permute.xlu0 %993
        %995 = vrot.lane.b32.xlu0 %v844, 96
        %v996 = vpop.permute.xlu0 %995
        %1004 = vrot.lane.b32.xlu0 %v808, 64
        %v1005 = vpop.permute.xlu0 %1004
        %1006 = vrot.lane.b32.xlu0 %v814, 64
        %v1007 = vpop.permute.xlu0 %1006
        %1008 = vrot.lane.b32.xlu0 %v820, 64
        %v1009 = vpop.permute.xlu0 %1008
        %1010 = vrot.lane.b32.xlu0 %v826, 64
        %v1011 = vpop.permute.xlu0 %1010
        %1012 = vrot.lane.b32.xlu0 %v832, 64
        %v1013 = vpop.permute.xlu0 %1012
        %1014 = vrot.lane.b32.xlu0 %v838, 64
        %v1015 = vpop.permute.xlu0 %1014
        %1016 = vrot.lane.b32.xlu0 %v844, 64
        %v1017 = vpop.permute.xlu0 %1016
        %1025 = vrot.lane.b32.xlu0 %v808, 32
        %v1026 = vpop.permute.xlu0 %1025
        %1027 = vrot.lane.b32.xlu0 %v814, 32
        %v1028 = vpop.permute.xlu0 %1027
        %1029 = vrot.lane.b32.xlu0 %v820, 32
        %v1030 = vpop.permute.xlu0 %1029
        %1031 = vrot.lane.b32.xlu0 %v826, 32
        %v1032 = vpop.permute.xlu0 %1031
        %1033 = vrot.lane.b32.xlu0 %v832, 32
        %v1034 = vpop.permute.xlu0 %1033
        %1035 = vrot.lane.b32.xlu0 %v838, 32
        %v1036 = vpop.permute.xlu0 %1035
        %1037 = vrot.lane.b32.xlu0 %v844, 32
        %v1038 = vpop.permute.xlu0 %1037
        %1053 = vrot.lane.b32.xlu0 %v810, 96
        %v1054 = vpop.permute.xlu0 %1053
        %1055 = vrot.lane.b32.xlu0 %v816, 96
        %v1056 = vpop.permute.xlu0 %1055
        %1057 = vrot.lane.b32.xlu0 %v822, 96
        %v1058 = vpop.permute.xlu0 %1057
        %1059 = vrot.lane.b32.xlu0 %v828, 96
        %v1060 = vpop.permute.xlu0 %1059
        %1061 = vrot.lane.b32.xlu0 %v834, 96
        %v1062 = vpop.permute.xlu0 %1061
        %1063 = vrot.lane.b32.xlu0 %v840, 96
        %v1064 = vpop.permute.xlu0 %1063
        %1065 = vrot.lane.b32.xlu0 %v846, 96
        %v1066 = vpop.permute.xlu0 %1065
        %1074 = vrot.lane.b32.xlu0 %v810, 64
        %v1075 = vpop.permute.xlu0 %1074
        %1076 = vrot.lane.b32.xlu0 %v816, 64
        %v1077 = vpop.permute.xlu0 %1076
        %1078 = vrot.lane.b32.xlu0 %v822, 64
        %v1079 = vpop.permute.xlu0 %1078
        %1080 = vrot.lane.b32.xlu0 %v828, 64
        %v1081 = vpop.permute.xlu0 %1080
        %1082 = vrot.lane.b32.xlu0 %v834, 64
        %v1083 = vpop.permute.xlu0 %1082
        %1084 = vrot.lane.b32.xlu0 %v840, 64
        %v1085 = vpop.permute.xlu0 %1084
        %1086 = vrot.lane.b32.xlu0 %v846, 64
        %v1087 = vpop.permute.xlu0 %1086
        %1095 = vrot.lane.b32.xlu0 %v810, 32
        %v1096 = vpop.permute.xlu0 %1095
        %1097 = vrot.lane.b32.xlu0 %v816, 32
        %v1098 = vpop.permute.xlu0 %1097
        %1099 = vrot.lane.b32.xlu0 %v822, 32
        %v1100 = vpop.permute.xlu0 %1099
        %1101 = vrot.lane.b32.xlu0 %v828, 32
        %v1102 = vpop.permute.xlu0 %1101
        %1103 = vrot.lane.b32.xlu0 %v834, 32
        %v1104 = vpop.permute.xlu0 %1103
        %1105 = vrot.lane.b32.xlu0 %v840, 32
        %v1106 = vpop.permute.xlu0 %1105
        %1107 = vrot.lane.b32.xlu0 %v846, 32
        %v1108 = vpop.permute.xlu0 %1107
        %v1116 = vlaneseq
        %v1117 = vshrl.u32 %v1116, 7
        %v1118 = vsub.s32 0, %v1117
        %v1119 = vrot.slane %v307, %v1118
        %v1120 = vadd.f32 %v808, %v1119
        %v1121 = vadd.f32 %v814, %v1119
        %v1122 = vadd.f32 %v820, %v1119
        %v1123 = vadd.f32 %v826, %v1119
        %v1124 = vadd.f32 %v832, %v1119
        %v1125 = vadd.f32 %v838, %v1119
        %v1126 = vadd.f32 %v844, %v1119
        %v1127 = vadd.f32 %v984, %v1119
        %v1128 = vadd.f32 %v986, %v1119
        %v1129 = vadd.f32 %v988, %v1119
        %v1130 = vadd.f32 %v990, %v1119
        %v1131 = vadd.f32 %v992, %v1119
        %v1132 = vadd.f32 %v994, %v1119
        %v1133 = vadd.f32 %v996, %v1119
        %v1134 = vadd.f32 %v1005, %v1119
        %v1135 = vadd.f32 %v1007, %v1119
        %v1136 = vadd.f32 %v1009, %v1119
        %v1137 = vadd.f32 %v1011, %v1119
        %v1138 = vadd.f32 %v1013, %v1119
        %v1139 = vadd.f32 %v1015, %v1119
        %v1140 = vadd.f32 %v1017, %v1119
        %v1141 = vadd.f32 %v1026, %v1119
        %v1142 = vadd.f32 %v1028, %v1119
        %v1143 = vadd.f32 %v1030, %v1119
        %v1144 = vadd.f32 %v1032, %v1119
        %v1145 = vadd.f32 %v1034, %v1119
        %v1146 = vadd.f32 %v1036, %v1119
        %v1147 = vadd.f32 %v1038, %v1119
        %v1148 = vadd.f32 %v810, %v1119
        %v1149 = vadd.f32 %v816, %v1119
        %v1150 = vadd.f32 %v822, %v1119
        %v1151 = vadd.f32 %v828, %v1119
        %v1152 = vadd.f32 %v834, %v1119
        %v1153 = vadd.f32 %v840, %v1119
        %v1154 = vadd.f32 %v846, %v1119
        %v1155 = vadd.f32 %v1054, %v1119
        %v1156 = vadd.f32 %v1056, %v1119
        %v1157 = vadd.f32 %v1058, %v1119
        %v1158 = vadd.f32 %v1060, %v1119
        %v1159 = vadd.f32 %v1062, %v1119
        %v1160 = vadd.f32 %v1064, %v1119
        %v1161 = vadd.f32 %v1066, %v1119
        %v1162 = vadd.f32 %v1075, %v1119
        %v1163 = vadd.f32 %v1077, %v1119
        %v1164 = vadd.f32 %v1079, %v1119
        %v1165 = vadd.f32 %v1081, %v1119
        %v1166 = vadd.f32 %v1083, %v1119
        %v1167 = vadd.f32 %v1085, %v1119
        %v1168 = vadd.f32 %v1087, %v1119
        %v1169 = vadd.f32 %v1096, %v1119
        %v1170 = vadd.f32 %v1098, %v1119
        %v1171 = vadd.f32 %v1100, %v1119
        %v1172 = vadd.f32 %v1102, %v1119
        %v1173 = vadd.f32 %v1104, %v1119
        %v1174 = vadd.f32 %v1106, %v1119
        %v1175 = vadd.f32 %v1108, %v1119
        %v1176 = vmax.f32 %v1120, 0.0
        %v1177 = vmax.f32 %v1121, 0.0
        %v1178 = vmax.f32 %v1122, 0.0
        %v1179 = vmax.f32 %v1123, 0.0
        %v1180 = vmax.f32 %v1124, 0.0
        %v1181 = vmax.f32 %v1125, 0.0
        %v1182 = vmax.f32 %v1126, 0.0
        %v1183 = vmax.f32 %v1127, 0.0
        %v1184 = vmax.f32 %v1128, 0.0
        %v1185 = vmax.f32 %v1129, 0.0
        %v1186 = vmax.f32 %v1130, 0.0
        %v1187 = vmax.f32 %v1131, 0.0
        %v1188 = vmax.f32 %v1132, 0.0
        %v1189 = vmax.f32 %v1133, 0.0
        %v1190 = vmax.f32 %v1134, 0.0
        %v1191 = vmax.f32 %v1135, 0.0
        %v1192 = vmax.f32 %v1136, 0.0
        %v1193 = vmax.f32 %v1137, 0.0
        %v1194 = vmax.f32 %v1138, 0.0
        %v1195 = vmax.f32 %v1139, 0.0
        %v1196 = vmax.f32 %v1140, 0.0
        %v1197 = vmax.f32 %v1141, 0.0
        %v1198 = vmax.f32 %v1142, 0.0
        %v1199 = vmax.f32 %v1143, 0.0
        %v1200 = vmax.f32 %v1144, 0.0
        %v1201 = vmax.f32 %v1145, 0.0
        %v1202 = vmax.f32 %v1146, 0.0
        %v1203 = vmax.f32 %v1147, 0.0
        %v1204 = vmax.f32 %v1148, 0.0
        %v1205 = vmax.f32 %v1149, 0.0
        %v1206 = vmax.f32 %v1150, 0.0
        %v1207 = vmax.f32 %v1151, 0.0
        %v1208 = vmax.f32 %v1152, 0.0
        %v1209 = vmax.f32 %v1153, 0.0
        %v1210 = vmax.f32 %v1154, 0.0
        %v1211 = vmax.f32 %v1155, 0.0
        %v1212 = vmax.f32 %v1156, 0.0
        %v1213 = vmax.f32 %v1157, 0.0
        %v1214 = vmax.f32 %v1158, 0.0
        %v1215 = vmax.f32 %v1159, 0.0
        %v1216 = vmax.f32 %v1160, 0.0
        %v1217 = vmax.f32 %v1161, 0.0
        %v1218 = vmax.f32 %v1162, 0.0
        %v1219 = vmax.f32 %v1163, 0.0
        %v1220 = vmax.f32 %v1164, 0.0
        %v1221 = vmax.f32 %v1165, 0.0
        %v1222 = vmax.f32 %v1166, 0.0
        %v1223 = vmax.f32 %v1167, 0.0
        %v1224 = vmax.f32 %v1168, 0.0
        %v1225 = vmax.f32 %v1169, 0.0
        %v1226 = vmax.f32 %v1170, 0.0
        %v1227 = vmax.f32 %v1171, 0.0
        %v1228 = vmax.f32 %v1172, 0.0
        %v1229 = vmax.f32 %v1173, 0.0
        %v1230 = vmax.f32 %v1174, 0.0
        %v1231 = vmax.f32 %v1175, 0.0
        %1239 = vrot.lane.b32.xlu0 %v936, 96
        %v1240 = vpop.permute.xlu0 %1239
        %1241 = vrot.lane.b32.xlu0 %v942, 96
        %v1242 = vpop.permute.xlu0 %1241
        %1243 = vrot.lane.b32.xlu0 %v948, 96
        %v1244 = vpop.permute.xlu0 %1243
        %1245 = vrot.lane.b32.xlu0 %v954, 96
        %v1246 = vpop.permute.xlu0 %1245
        %1247 = vrot.lane.b32.xlu0 %v960, 96
        %v1248 = vpop.permute.xlu0 %1247
        %1249 = vrot.lane.b32.xlu0 %v966, 96
        %v1250 = vpop.permute.xlu0 %1249
        %1251 = vrot.lane.b32.xlu0 %v972, 96
        %v1252 = vpop.permute.xlu0 %1251
        %1260 = vrot.lane.b32.xlu0 %v936, 64
        %v1261 = vpop.permute.xlu0 %1260
        %1262 = vrot.lane.b32.xlu0 %v942, 64
        %v1263 = vpop.permute.xlu0 %1262
        %1264 = vrot.lane.b32.xlu0 %v948, 64
        %v1265 = vpop.permute.xlu0 %1264
        %1266 = vrot.lane.b32.xlu0 %v954, 64
        %v1267 = vpop.permute.xlu0 %1266
        %1268 = vrot.lane.b32.xlu0 %v960, 64
        %v1269 = vpop.permute.xlu0 %1268
        %1270 = vrot.lane.b32.xlu0 %v966, 64
        %v1271 = vpop.permute.xlu0 %1270
        %1272 = vrot.lane.b32.xlu0 %v972, 64
        %v1273 = vpop.permute.xlu0 %1272
        %1281 = vrot.lane.b32.xlu0 %v936, 32
        %v1282 = vpop.permute.xlu0 %1281
        %1283 = vrot.lane.b32.xlu0 %v942, 32
        %v1284 = vpop.permute.xlu0 %1283
        %1285 = vrot.lane.b32.xlu0 %v948, 32
        %v1286 = vpop.permute.xlu0 %1285
        %1287 = vrot.lane.b32.xlu0 %v954, 32
        %v1288 = vpop.permute.xlu0 %1287
        %1289 = vrot.lane.b32.xlu0 %v960, 32
        %v1290 = vpop.permute.xlu0 %1289
        %1291 = vrot.lane.b32.xlu0 %v966, 32
        %v1292 = vpop.permute.xlu0 %1291
        %1293 = vrot.lane.b32.xlu0 %v972, 32
        %v1294 = vpop.permute.xlu0 %1293
        %1309 = vrot.lane.b32.xlu0 %v938, 96
        %v1310 = vpop.permute.xlu0 %1309
        %1311 = vrot.lane.b32.xlu0 %v944, 96
        %v1312 = vpop.permute.xlu0 %1311
        %1313 = vrot.lane.b32.xlu0 %v950, 96
        %v1314 = vpop.permute.xlu0 %1313
        %1315 = vrot.lane.b32.xlu0 %v956, 96
        %v1316 = vpop.permute.xlu0 %1315
        %1317 = vrot.lane.b32.xlu0 %v962, 96
        %v1318 = vpop.permute.xlu0 %1317
        %1319 = vrot.lane.b32.xlu0 %v968, 96
        %v1320 = vpop.permute.xlu0 %1319
        %1321 = vrot.lane.b32.xlu0 %v974, 96
        %v1322 = vpop.permute.xlu0 %1321
        %1330 = vrot.lane.b32.xlu0 %v938, 64
        %v1331 = vpop.permute.xlu0 %1330
        %1332 = vrot.lane.b32.xlu0 %v944, 64
        %v1333 = vpop.permute.xlu0 %1332
        %1334 = vrot.lane.b32.xlu0 %v950, 64
        %v1335 = vpop.permute.xlu0 %1334
        %1336 = vrot.lane.b32.xlu0 %v956, 64
        %v1337 = vpop.permute.xlu0 %1336
        %1338 = vrot.lane.b32.xlu0 %v962, 64
        %v1339 = vpop.permute.xlu0 %1338
        %1340 = vrot.lane.b32.xlu0 %v968, 64
        %v1341 = vpop.permute.xlu0 %1340
        %1342 = vrot.lane.b32.xlu0 %v974, 64
        %v1343 = vpop.permute.xlu0 %1342
        %1351 = vrot.lane.b32.xlu0 %v938, 32
        %v1352 = vpop.permute.xlu0 %1351
        %1353 = vrot.lane.b32.xlu0 %v944, 32
        %v1354 = vpop.permute.xlu0 %1353
        %1355 = vrot.lane.b32.xlu0 %v950, 32
        %v1356 = vpop.permute.xlu0 %1355
        %1357 = vrot.lane.b32.xlu0 %v956, 32
        %v1358 = vpop.permute.xlu0 %1357
        %1359 = vrot.lane.b32.xlu0 %v962, 32
        %v1360 = vpop.permute.xlu0 %1359
        %1361 = vrot.lane.b32.xlu0 %v968, 32
        %v1362 = vpop.permute.xlu0 %1361
        %1363 = vrot.lane.b32.xlu0 %v974, 32
        %v1364 = vpop.permute.xlu0 %1363
        %v1372 = vlaneseq
        %v1373 = vshrl.u32 %v1372, 7
        %v1374 = vsub.s32 1, %v1373
        %v1375 = vrot.slane %v307, %v1374
        %v1376 = vadd.f32 %v936, %v1375
        %v1377 = vadd.f32 %v942, %v1375
        %v1378 = vadd.f32 %v948, %v1375
        %v1379 = vadd.f32 %v954, %v1375
        %v1380 = vadd.f32 %v960, %v1375
        %v1381 = vadd.f32 %v966, %v1375
        %v1382 = vadd.f32 %v972, %v1375
        %v1383 = vadd.f32 %v1240, %v1375
        %v1384 = vadd.f32 %v1242, %v1375
        %v1385 = vadd.f32 %v1244, %v1375
        %v1386 = vadd.f32 %v1246, %v1375
        %v1387 = vadd.f32 %v1248, %v1375
        %v1388 = vadd.f32 %v1250, %v1375
        %v1389 = vadd.f32 %v1252, %v1375
        %v1390 = vadd.f32 %v1261, %v1375
        %v1391 = vadd.f32 %v1263, %v1375
        %v1392 = vadd.f32 %v1265, %v1375
        %v1393 = vadd.f32 %v1267, %v1375
        %v1394 = vadd.f32 %v1269, %v1375
        %v1395 = vadd.f32 %v1271, %v1375
        %v1396 = vadd.f32 %v1273, %v1375
        %v1397 = vadd.f32 %v1282, %v1375
        %v1398 = vadd.f32 %v1284, %v1375
        %v1399 = vadd.f32 %v1286, %v1375
        %v1400 = vadd.f32 %v1288, %v1375
        %v1401 = vadd.f32 %v1290, %v1375
        %v1402 = vadd.f32 %v1292, %v1375
        %v1403 = vadd.f32 %v1294, %v1375
        %v1404 = vadd.f32 %v938, %v1375
        %v1405 = vadd.f32 %v944, %v1375
        %v1406 = vadd.f32 %v950, %v1375
        %v1407 = vadd.f32 %v956, %v1375
        %v1408 = vadd.f32 %v962, %v1375
        %v1409 = vadd.f32 %v968, %v1375
        %v1410 = vadd.f32 %v974, %v1375
        %v1411 = vadd.f32 %v1310, %v1375
        %v1412 = vadd.f32 %v1312, %v1375
        %v1413 = vadd.f32 %v1314, %v1375
        %v1414 = vadd.f32 %v1316, %v1375
        %v1415 = vadd.f32 %v1318, %v1375
        %v1416 = vadd.f32 %v1320, %v1375
        %v1417 = vadd.f32 %v1322, %v1375
        %v1418 = vadd.f32 %v1331, %v1375
        %v1419 = vadd.f32 %v1333, %v1375
        %v1420 = vadd.f32 %v1335, %v1375
        %v1421 = vadd.f32 %v1337, %v1375
        %v1422 = vadd.f32 %v1339, %v1375
        %v1423 = vadd.f32 %v1341, %v1375
        %v1424 = vadd.f32 %v1343, %v1375
        %v1425 = vadd.f32 %v1352, %v1375
        %v1426 = vadd.f32 %v1354, %v1375
        %v1427 = vadd.f32 %v1356, %v1375
        %v1428 = vadd.f32 %v1358, %v1375
        %v1429 = vadd.f32 %v1360, %v1375
        %v1430 = vadd.f32 %v1362, %v1375
        %v1431 = vadd.f32 %v1364, %v1375
        %v1432 = vmax.f32 %v1376, 0.0
        %v1433 = vmax.f32 %v1377, 0.0
        %v1434 = vmax.f32 %v1378, 0.0
        %v1435 = vmax.f32 %v1379, 0.0
        %v1436 = vmax.f32 %v1380, 0.0
        %v1437 = vmax.f32 %v1381, 0.0
        %v1438 = vmax.f32 %v1382, 0.0
        %v1439 = vmax.f32 %v1383, 0.0
        %v1440 = vmax.f32 %v1384, 0.0
        %v1441 = vmax.f32 %v1385, 0.0
        %v1442 = vmax.f32 %v1386, 0.0
        %v1443 = vmax.f32 %v1387, 0.0
        %v1444 = vmax.f32 %v1388, 0.0
        %v1445 = vmax.f32 %v1389, 0.0
        %v1446 = vmax.f32 %v1390, 0.0
        %v1447 = vmax.f32 %v1391, 0.0
        %v1448 = vmax.f32 %v1392, 0.0
        %v1449 = vmax.f32 %v1393, 0.0
        %v1450 = vmax.f32 %v1394, 0.0
        %v1451 = vmax.f32 %v1395, 0.0
        %v1452 = vmax.f32 %v1396, 0.0
        %v1453 = vmax.f32 %v1397, 0.0
        %v1454 = vmax.f32 %v1398, 0.0
        %v1455 = vmax.f32 %v1399, 0.0
        %v1456 = vmax.f32 %v1400, 0.0
        %v1457 = vmax.f32 %v1401, 0.0
        %v1458 = vmax.f32 %v1402, 0.0
        %v1459 = vmax.f32 %v1403, 0.0
        %v1460 = vmax.f32 %v1404, 0.0
        %v1461 = vmax.f32 %v1405, 0.0
        %v1462 = vmax.f32 %v1406, 0.0
        %v1463 = vmax.f32 %v1407, 0.0
        %v1464 = vmax.f32 %v1408, 0.0
        %v1465 = vmax.f32 %v1409, 0.0
        %v1466 = vmax.f32 %v1410, 0.0
        %v1467 = vmax.f32 %v1411, 0.0
        %v1468 = vmax.f32 %v1412, 0.0
        %v1469 = vmax.f32 %v1413, 0.0
        %v1470 = vmax.f32 %v1414, 0.0
        %v1471 = vmax.f32 %v1415, 0.0
        %v1472 = vmax.f32 %v1416, 0.0
        %v1473 = vmax.f32 %v1417, 0.0
        %v1474 = vmax.f32 %v1418, 0.0
        %v1475 = vmax.f32 %v1419, 0.0
        %v1476 = vmax.f32 %v1420, 0.0
        %v1477 = vmax.f32 %v1421, 0.0
        %v1478 = vmax.f32 %v1422, 0.0
        %v1479 = vmax.f32 %v1423, 0.0
        %v1480 = vmax.f32 %v1424, 0.0
        %v1481 = vmax.f32 %v1425, 0.0
        %v1482 = vmax.f32 %v1426, 0.0
        %v1483 = vmax.f32 %v1427, 0.0
        %v1484 = vmax.f32 %v1428, 0.0
        %v1485 = vmax.f32 %v1429, 0.0
        %v1486 = vmax.f32 %v1430, 0.0
        %v1487 = vmax.f32 %v1431, 0.0
        %v1488 = vlaneseq
        %v1489 = vshrl.u32 %v1488, 7
        %v1490 = vsub.s32 2, %v1489
        %v1491 = vrot.slane %v307, %v1490
        %v1493 = vsel %vm630, %v1176, 0
        %v1496 = vsel %vm630, %v1177, 0
        %v1499 = vsel %vm630, %v1178, 0
        %v1502 = vsel %vm630, %v1179, 0
        %v1505 = vsel %vm630, %v1180, 0
        %v1508 = vsel %vm630, %v1181, 0
        %v1511 = vsel %vm630, %v1182, 0
        %v1514 = vsel %vm630, %v1183, 0
        %v1517 = vsel %vm630, %v1184, 0
        %v1520 = vsel %vm630, %v1185, 0
        %v1523 = vsel %vm630, %v1186, 0
        %v1526 = vsel %vm630, %v1187, 0
        %v1529 = vsel %vm630, %v1188, 0
        %v1532 = vsel %vm630, %v1189, 0
        %v1535 = vsel %vm630, %v1190, 0
        %v1538 = vsel %vm630, %v1191, 0
        %v1541 = vsel %vm630, %v1192, 0
        %v1544 = vsel %vm630, %v1193, 0
        %v1547 = vsel %vm630, %v1194, 0
        %v1550 = vsel %vm630, %v1195, 0
        %v1553 = vsel %vm630, %v1196, 0
        %v1556 = vsel %vm630, %v1197, 0
        %v1559 = vsel %vm630, %v1198, 0
        %v1562 = vsel %vm630, %v1199, 0
        %v1565 = vsel %vm630, %v1200, 0
        %v1568 = vsel %vm630, %v1201, 0
        %v1571 = vsel %vm630, %v1202, 0
        %v1574 = vsel %vm630, %v1203, 0
        %v1577 = vsel %vm630, %v1204, 0
        %v1580 = vsel %vm630, %v1205, 0
        %v1583 = vsel %vm630, %v1206, 0
        %v1586 = vsel %vm630, %v1207, 0
        %v1589 = vsel %vm630, %v1208, 0
        %v1592 = vsel %vm630, %v1209, 0
        %v1595 = vsel %vm630, %v1210, 0
        %v1598 = vsel %vm630, %v1211, 0
        %v1601 = vsel %vm630, %v1212, 0
        %v1604 = vsel %vm630, %v1213, 0
        %v1607 = vsel %vm630, %v1214, 0
        %v1610 = vsel %vm630, %v1215, 0
        %v1613 = vsel %vm630, %v1216, 0
        %v1616 = vsel %vm630, %v1217, 0
        %v1619 = vsel %vm630, %v1218, 0
        %v1622 = vsel %vm630, %v1219, 0
        %v1625 = vsel %vm630, %v1220, 0
        %v1628 = vsel %vm630, %v1221, 0
        %v1631 = vsel %vm630, %v1222, 0
        %v1634 = vsel %vm630, %v1223, 0
        %v1637 = vsel %vm630, %v1224, 0
        %v1640 = vsel %vm630, %v1225, 0
        %v1643 = vsel %vm630, %v1226, 0
        %v1646 = vsel %vm630, %v1227, 0
        %v1649 = vsel %vm630, %v1228, 0
        %v1652 = vsel %vm630, %v1229, 0
        %v1655 = vsel %vm630, %v1230, 0
        %v1658 = vsel %vm630, %v1231, 0
        %v1661 = vsel %vm630, %v1432, 0
        %v1664 = vsel %vm630, %v1433, 0
        %v1667 = vsel %vm630, %v1434, 0
        %v1670 = vsel %vm630, %v1435, 0
        %v1673 = vsel %vm630, %v1436, 0
        %v1676 = vsel %vm630, %v1437, 0
        %v1679 = vsel %vm630, %v1438, 0
        %v1682 = vsel %vm630, %v1439, 0
        %v1685 = vsel %vm630, %v1440, 0
        %v1688 = vsel %vm630, %v1441, 0
        %v1691 = vsel %vm630, %v1442, 0
        %v1694 = vsel %vm630, %v1443, 0
        %v1697 = vsel %vm630, %v1444, 0
        %v1700 = vsel %vm630, %v1445, 0
        %v1703 = vsel %vm630, %v1446, 0
        %v1706 = vsel %vm630, %v1447, 0
        %v1709 = vsel %vm630, %v1448, 0
        %v1712 = vsel %vm630, %v1449, 0
        %v1715 = vsel %vm630, %v1450, 0
        %v1718 = vsel %vm630, %v1451, 0
        %v1721 = vsel %vm630, %v1452, 0
        %v1724 = vsel %vm630, %v1453, 0
        %v1727 = vsel %vm630, %v1454, 0
        %v1730 = vsel %vm630, %v1455, 0
        %v1733 = vsel %vm630, %v1456, 0
        %v1736 = vsel %vm630, %v1457, 0
        %v1739 = vsel %vm630, %v1458, 0
        %v1742 = vsel %vm630, %v1459, 0
        %v1745 = vsel %vm630, %v1460, 0
        %v1748 = vsel %vm630, %v1461, 0
        %v1751 = vsel %vm630, %v1462, 0
        %v1754 = vsel %vm630, %v1463, 0
        %v1757 = vsel %vm630, %v1464, 0
        %v1760 = vsel %vm630, %v1465, 0
        %v1763 = vsel %vm630, %v1466, 0
        %v1766 = vsel %vm630, %v1467, 0
        %v1769 = vsel %vm630, %v1468, 0
        %v1772 = vsel %vm630, %v1469, 0
        %v1775 = vsel %vm630, %v1470, 0
        %v1778 = vsel %vm630, %v1471, 0
        %v1781 = vsel %vm630, %v1472, 0
        %v1784 = vsel %vm630, %v1473, 0
        %v1787 = vsel %vm630, %v1474, 0
        %v1790 = vsel %vm630, %v1475, 0
        %v1793 = vsel %vm630, %v1476, 0
        %v1796 = vsel %vm630, %v1477, 0
        %v1799 = vsel %vm630, %v1478, 0
        %v1802 = vsel %vm630, %v1479, 0
        %v1805 = vsel %vm630, %v1480, 0
        %v1808 = vsel %vm630, %v1481, 0
        %v1811 = vsel %vm630, %v1482, 0
        %v1814 = vsel %vm630, %v1483, 0
        %v1817 = vsel %vm630, %v1484, 0
        %v1820 = vsel %vm630, %v1485, 0
        %v1823 = vsel %vm630, %v1486, 0
        %v1826 = vsel %vm630, %v1487, 0
        %1828 = vmatprep.subr.mxu0 0.0
        %1829 = vmatpush1.msra.mxu0 0.0
        %1830 = vmatprep.subr.mxu0 0.0
        %1831 = vmatpush1.msra.mxu0 0.0
        %1832 = vmatprep.subr.mxu0 0.0
        %1833 = vmatpush1.msra.mxu0 0.0
        %1834 = vmatprep.subr.mxu0 0.0
        %1835 = vmatpush1.msra.mxu0 0.0
        %1836 = vmatprep.subr.mxu0 0.0
        %1837 = vmatpush1.msra.mxu0 0.0
        %1838 = vmatprep.subr.mxu0 0.0
        %1839 = vmatpush1.msra.mxu0 0.0
        %1840 = vmatprep.subr.mxu0 0.0
        %1841 = vmatpush1.msra.mxu0 0.0
        %1842 = vmatprep.subr.mxu0 0.0
        %1843 = vmatpush1.msra.mxu0 0.0
        %1844 = vmatprep.subr.mxu0 0.0
        %1845 = vmatpush1.msra.mxu0 0.0
        %1846 = vmatprep.subr.mxu0 0.0
        %1847 = vmatpush1.msra.mxu0 0.0
        %1848 = vmatprep.subr.mxu0 0.0
        %1849 = vmatpush1.msra.mxu0 0.0
        %1850 = vmatprep.subr.mxu0 0.0
        %1851 = vmatpush1.msra.mxu0 0.0
        %1852 = vmatprep.subr.mxu0 0.0
        %1853 = vmatpush1.msra.mxu0 %v305
        %1854 = vmatprep.subr.mxu0 0.0
        %1855 = vmatpush1.msra.mxu0 %v303
        %1856 = vmatprep.subr.mxu0 0.0
        %1857 = vmatpush1.msra.mxu0 %v298
        %1858 = vmatprep.subr.mxu0 0.0
        %1859 = vmatpush1.msra.mxu0 %v291
        %1860 = vmatprep.subr.mxu0 0.0
        %1861 = vmatpush2.msra.mxu0 0.0
        %1862 = vmatprep.subr.mxu0 0.0
        %1863 = vmatpush2.msra.mxu0 0.0
        %1864 = vmatprep.subr.mxu0 0.0
        %1865 = vmatpush2.msra.mxu0 0.0
        %1866 = vmatprep.subr.mxu0 0.0
        %1867 = vmatpush2.msra.mxu0 0.0
        %1868 = vmatprep.subr.mxu0 0.0
        %1869 = vmatpush2.msra.mxu0 0.0
        %1870 = vmatprep.subr.mxu0 0.0
        %1871 = vmatpush2.msra.mxu0 0.0
        %1872 = vmatprep.subr.mxu0 0.0
        %1873 = vmatpush2.msra.mxu0 0.0
        %1874 = vmatprep.subr.mxu0 0.0
        %1875 = vmatpush2.msra.mxu0 0.0
        %1876 = vmatprep.subr.mxu0 0.0
        %1877 = vmatpush2.msra.mxu0 0.0
        %1878 = vmatprep.subr.mxu0 0.0
        %1879 = vmatpush2.msra.mxu0 0.0
        %1880 = vmatprep.subr.mxu0 0.0
        %1881 = vmatpush2.msra.mxu0 0.0
        %1882 = vmatprep.subr.mxu0 0.0
        %1883 = vmatpush2.msra.mxu0 0.0
        %1884 = vmatprep.subr.mxu0 0.0
        %1885 = vmatpush2.msra.mxu0 0.0
        %1886 = vmatprep.subr.mxu0 0.0
        %1887 = vmatpush2.msra.mxu0 0.0
        %1888 = vmatprep.subr.mxu0 0.0
        %1889 = vmatpush2.msra.mxu0 0.0
        %1890 = vmatprep.subr.mxu0 0.0
        %1891 = vmatpush2.msra.mxu0 0.0
        %1892 = vmatprep.mubr.f32.mxu0 0.0
        %1893 = vmatmul.mubr.f32.gmra.mxu0 %v1493
        %v1894 = vpop.f32.mrf.mxu0
        %v1895 = vadd.f32 %v1491, %v1894
        %v1896 = vpop.f32.mrf.mxu0
        %1897 = vmatprep.mubr.f32.mxu0 0.0
        %1898 = vmatmul.mubr.f32.gmra.mxu0 %v1496
        %v1899 = vpop.f32.mrf.mxu0
        %v1900 = vadd.f32 %v1491, %v1899
        %v1901 = vpop.f32.mrf.mxu0
        %1902 = vmatprep.mubr.f32.mxu0 0.0
        %1903 = vmatmul.mubr.f32.gmra.mxu0 %v1499
        %v1904 = vpop.f32.mrf.mxu0
        %v1905 = vadd.f32 %v1491, %v1904
        %v1906 = vpop.f32.mrf.mxu0
        %1907 = vmatprep.mubr.f32.mxu0 0.0
        %1908 = vmatmul.mubr.f32.gmra.mxu0 %v1502
        %v1909 = vpop.f32.mrf.mxu0
        %v1910 = vadd.f32 %v1491, %v1909
        %v1911 = vpop.f32.mrf.mxu0
        %1912 = vmatprep.mubr.f32.mxu0 0.0
        %1913 = vmatmul.mubr.f32.gmra.mxu0 %v1505
        %v1914 = vpop.f32.mrf.mxu0
        %v1915 = vadd.f32 %v1491, %v1914
        %v1916 = vpop.f32.mrf.mxu0
        %1917 = vmatprep.mubr.f32.mxu0 0.0
        %1918 = vmatmul.mubr.f32.gmra.mxu0 %v1508
        %v1919 = vpop.f32.mrf.mxu0
        %v1920 = vadd.f32 %v1491, %v1919
        %v1921 = vpop.f32.mrf.mxu0
        %1922 = vmatprep.mubr.f32.mxu0 0.0
        %1923 = vmatmul.mubr.f32.gmra.mxu0 %v1511
        %v1924 = vpop.f32.mrf.mxu0
        %v1925 = vadd.f32 %v1491, %v1924
        %v1926 = vpop.f32.mrf.mxu0
        %1927 = vmatprep.mubr.f32.mxu0 0.0
        %1928 = vmatmul.mubr.f32.gmra.mxu0 %v1514
        %v1929 = vpop.f32.mrf.mxu0
        %v1930 = vadd.f32 %v1491, %v1929
        %v1931 = vpop.f32.mrf.mxu0
        %1932 = vmatprep.mubr.f32.mxu0 0.0
        %1933 = vmatmul.mubr.f32.gmra.mxu0 %v1517
        %v1934 = vpop.f32.mrf.mxu0
        %v1935 = vadd.f32 %v1491, %v1934
        %v1936 = vpop.f32.mrf.mxu0
        %1937 = vmatprep.mubr.f32.mxu0 0.0
        %1938 = vmatmul.mubr.f32.gmra.mxu0 %v1520
        %v1939 = vpop.f32.mrf.mxu0
        %v1940 = vadd.f32 %v1491, %v1939
        %v1941 = vpop.f32.mrf.mxu0
        %1942 = vmatprep.mubr.f32.mxu0 0.0
        %1943 = vmatmul.mubr.f32.gmra.mxu0 %v1523
        %v1944 = vpop.f32.mrf.mxu0
        %v1945 = vadd.f32 %v1491, %v1944
        %v1946 = vpop.f32.mrf.mxu0
        %1947 = vmatprep.mubr.f32.mxu0 0.0
        %1948 = vmatmul.mubr.f32.gmra.mxu0 %v1526
        %v1949 = vpop.f32.mrf.mxu0
        %v1950 = vadd.f32 %v1491, %v1949
        %v1951 = vpop.f32.mrf.mxu0
        %1952 = vmatprep.mubr.f32.mxu0 0.0
        %1953 = vmatmul.mubr.f32.gmra.mxu0 %v1529
        %v1954 = vpop.f32.mrf.mxu0
        %v1955 = vadd.f32 %v1491, %v1954
        %v1956 = vpop.f32.mrf.mxu0
        %1957 = vmatprep.mubr.f32.mxu0 0.0
        %1958 = vmatmul.mubr.f32.gmra.mxu0 %v1532
        %v1959 = vpop.f32.mrf.mxu0
        %v1960 = vadd.f32 %v1491, %v1959
        %v1961 = vpop.f32.mrf.mxu0
        %1962 = vmatprep.mubr.f32.mxu0 0.0
        %1963 = vmatmul.mubr.f32.gmra.mxu0 %v1535
        %v1964 = vpop.f32.mrf.mxu0
        %v1965 = vadd.f32 %v1491, %v1964
        %v1966 = vpop.f32.mrf.mxu0
        %1967 = vmatprep.mubr.f32.mxu0 0.0
        %1968 = vmatmul.mubr.f32.gmra.mxu0 %v1538
        %v1969 = vpop.f32.mrf.mxu0
        %v1970 = vadd.f32 %v1491, %v1969
        %v1971 = vpop.f32.mrf.mxu0
        %1972 = vmatprep.mubr.f32.mxu0 0.0
        %1973 = vmatmul.mubr.f32.gmra.mxu0 %v1541
        %v1974 = vpop.f32.mrf.mxu0
        %v1975 = vadd.f32 %v1491, %v1974
        %v1976 = vpop.f32.mrf.mxu0
        %1977 = vmatprep.mubr.f32.mxu0 0.0
        %1978 = vmatmul.mubr.f32.gmra.mxu0 %v1544
        %v1979 = vpop.f32.mrf.mxu0
        %v1980 = vadd.f32 %v1491, %v1979
        %v1981 = vpop.f32.mrf.mxu0
        %1982 = vmatprep.mubr.f32.mxu0 0.0
        %1983 = vmatmul.mubr.f32.gmra.mxu0 %v1547
        %v1984 = vpop.f32.mrf.mxu0
        %v1985 = vadd.f32 %v1491, %v1984
        %v1986 = vpop.f32.mrf.mxu0
        %1987 = vmatprep.mubr.f32.mxu0 0.0
        %1988 = vmatmul.mubr.f32.gmra.mxu0 %v1550
        %v1989 = vpop.f32.mrf.mxu0
        %v1990 = vadd.f32 %v1491, %v1989
        %v1991 = vpop.f32.mrf.mxu0
        %1992 = vmatprep.mubr.f32.mxu0 0.0
        %1993 = vmatmul.mubr.f32.gmra.mxu0 %v1553
        %v1994 = vpop.f32.mrf.mxu0
        %v1995 = vadd.f32 %v1491, %v1994
        %v1996 = vpop.f32.mrf.mxu0
        %1997 = vmatprep.mubr.f32.mxu0 0.0
        %1998 = vmatmul.mubr.f32.gmra.mxu0 %v1556
        %v1999 = vpop.f32.mrf.mxu0
        %v2000 = vadd.f32 %v1491, %v1999
        %v2001 = vpop.f32.mrf.mxu0
        %2002 = vmatprep.mubr.f32.mxu0 0.0
        %2003 = vmatmul.mubr.f32.gmra.mxu0 %v1559
        %v2004 = vpop.f32.mrf.mxu0
        %v2005 = vadd.f32 %v1491, %v2004
        %v2006 = vpop.f32.mrf.mxu0
        %2007 = vmatprep.mubr.f32.mxu0 0.0
        %2008 = vmatmul.mubr.f32.gmra.mxu0 %v1562
        %v2009 = vpop.f32.mrf.mxu0
        %v2010 = vadd.f32 %v1491, %v2009
        %v2011 = vpop.f32.mrf.mxu0
        %2012 = vmatprep.mubr.f32.mxu0 0.0
        %2013 = vmatmul.mubr.f32.gmra.mxu0 %v1565
        %v2014 = vpop.f32.mrf.mxu0
        %v2015 = vadd.f32 %v1491, %v2014
        %v2016 = vpop.f32.mrf.mxu0
        %2017 = vmatprep.mubr.f32.mxu0 0.0
        %2018 = vmatmul.mubr.f32.gmra.mxu0 %v1568
        %v2019 = vpop.f32.mrf.mxu0
        %v2020 = vadd.f32 %v1491, %v2019
        %v2021 = vpop.f32.mrf.mxu0
        %2022 = vmatprep.mubr.f32.mxu0 0.0
        %2023 = vmatmul.mubr.f32.gmra.mxu0 %v1571
        %v2024 = vpop.f32.mrf.mxu0
        %v2025 = vadd.f32 %v1491, %v2024
        %v2026 = vpop.f32.mrf.mxu0
        %2027 = vmatprep.mubr.f32.mxu0 0.0
        %2028 = vmatmul.mubr.f32.gmra.mxu0 %v1574
        %v2029 = vpop.f32.mrf.mxu0
        %v2030 = vadd.f32 %v1491, %v2029
        %v2031 = vpop.f32.mrf.mxu0
        %2032 = vmatprep.mubr.f32.mxu0 0.0
        %2033 = vmatmul.mubr.f32.gmra.mxu0 %v1577
        %v2034 = vpop.f32.mrf.mxu0
        %v2035 = vadd.f32 %v1491, %v2034
        %v2036 = vpop.f32.mrf.mxu0
        %2037 = vmatprep.mubr.f32.mxu0 0.0
        %2038 = vmatmul.mubr.f32.gmra.mxu0 %v1580
        %v2039 = vpop.f32.mrf.mxu0
        %v2040 = vadd.f32 %v1491, %v2039
        %v2041 = vpop.f32.mrf.mxu0
        %2042 = vmatprep.mubr.f32.mxu0 0.0
        %2043 = vmatmul.mubr.f32.gmra.mxu0 %v1583
        %v2044 = vpop.f32.mrf.mxu0
        %v2045 = vadd.f32 %v1491, %v2044
        %v2046 = vpop.f32.mrf.mxu0
        %2047 = vmatprep.mubr.f32.mxu0 0.0
        %2048 = vmatmul.mubr.f32.gmra.mxu0 %v1586
        %v2049 = vpop.f32.mrf.mxu0
        %v2050 = vadd.f32 %v1491, %v2049
        %v2051 = vpop.f32.mrf.mxu0
        %2052 = vmatprep.mubr.f32.mxu0 0.0
        %2053 = vmatmul.mubr.f32.gmra.mxu0 %v1589
        %v2054 = vpop.f32.mrf.mxu0
        %v2055 = vadd.f32 %v1491, %v2054
        %v2056 = vpop.f32.mrf.mxu0
        %2057 = vmatprep.mubr.f32.mxu0 0.0
        %2058 = vmatmul.mubr.f32.gmra.mxu0 %v1592
        %v2059 = vpop.f32.mrf.mxu0
        %v2060 = vadd.f32 %v1491, %v2059
        %v2061 = vpop.f32.mrf.mxu0
        %2062 = vmatprep.mubr.f32.mxu0 0.0
        %2063 = vmatmul.mubr.f32.gmra.mxu0 %v1595
        %v2064 = vpop.f32.mrf.mxu0
        %v2065 = vadd.f32 %v1491, %v2064
        %v2066 = vpop.f32.mrf.mxu0
        %2067 = vmatprep.mubr.f32.mxu0 0.0
        %2068 = vmatmul.mubr.f32.gmra.mxu0 %v1598
        %v2069 = vpop.f32.mrf.mxu0
        %v2070 = vadd.f32 %v1491, %v2069
        %v2071 = vpop.f32.mrf.mxu0
        %2072 = vmatprep.mubr.f32.mxu0 0.0
        %2073 = vmatmul.mubr.f32.gmra.mxu0 %v1601
        %v2074 = vpop.f32.mrf.mxu0
        %v2075 = vadd.f32 %v1491, %v2074
        %v2076 = vpop.f32.mrf.mxu0
        %2077 = vmatprep.mubr.f32.mxu0 0.0
        %2078 = vmatmul.mubr.f32.gmra.mxu0 %v1604
        %v2079 = vpop.f32.mrf.mxu0
        %v2080 = vadd.f32 %v1491, %v2079
        %v2081 = vpop.f32.mrf.mxu0
        %2082 = vmatprep.mubr.f32.mxu0 0.0
        %2083 = vmatmul.mubr.f32.gmra.mxu0 %v1607
        %v2084 = vpop.f32.mrf.mxu0
        %v2085 = vadd.f32 %v1491, %v2084
        %v2086 = vpop.f32.mrf.mxu0
        %2087 = vmatprep.mubr.f32.mxu0 0.0
        %2088 = vmatmul.mubr.f32.gmra.mxu0 %v1610
        %v2089 = vpop.f32.mrf.mxu0
        %v2090 = vadd.f32 %v1491, %v2089
        %v2091 = vpop.f32.mrf.mxu0
        %2092 = vmatprep.mubr.f32.mxu0 0.0
        %2093 = vmatmul.mubr.f32.gmra.mxu0 %v1613
        %v2094 = vpop.f32.mrf.mxu0
        %v2095 = vadd.f32 %v1491, %v2094
        %v2096 = vpop.f32.mrf.mxu0
        %2097 = vmatprep.mubr.f32.mxu0 0.0
        %2098 = vmatmul.mubr.f32.gmra.mxu0 %v1616
        %v2099 = vpop.f32.mrf.mxu0
        %v2100 = vadd.f32 %v1491, %v2099
        %v2101 = vpop.f32.mrf.mxu0
        %2102 = vmatprep.mubr.f32.mxu0 0.0
        %2103 = vmatmul.mubr.f32.gmra.mxu0 %v1619
        %v2104 = vpop.f32.mrf.mxu0
        %v2105 = vadd.f32 %v1491, %v2104
        %v2106 = vpop.f32.mrf.mxu0
        %2107 = vmatprep.mubr.f32.mxu0 0.0
        %2108 = vmatmul.mubr.f32.gmra.mxu0 %v1622
        %v2109 = vpop.f32.mrf.mxu0
        %v2110 = vadd.f32 %v1491, %v2109
        %v2111 = vpop.f32.mrf.mxu0
        %2112 = vmatprep.mubr.f32.mxu0 0.0
        %2113 = vmatmul.mubr.f32.gmra.mxu0 %v1625
        %v2114 = vpop.f32.mrf.mxu0
        %v2115 = vadd.f32 %v1491, %v2114
        %v2116 = vpop.f32.mrf.mxu0
        %2117 = vmatprep.mubr.f32.mxu0 0.0
        %2118 = vmatmul.mubr.f32.gmra.mxu0 %v1628
        %v2119 = vpop.f32.mrf.mxu0
        %v2120 = vadd.f32 %v1491, %v2119
        %v2121 = vpop.f32.mrf.mxu0
        %2122 = vmatprep.mubr.f32.mxu0 0.0
        %2123 = vmatmul.mubr.f32.gmra.mxu0 %v1631
        %v2124 = vpop.f32.mrf.mxu0
        %v2125 = vadd.f32 %v1491, %v2124
        %v2126 = vpop.f32.mrf.mxu0
        %2127 = vmatprep.mubr.f32.mxu0 0.0
        %2128 = vmatmul.mubr.f32.gmra.mxu0 %v1634
        %v2129 = vpop.f32.mrf.mxu0
        %v2130 = vadd.f32 %v1491, %v2129
        %v2131 = vpop.f32.mrf.mxu0
        %2132 = vmatprep.mubr.f32.mxu0 0.0
        %2133 = vmatmul.mubr.f32.gmra.mxu0 %v1637
        %v2134 = vpop.f32.mrf.mxu0
        %v2135 = vadd.f32 %v1491, %v2134
        %v2136 = vpop.f32.mrf.mxu0
        %2137 = vmatprep.mubr.f32.mxu0 0.0
        %2138 = vmatmul.mubr.f32.gmra.mxu0 %v1640
        %v2139 = vpop.f32.mrf.mxu0
        %v2140 = vadd.f32 %v1491, %v2139
        %v2141 = vpop.f32.mrf.mxu0
        %2142 = vmatprep.mubr.f32.mxu0 0.0
        %2143 = vmatmul.mubr.f32.gmra.mxu0 %v1643
        %v2144 = vpop.f32.mrf.mxu0
        %v2145 = vadd.f32 %v1491, %v2144
        %v2146 = vpop.f32.mrf.mxu0
        %2147 = vmatprep.mubr.f32.mxu0 0.0
        %2148 = vmatmul.mubr.f32.gmra.mxu0 %v1646
        %v2149 = vpop.f32.mrf.mxu0
        %v2150 = vadd.f32 %v1491, %v2149
        %v2151 = vpop.f32.mrf.mxu0
        %2152 = vmatprep.mubr.f32.mxu0 0.0
        %2153 = vmatmul.mubr.f32.gmra.mxu0 %v1649
        %v2154 = vpop.f32.mrf.mxu0
        %v2155 = vadd.f32 %v1491, %v2154
        %v2156 = vpop.f32.mrf.mxu0
        %2157 = vmatprep.mubr.f32.mxu0 0.0
        %2158 = vmatmul.mubr.f32.gmra.mxu0 %v1652
        %v2159 = vpop.f32.mrf.mxu0
        %v2160 = vadd.f32 %v1491, %v2159
        %v2161 = vpop.f32.mrf.mxu0
        %2162 = vmatprep.mubr.f32.mxu0 0.0
        %2163 = vmatmul.mubr.f32.gmra.mxu0 %v1655
        %v2164 = vpop.f32.mrf.mxu0
        %v2165 = vadd.f32 %v1491, %v2164
        %v2166 = vpop.f32.mrf.mxu0
        %2167 = vmatprep.mubr.f32.mxu0 0.0
        %2168 = vmatmul.mubr.f32.gmra.mxu0 %v1658
        %v2169 = vpop.f32.mrf.mxu0
        %v2170 = vadd.f32 %v1491, %v2169
        %v2171 = vpop.f32.mrf.mxu0
        %2172 = vmatprep.mubr.f32.mxu0 0.0
        %2173 = vmatmul.mubr.f32.gmra.mxu0 %v1661
        %v2174 = vpop.f32.mrf.mxu0
        %v2175 = vadd.f32 %v1491, %v2174
        %v2176 = vpop.f32.mrf.mxu0
        %2177 = vmatprep.mubr.f32.mxu0 0.0
        %2178 = vmatmul.mubr.f32.gmra.mxu0 %v1664
        %v2179 = vpop.f32.mrf.mxu0
        %v2180 = vadd.f32 %v1491, %v2179
        %v2181 = vpop.f32.mrf.mxu0
        %2182 = vmatprep.mubr.f32.mxu0 0.0
        %2183 = vmatmul.mubr.f32.gmra.mxu0 %v1667
        %v2184 = vpop.f32.mrf.mxu0
        %v2185 = vadd.f32 %v1491, %v2184
        %v2186 = vpop.f32.mrf.mxu0
        %2187 = vmatprep.mubr.f32.mxu0 0.0
        %2188 = vmatmul.mubr.f32.gmra.mxu0 %v1670
        %v2189 = vpop.f32.mrf.mxu0
        %v2190 = vadd.f32 %v1491, %v2189
        %v2191 = vpop.f32.mrf.mxu0
        %2192 = vmatprep.mubr.f32.mxu0 0.0
        %2193 = vmatmul.mubr.f32.gmra.mxu0 %v1673
        %v2194 = vpop.f32.mrf.mxu0
        %v2195 = vadd.f32 %v1491, %v2194
        %v2196 = vpop.f32.mrf.mxu0
        %2197 = vmatprep.mubr.f32.mxu0 0.0
        %2198 = vmatmul.mubr.f32.gmra.mxu0 %v1676
        %v2199 = vpop.f32.mrf.mxu0
        %v2200 = vadd.f32 %v1491, %v2199
        %v2201 = vpop.f32.mrf.mxu0
        %2202 = vmatprep.mubr.f32.mxu0 0.0
        %2203 = vmatmul.mubr.f32.gmra.mxu0 %v1679
        %v2204 = vpop.f32.mrf.mxu0
        %v2205 = vadd.f32 %v1491, %v2204
        %v2206 = vpop.f32.mrf.mxu0
        %2207 = vmatprep.mubr.f32.mxu0 0.0
        %2208 = vmatmul.mubr.f32.gmra.mxu0 %v1682
        %v2209 = vpop.f32.mrf.mxu0
        %v2210 = vadd.f32 %v1491, %v2209
        %v2211 = vpop.f32.mrf.mxu0
        %2212 = vmatprep.mubr.f32.mxu0 0.0
        %2213 = vmatmul.mubr.f32.gmra.mxu0 %v1685
        %v2214 = vpop.f32.mrf.mxu0
        %v2215 = vadd.f32 %v1491, %v2214
        %v2216 = vpop.f32.mrf.mxu0
        %2217 = vmatprep.mubr.f32.mxu0 0.0
        %2218 = vmatmul.mubr.f32.gmra.mxu0 %v1688
        %v2219 = vpop.f32.mrf.mxu0
        %v2220 = vadd.f32 %v1491, %v2219
        %v2221 = vpop.f32.mrf.mxu0
        %2222 = vmatprep.mubr.f32.mxu0 0.0
        %2223 = vmatmul.mubr.f32.gmra.mxu0 %v1691
        %v2224 = vpop.f32.mrf.mxu0
        %v2225 = vadd.f32 %v1491, %v2224
        %v2226 = vpop.f32.mrf.mxu0
        %2227 = vmatprep.mubr.f32.mxu0 0.0
        %2228 = vmatmul.mubr.f32.gmra.mxu0 %v1694
        %v2229 = vpop.f32.mrf.mxu0
        %v2230 = vadd.f32 %v1491, %v2229
        %v2231 = vpop.f32.mrf.mxu0
        %2232 = vmatprep.mubr.f32.mxu0 0.0
        %2233 = vmatmul.mubr.f32.gmra.mxu0 %v1697
        %v2234 = vpop.f32.mrf.mxu0
        %v2235 = vadd.f32 %v1491, %v2234
        %v2236 = vpop.f32.mrf.mxu0
        %2237 = vmatprep.mubr.f32.mxu0 0.0
        %2238 = vmatmul.mubr.f32.gmra.mxu0 %v1700
        %v2239 = vpop.f32.mrf.mxu0
        %v2240 = vadd.f32 %v1491, %v2239
        %v2241 = vpop.f32.mrf.mxu0
        %2242 = vmatprep.mubr.f32.mxu0 0.0
        %2243 = vmatmul.mubr.f32.gmra.mxu0 %v1703
        %v2244 = vpop.f32.mrf.mxu0
        %v2245 = vadd.f32 %v1491, %v2244
        %v2246 = vpop.f32.mrf.mxu0
        %2247 = vmatprep.mubr.f32.mxu0 0.0
        %2248 = vmatmul.mubr.f32.gmra.mxu0 %v1706
        %v2249 = vpop.f32.mrf.mxu0
        %v2250 = vadd.f32 %v1491, %v2249
        %v2251 = vpop.f32.mrf.mxu0
        %2252 = vmatprep.mubr.f32.mxu0 0.0
        %2253 = vmatmul.mubr.f32.gmra.mxu0 %v1709
        %v2254 = vpop.f32.mrf.mxu0
        %v2255 = vadd.f32 %v1491, %v2254
        %v2256 = vpop.f32.mrf.mxu0
        %2257 = vmatprep.mubr.f32.mxu0 0.0
        %2258 = vmatmul.mubr.f32.gmra.mxu0 %v1712
        %v2259 = vpop.f32.mrf.mxu0
        %v2260 = vadd.f32 %v1491, %v2259
        %v2261 = vpop.f32.mrf.mxu0
        %2262 = vmatprep.mubr.f32.mxu0 0.0
        %2263 = vmatmul.mubr.f32.gmra.mxu0 %v1715
        %v2264 = vpop.f32.mrf.mxu0
        %v2265 = vadd.f32 %v1491, %v2264
        %v2266 = vpop.f32.mrf.mxu0
        %2267 = vmatprep.mubr.f32.mxu0 0.0
        %2268 = vmatmul.mubr.f32.gmra.mxu0 %v1718
        %v2269 = vpop.f32.mrf.mxu0
        %v2270 = vadd.f32 %v1491, %v2269
        %v2271 = vpop.f32.mrf.mxu0
        %2272 = vmatprep.mubr.f32.mxu0 0.0
        %2273 = vmatmul.mubr.f32.gmra.mxu0 %v1721
        %v2274 = vpop.f32.mrf.mxu0
        %v2275 = vadd.f32 %v1491, %v2274
        %v2276 = vpop.f32.mrf.mxu0
        %2277 = vmatprep.mubr.f32.mxu0 0.0
        %2278 = vmatmul.mubr.f32.gmra.mxu0 %v1724
        %v2279 = vpop.f32.mrf.mxu0
        %v2280 = vadd.f32 %v1491, %v2279
        %v2281 = vpop.f32.mrf.mxu0
        %2282 = vmatprep.mubr.f32.mxu0 0.0
        %2283 = vmatmul.mubr.f32.gmra.mxu0 %v1727
        %v2284 = vpop.f32.mrf.mxu0
        %v2285 = vadd.f32 %v1491, %v2284
        %v2286 = vpop.f32.mrf.mxu0
        %2287 = vmatprep.mubr.f32.mxu0 0.0
        %2288 = vmatmul.mubr.f32.gmra.mxu0 %v1730
        %v2289 = vpop.f32.mrf.mxu0
        %v2290 = vadd.f32 %v1491, %v2289
        %v2291 = vpop.f32.mrf.mxu0
        %2292 = vmatprep.mubr.f32.mxu0 0.0
        %2293 = vmatmul.mubr.f32.gmra.mxu0 %v1733
        %v2294 = vpop.f32.mrf.mxu0
        %v2295 = vadd.f32 %v1491, %v2294
        %v2296 = vpop.f32.mrf.mxu0
        %2297 = vmatprep.mubr.f32.mxu0 0.0
        %2298 = vmatmul.mubr.f32.gmra.mxu0 %v1736
        %v2299 = vpop.f32.mrf.mxu0
        %v2300 = vadd.f32 %v1491, %v2299
        %v2301 = vpop.f32.mrf.mxu0
        %2302 = vmatprep.mubr.f32.mxu0 0.0
        %2303 = vmatmul.mubr.f32.gmra.mxu0 %v1739
        %v2304 = vpop.f32.mrf.mxu0
        %v2305 = vadd.f32 %v1491, %v2304
        %v2306 = vpop.f32.mrf.mxu0
        %2307 = vmatprep.mubr.f32.mxu0 0.0
        %2308 = vmatmul.mubr.f32.gmra.mxu0 %v1742
        %v2309 = vpop.f32.mrf.mxu0
        %v2310 = vadd.f32 %v1491, %v2309
        %v2311 = vpop.f32.mrf.mxu0
        %2312 = vmatprep.mubr.f32.mxu0 0.0
        %2313 = vmatmul.mubr.f32.gmra.mxu0 %v1745
        %v2314 = vpop.f32.mrf.mxu0
        %v2315 = vadd.f32 %v1491, %v2314
        %v2316 = vpop.f32.mrf.mxu0
        %2317 = vmatprep.mubr.f32.mxu0 0.0
        %2318 = vmatmul.mubr.f32.gmra.mxu0 %v1748
        %v2319 = vpop.f32.mrf.mxu0
        %v2320 = vadd.f32 %v1491, %v2319
        %v2321 = vpop.f32.mrf.mxu0
        %2322 = vmatprep.mubr.f32.mxu0 0.0
        %2323 = vmatmul.mubr.f32.gmra.mxu0 %v1751
        %v2324 = vpop.f32.mrf.mxu0
        %v2325 = vadd.f32 %v1491, %v2324
        %v2326 = vpop.f32.mrf.mxu0
        %2327 = vmatprep.mubr.f32.mxu0 0.0
        %2328 = vmatmul.mubr.f32.gmra.mxu0 %v1754
        %v2329 = vpop.f32.mrf.mxu0
        %v2330 = vadd.f32 %v1491, %v2329
        %v2331 = vpop.f32.mrf.mxu0
        %2332 = vmatprep.mubr.f32.mxu0 0.0
        %2333 = vmatmul.mubr.f32.gmra.mxu0 %v1757
        %v2334 = vpop.f32.mrf.mxu0
        %v2335 = vadd.f32 %v1491, %v2334
        %v2336 = vpop.f32.mrf.mxu0
        %2337 = vmatprep.mubr.f32.mxu0 0.0
        %2338 = vmatmul.mubr.f32.gmra.mxu0 %v1760
        %v2339 = vpop.f32.mrf.mxu0
        %v2340 = vadd.f32 %v1491, %v2339
        %v2341 = vpop.f32.mrf.mxu0
        %2342 = vmatprep.mubr.f32.mxu0 0.0
        %2343 = vmatmul.mubr.f32.gmra.mxu0 %v1763
        %v2344 = vpop.f32.mrf.mxu0
        %v2345 = vadd.f32 %v1491, %v2344
        %v2346 = vpop.f32.mrf.mxu0
        %2347 = vmatprep.mubr.f32.mxu0 0.0
        %2348 = vmatmul.mubr.f32.gmra.mxu0 %v1766
        %v2349 = vpop.f32.mrf.mxu0
        %v2350 = vadd.f32 %v1491, %v2349
        %v2351 = vpop.f32.mrf.mxu0
        %2352 = vmatprep.mubr.f32.mxu0 0.0
        %2353 = vmatmul.mubr.f32.gmra.mxu0 %v1769
        %v2354 = vpop.f32.mrf.mxu0
        %v2355 = vadd.f32 %v1491, %v2354
        %v2356 = vpop.f32.mrf.mxu0
        %2357 = vmatprep.mubr.f32.mxu0 0.0
        %2358 = vmatmul.mubr.f32.gmra.mxu0 %v1772
        %v2359 = vpop.f32.mrf.mxu0
        %v2360 = vadd.f32 %v1491, %v2359
        %v2361 = vpop.f32.mrf.mxu0
        %2362 = vmatprep.mubr.f32.mxu0 0.0
        %2363 = vmatmul.mubr.f32.gmra.mxu0 %v1775
        %v2364 = vpop.f32.mrf.mxu0
        %v2365 = vadd.f32 %v1491, %v2364
        %v2366 = vpop.f32.mrf.mxu0
        %2367 = vmatprep.mubr.f32.mxu0 0.0
        %2368 = vmatmul.mubr.f32.gmra.mxu0 %v1778
        %v2369 = vpop.f32.mrf.mxu0
        %v2370 = vadd.f32 %v1491, %v2369
        %v2371 = vpop.f32.mrf.mxu0
        %2372 = vmatprep.mubr.f32.mxu0 0.0
        %2373 = vmatmul.mubr.f32.gmra.mxu0 %v1781
        %v2374 = vpop.f32.mrf.mxu0
        %v2375 = vadd.f32 %v1491, %v2374
        %v2376 = vpop.f32.mrf.mxu0
        %2377 = vmatprep.mubr.f32.mxu0 0.0
        %2378 = vmatmul.mubr.f32.gmra.mxu0 %v1784
        %v2379 = vpop.f32.mrf.mxu0
        %v2380 = vadd.f32 %v1491, %v2379
        %v2381 = vpop.f32.mrf.mxu0
        %2382 = vmatprep.mubr.f32.mxu0 0.0
        %2383 = vmatmul.mubr.f32.gmra.mxu0 %v1787
        %v2384 = vpop.f32.mrf.mxu0
        %v2385 = vadd.f32 %v1491, %v2384
        %v2386 = vpop.f32.mrf.mxu0
        %2387 = vmatprep.mubr.f32.mxu0 0.0
        %2388 = vmatmul.mubr.f32.gmra.mxu0 %v1790
        %v2389 = vpop.f32.mrf.mxu0
        %v2390 = vadd.f32 %v1491, %v2389
        %v2391 = vpop.f32.mrf.mxu0
        %2392 = vmatprep.mubr.f32.mxu0 0.0
        %2393 = vmatmul.mubr.f32.gmra.mxu0 %v1793
        %v2394 = vpop.f32.mrf.mxu0
        %v2395 = vadd.f32 %v1491, %v2394
        %v2396 = vpop.f32.mrf.mxu0
        %2397 = vmatprep.mubr.f32.mxu0 0.0
        %2398 = vmatmul.mubr.f32.gmra.mxu0 %v1796
        %v2399 = vpop.f32.mrf.mxu0
        %v2400 = vadd.f32 %v1491, %v2399
        %v2401 = vpop.f32.mrf.mxu0
        %2402 = vmatprep.mubr.f32.mxu0 0.0
        %2403 = vmatmul.mubr.f32.gmra.mxu0 %v1799
        %v2404 = vpop.f32.mrf.mxu0
        %v2405 = vadd.f32 %v1491, %v2404
        %v2406 = vpop.f32.mrf.mxu0
        %2407 = vmatprep.mubr.f32.mxu0 0.0
        %2408 = vmatmul.mubr.f32.gmra.mxu0 %v1802
        %v2409 = vpop.f32.mrf.mxu0
        %v2410 = vadd.f32 %v1491, %v2409
        %v2411 = vpop.f32.mrf.mxu0
        %2412 = vmatprep.mubr.f32.mxu0 0.0
        %2413 = vmatmul.mubr.f32.gmra.mxu0 %v1805
        %v2414 = vpop.f32.mrf.mxu0
        %v2415 = vadd.f32 %v1491, %v2414
        %v2416 = vpop.f32.mrf.mxu0
        %2417 = vmatprep.mubr.f32.mxu0 0.0
        %2418 = vmatmul.mubr.f32.gmra.mxu0 %v1808
        %v2419 = vpop.f32.mrf.mxu0
        %v2420 = vadd.f32 %v1491, %v2419
        %v2421 = vpop.f32.mrf.mxu0
        %2422 = vmatprep.mubr.f32.mxu0 0.0
        %2423 = vmatmul.mubr.f32.gmra.mxu0 %v1811
        %v2424 = vpop.f32.mrf.mxu0
        %v2425 = vadd.f32 %v1491, %v2424
        %v2426 = vpop.f32.mrf.mxu0
        %2427 = vmatprep.mubr.f32.mxu0 0.0
        %2428 = vmatmul.mubr.f32.gmra.mxu0 %v1814
        %v2429 = vpop.f32.mrf.mxu0
        %v2430 = vadd.f32 %v1491, %v2429
        %v2431 = vpop.f32.mrf.mxu0
        %2432 = vmatprep.mubr.f32.mxu0 0.0
        %2433 = vmatmul.mubr.f32.gmra.mxu0 %v1817
        %v2434 = vpop.f32.mrf.mxu0
        %v2435 = vadd.f32 %v1491, %v2434
        %v2436 = vpop.f32.mrf.mxu0
        %2437 = vmatprep.mubr.f32.mxu0 0.0
        %2438 = vmatmul.mubr.f32.gmra.mxu0 %v1820
        %v2439 = vpop.f32.mrf.mxu0
        %v2440 = vadd.f32 %v1491, %v2439
        %v2441 = vpop.f32.mrf.mxu0
        %2442 = vmatprep.mubr.f32.mxu0 0.0
        %2443 = vmatmul.mubr.f32.gmra.mxu0 %v1823
        %v2444 = vpop.f32.mrf.mxu0
        %v2445 = vadd.f32 %v1491, %v2444
        %v2446 = vpop.f32.mrf.mxu0
        %2447 = vmatprep.mubr.f32.mxu0 0.0
        %2448 = vmatmul.mubr.f32.gmra.mxu0 %v1826
        %v2449 = vpop.f32.mrf.mxu0
        %v2450 = vadd.f32 %v1491, %v2449
        %v2451 = vpop.f32.mrf.mxu0
        %2452 = vdwg.mxu0
        %v2453 = vmax.f32 %v1895, 0.0
        %v2454 = vmax.f32 %v1900, 0.0
        %v2455 = vmax.f32 %v1905, 0.0
        %v2456 = vmax.f32 %v1910, 0.0
        %v2457 = vmax.f32 %v1915, 0.0
        %v2458 = vmax.f32 %v1920, 0.0
        %v2459 = vmax.f32 %v1925, 0.0
        %v2460 = vmax.f32 %v1930, 0.0
        %v2461 = vmax.f32 %v1935, 0.0
        %v2462 = vmax.f32 %v1940, 0.0
        %v2463 = vmax.f32 %v1945, 0.0
        %v2464 = vmax.f32 %v1950, 0.0
        %v2465 = vmax.f32 %v1955, 0.0
        %v2466 = vmax.f32 %v1960, 0.0
        %v2467 = vmax.f32 %v1965, 0.0
        %v2468 = vmax.f32 %v1970, 0.0
        %v2469 = vmax.f32 %v1975, 0.0
        %v2470 = vmax.f32 %v1980, 0.0
        %v2471 = vmax.f32 %v1985, 0.0
        %v2472 = vmax.f32 %v1990, 0.0
        %v2473 = vmax.f32 %v1995, 0.0
        %v2474 = vmax.f32 %v2000, 0.0
        %v2475 = vmax.f32 %v2005, 0.0
        %v2476 = vmax.f32 %v2010, 0.0
        %v2477 = vmax.f32 %v2015, 0.0
        %v2478 = vmax.f32 %v2020, 0.0
        %v2479 = vmax.f32 %v2025, 0.0
        %v2480 = vmax.f32 %v2030, 0.0
        %v2481 = vmax.f32 %v2035, 0.0
        %v2482 = vmax.f32 %v2040, 0.0
        %v2483 = vmax.f32 %v2045, 0.0
        %v2484 = vmax.f32 %v2050, 0.0
        %v2485 = vmax.f32 %v2055, 0.0
        %v2486 = vmax.f32 %v2060, 0.0
        %v2487 = vmax.f32 %v2065, 0.0
        %v2488 = vmax.f32 %v2070, 0.0
        %v2489 = vmax.f32 %v2075, 0.0
        %v2490 = vmax.f32 %v2080, 0.0
        %v2491 = vmax.f32 %v2085, 0.0
        %v2492 = vmax.f32 %v2090, 0.0
        %v2493 = vmax.f32 %v2095, 0.0
        %v2494 = vmax.f32 %v2100, 0.0
        %v2495 = vmax.f32 %v2105, 0.0
        %v2496 = vmax.f32 %v2110, 0.0
        %v2497 = vmax.f32 %v2115, 0.0
        %v2498 = vmax.f32 %v2120, 0.0
        %v2499 = vmax.f32 %v2125, 0.0
        %v2500 = vmax.f32 %v2130, 0.0
        %v2501 = vmax.f32 %v2135, 0.0
        %v2502 = vmax.f32 %v2140, 0.0
        %v2503 = vmax.f32 %v2145, 0.0
        %v2504 = vmax.f32 %v2150, 0.0
        %v2505 = vmax.f32 %v2155, 0.0
        %v2506 = vmax.f32 %v2160, 0.0
        %v2507 = vmax.f32 %v2165, 0.0
        %v2508 = vmax.f32 %v2170, 0.0
        %v2509 = vmax.f32 %v2175, 0.0
        %v2510 = vmax.f32 %v2180, 0.0
        %v2511 = vmax.f32 %v2185, 0.0
        %v2512 = vmax.f32 %v2190, 0.0
        %v2513 = vmax.f32 %v2195, 0.0
        %v2514 = vmax.f32 %v2200, 0.0
        %v2515 = vmax.f32 %v2205, 0.0
        %v2516 = vmax.f32 %v2210, 0.0
        %v2517 = vmax.f32 %v2215, 0.0
        %v2518 = vmax.f32 %v2220, 0.0
        %v2519 = vmax.f32 %v2225, 0.0
        %v2520 = vmax.f32 %v2230, 0.0
        %v2521 = vmax.f32 %v2235, 0.0
        %v2522 = vmax.f32 %v2240, 0.0
        %v2523 = vmax.f32 %v2245, 0.0
        %v2524 = vmax.f32 %v2250, 0.0
        %v2525 = vmax.f32 %v2255, 0.0
        %v2526 = vmax.f32 %v2260, 0.0
        %v2527 = vmax.f32 %v2265, 0.0
        %v2528 = vmax.f32 %v2270, 0.0
        %v2529 = vmax.f32 %v2275, 0.0
        %v2530 = vmax.f32 %v2280, 0.0
        %v2531 = vmax.f32 %v2285, 0.0
        %v2532 = vmax.f32 %v2290, 0.0
        %v2533 = vmax.f32 %v2295, 0.0
        %v2534 = vmax.f32 %v2300, 0.0
        %v2535 = vmax.f32 %v2305, 0.0
        %v2536 = vmax.f32 %v2310, 0.0
        %v2537 = vmax.f32 %v2315, 0.0
        %v2538 = vmax.f32 %v2320, 0.0
        %v2539 = vmax.f32 %v2325, 0.0
        %v2540 = vmax.f32 %v2330, 0.0
        %v2541 = vmax.f32 %v2335, 0.0
        %v2542 = vmax.f32 %v2340, 0.0
        %v2543 = vmax.f32 %v2345, 0.0
        %v2544 = vmax.f32 %v2350, 0.0
        %v2545 = vmax.f32 %v2355, 0.0
        %v2546 = vmax.f32 %v2360, 0.0
        %v2547 = vmax.f32 %v2365, 0.0
        %v2548 = vmax.f32 %v2370, 0.0
        %v2549 = vmax.f32 %v2375, 0.0
        %v2550 = vmax.f32 %v2380, 0.0
        %v2551 = vmax.f32 %v2385, 0.0
        %v2552 = vmax.f32 %v2390, 0.0
        %v2553 = vmax.f32 %v2395, 0.0
        %v2554 = vmax.f32 %v2400, 0.0
        %v2555 = vmax.f32 %v2405, 0.0
        %v2556 = vmax.f32 %v2410, 0.0
        %v2557 = vmax.f32 %v2415, 0.0
        %v2558 = vmax.f32 %v2420, 0.0
        %v2559 = vmax.f32 %v2425, 0.0
        %v2560 = vmax.f32 %v2430, 0.0
        %v2561 = vmax.f32 %v2435, 0.0
        %v2562 = vmax.f32 %v2440, 0.0
        %v2563 = vmax.f32 %v2445, 0.0
        %v2564 = vmax.f32 %v2450, 0.0
        %v2565 = vlaneseq
        %v2566 = vshrl.u32 %v2565, 7
        %v2567 = vsub.s32 3, %v2566
        %v2568 = vrot.slane %v307, %v2567
        %v2570 = vsel %vm719, %v2453, 0
        %v2573 = vsel %vm719, %v2454, 0
        %v2576 = vsel %vm719, %v2455, 0
        %v2579 = vsel %vm719, %v2456, 0
        %v2582 = vsel %vm719, %v2457, 0
        %v2585 = vsel %vm719, %v2458, 0
        %v2588 = vsel %vm719, %v2459, 0
        %v2591 = vsel %vm719, %v2460, 0
        %v2594 = vsel %vm719, %v2461, 0
        %v2597 = vsel %vm719, %v2462, 0
        %v2600 = vsel %vm719, %v2463, 0
        %v2603 = vsel %vm719, %v2464, 0
        %v2606 = vsel %vm719, %v2465, 0
        %v2609 = vsel %vm719, %v2466, 0
        %v2612 = vsel %vm719, %v2467, 0
        %v2615 = vsel %vm719, %v2468, 0
        %v2618 = vsel %vm719, %v2469, 0
        %v2621 = vsel %vm719, %v2470, 0
        %v2624 = vsel %vm719, %v2471, 0
        %v2627 = vsel %vm719, %v2472, 0
        %v2630 = vsel %vm719, %v2473, 0
        %v2633 = vsel %vm719, %v2474, 0
        %v2636 = vsel %vm719, %v2475, 0
        %v2639 = vsel %vm719, %v2476, 0
        %v2642 = vsel %vm719, %v2477, 0
        %v2645 = vsel %vm719, %v2478, 0
        %v2648 = vsel %vm719, %v2479, 0
        %v2651 = vsel %vm719, %v2480, 0
        %v2654 = vsel %vm719, %v2481, 0
        %v2657 = vsel %vm719, %v2482, 0
        %v2660 = vsel %vm719, %v2483, 0
        %v2663 = vsel %vm719, %v2484, 0
        %v2666 = vsel %vm719, %v2485, 0
        %v2669 = vsel %vm719, %v2486, 0
        %v2672 = vsel %vm719, %v2487, 0
        %v2675 = vsel %vm719, %v2488, 0
        %v2678 = vsel %vm719, %v2489, 0
        %v2681 = vsel %vm719, %v2490, 0
        %v2684 = vsel %vm719, %v2491, 0
        %v2687 = vsel %vm719, %v2492, 0
        %v2690 = vsel %vm719, %v2493, 0
        %v2693 = vsel %vm719, %v2494, 0
        %v2696 = vsel %vm719, %v2495, 0
        %v2699 = vsel %vm719, %v2496, 0
        %v2702 = vsel %vm719, %v2497, 0
        %v2705 = vsel %vm719, %v2498, 0
        %v2708 = vsel %vm719, %v2499, 0
        %v2711 = vsel %vm719, %v2500, 0
        %v2714 = vsel %vm719, %v2501, 0
        %v2717 = vsel %vm719, %v2502, 0
        %v2720 = vsel %vm719, %v2503, 0
        %v2723 = vsel %vm719, %v2504, 0
        %v2726 = vsel %vm719, %v2505, 0
        %v2729 = vsel %vm719, %v2506, 0
        %v2732 = vsel %vm719, %v2507, 0
        %v2735 = vsel %vm719, %v2508, 0
        %v2738 = vsel %vm719, %v2509, 0
        %v2741 = vsel %vm719, %v2510, 0
        %v2744 = vsel %vm719, %v2511, 0
        %v2747 = vsel %vm719, %v2512, 0
        %v2750 = vsel %vm719, %v2513, 0
        %v2753 = vsel %vm719, %v2514, 0
        %v2756 = vsel %vm719, %v2515, 0
        %v2759 = vsel %vm719, %v2516, 0
        %v2762 = vsel %vm719, %v2517, 0
        %v2765 = vsel %vm719, %v2518, 0
        %v2768 = vsel %vm719, %v2519, 0
        %v2771 = vsel %vm719, %v2520, 0
        %v2774 = vsel %vm719, %v2521, 0
        %v2777 = vsel %vm719, %v2522, 0
        %v2780 = vsel %vm719, %v2523, 0
        %v2783 = vsel %vm719, %v2524, 0
        %v2786 = vsel %vm719, %v2525, 0
        %v2789 = vsel %vm719, %v2526, 0
        %v2792 = vsel %vm719, %v2527, 0
        %v2795 = vsel %vm719, %v2528, 0
        %v2798 = vsel %vm719, %v2529, 0
        %v2801 = vsel %vm719, %v2530, 0
        %v2804 = vsel %vm719, %v2531, 0
        %v2807 = vsel %vm719, %v2532, 0
        %v2810 = vsel %vm719, %v2533, 0
        %v2813 = vsel %vm719, %v2534, 0
        %v2816 = vsel %vm719, %v2535, 0
        %v2819 = vsel %vm719, %v2536, 0
        %v2822 = vsel %vm719, %v2537, 0
        %v2825 = vsel %vm719, %v2538, 0
        %v2828 = vsel %vm719, %v2539, 0
        %v2831 = vsel %vm719, %v2540, 0
        %v2834 = vsel %vm719, %v2541, 0
        %v2837 = vsel %vm719, %v2542, 0
        %v2840 = vsel %vm719, %v2543, 0
        %v2843 = vsel %vm719, %v2544, 0
        %v2846 = vsel %vm719, %v2545, 0
        %v2849 = vsel %vm719, %v2546, 0
        %v2852 = vsel %vm719, %v2547, 0
        %v2855 = vsel %vm719, %v2548, 0
        %v2858 = vsel %vm719, %v2549, 0
        %v2861 = vsel %vm719, %v2550, 0
        %v2864 = vsel %vm719, %v2551, 0
        %v2867 = vsel %vm719, %v2552, 0
        %v2870 = vsel %vm719, %v2553, 0
        %v2873 = vsel %vm719, %v2554, 0
        %v2876 = vsel %vm719, %v2555, 0
        %v2879 = vsel %vm719, %v2556, 0
        %v2882 = vsel %vm719, %v2557, 0
        %v2885 = vsel %vm719, %v2558, 0
        %v2888 = vsel %vm719, %v2559, 0
        %v2891 = vsel %vm719, %v2560, 0
        %v2894 = vsel %vm719, %v2561, 0
        %v2897 = vsel %vm719, %v2562, 0
        %v2900 = vsel %vm719, %v2563, 0
        %v2903 = vsel %vm719, %v2564, 0
        %2905 = vmatprep.subr.mxu0 0.0
        %2906 = vmatpush1.msra.mxu0 0.0
        %2907 = vmatprep.subr.mxu0 0.0
        %2908 = vmatpush1.msra.mxu0 0.0
        %2909 = vmatprep.subr.mxu0 0.0
        %2910 = vmatpush1.msra.mxu0 0.0
        %2911 = vmatprep.subr.mxu0 0.0
        %2912 = vmatpush1.msra.mxu0 0.0
        %2913 = vmatprep.subr.mxu0 0.0
        %2914 = vmatpush1.msra.mxu0 0.0
        %2915 = vmatprep.subr.mxu0 0.0
        %2916 = vmatpush1.msra.mxu0 0.0
        %2917 = vmatprep.subr.mxu0 0.0
        %2918 = vmatpush1.msra.mxu0 0.0
        %2919 = vmatprep.subr.mxu0 0.0
        %2920 = vmatpush1.msra.mxu0 0.0
        %2921 = vmatprep.subr.mxu0 0.0
        %2922 = vmatpush1.msra.mxu0 0.0
        %2923 = vmatprep.subr.mxu0 0.0
        %2924 = vmatpush1.msra.mxu0 0.0
        %2925 = vmatprep.subr.mxu0 0.0
        %2926 = vmatpush1.msra.mxu0 0.0
        %2927 = vmatprep.subr.mxu0 0.0
        %2928 = vmatpush1.msra.mxu0 0.0
        %2929 = vmatprep.subr.mxu0 0.0
        %2930 = vmatpush1.msra.mxu0 0.0
        %2931 = vmatprep.subr.mxu0 0.0
        %2932 = vmatpush1.msra.mxu0 0.0
        %2933 = vmatprep.subr.mxu0 0.0
        %2934 = vmatpush1.msra.mxu0 %v299
        %2935 = vmatprep.subr.mxu0 0.0
        %2936 = vmatpush1.msra.mxu0 %v292
        %2937 = vmatprep.subr.mxu0 0.0
        %2938 = vmatpush2.msra.mxu0 0.0
        %2939 = vmatprep.subr.mxu0 0.0
        %2940 = vmatpush2.msra.mxu0 0.0
        %2941 = vmatprep.subr.mxu0 0.0
        %2942 = vmatpush2.msra.mxu0 0.0
        %2943 = vmatprep.subr.mxu0 0.0
        %2944 = vmatpush2.msra.mxu0 0.0
        %2945 = vmatprep.subr.mxu0 0.0
        %2946 = vmatpush2.msra.mxu0 0.0
        %2947 = vmatprep.subr.mxu0 0.0
        %2948 = vmatpush2.msra.mxu0 0.0
        %2949 = vmatprep.subr.mxu0 0.0
        %2950 = vmatpush2.msra.mxu0 0.0
        %2951 = vmatprep.subr.mxu0 0.0
        %2952 = vmatpush2.msra.mxu0 0.0
        %2953 = vmatprep.subr.mxu0 0.0
        %2954 = vmatpush2.msra.mxu0 0.0
        %2955 = vmatprep.subr.mxu0 0.0
        %2956 = vmatpush2.msra.mxu0 0.0
        %2957 = vmatprep.subr.mxu0 0.0
        %2958 = vmatpush2.msra.mxu0 0.0
        %2959 = vmatprep.subr.mxu0 0.0
        %2960 = vmatpush2.msra.mxu0 0.0
        %2961 = vmatprep.subr.mxu0 0.0
        %2962 = vmatpush2.msra.mxu0 0.0
        %2963 = vmatprep.subr.mxu0 0.0
        %2964 = vmatpush2.msra.mxu0 0.0
        %2965 = vmatprep.subr.mxu0 0.0
        %2966 = vmatpush2.msra.mxu0 0.0
        %2967 = vmatprep.subr.mxu0 0.0
        %2968 = vmatpush2.msra.mxu0 0.0
        %2969 = vmatprep.mubr.f32.mxu0 0.0
        %2970 = vmatmul.mubr.f32.gmra.mxu0 %v2570
        %v2971 = vpop.f32.mrf.mxu0
        %v2972 = vadd.f32 %v2568, %v2971
        %v2973 = vpop.f32.mrf.mxu0
        %2974 = vmatprep.mubr.f32.mxu0 0.0
        %2975 = vmatmul.mubr.f32.gmra.mxu0 %v2573
        %v2976 = vpop.f32.mrf.mxu0
        %v2977 = vadd.f32 %v2568, %v2976
        %v2978 = vpop.f32.mrf.mxu0
        %2979 = vmatprep.mubr.f32.mxu0 0.0
        %2980 = vmatmul.mubr.f32.gmra.mxu0 %v2576
        %v2981 = vpop.f32.mrf.mxu0
        %v2982 = vadd.f32 %v2568, %v2981
        %v2983 = vpop.f32.mrf.mxu0
        %2984 = vmatprep.mubr.f32.mxu0 0.0
        %2985 = vmatmul.mubr.f32.gmra.mxu0 %v2579
        %v2986 = vpop.f32.mrf.mxu0
        %v2987 = vadd.f32 %v2568, %v2986
        %v2988 = vpop.f32.mrf.mxu0
        %2989 = vmatprep.mubr.f32.mxu0 0.0
        %2990 = vmatmul.mubr.f32.gmra.mxu0 %v2582
        %v2991 = vpop.f32.mrf.mxu0
        %v2992 = vadd.f32 %v2568, %v2991
        %v2993 = vpop.f32.mrf.mxu0
        %2994 = vmatprep.mubr.f32.mxu0 0.0
        %2995 = vmatmul.mubr.f32.gmra.mxu0 %v2585
        %v2996 = vpop.f32.mrf.mxu0
        %v2997 = vadd.f32 %v2568, %v2996
        %v2998 = vpop.f32.mrf.mxu0
        %2999 = vmatprep.mubr.f32.mxu0 0.0
        %3000 = vmatmul.mubr.f32.gmra.mxu0 %v2588
        %v3001 = vpop.f32.mrf.mxu0
        %v3002 = vadd.f32 %v2568, %v3001
        %v3003 = vpop.f32.mrf.mxu0
        %3004 = vmatprep.mubr.f32.mxu0 0.0
        %3005 = vmatmul.mubr.f32.gmra.mxu0 %v2591
        %v3006 = vpop.f32.mrf.mxu0
        %v3007 = vadd.f32 %v2568, %v3006
        %v3008 = vpop.f32.mrf.mxu0
        %3009 = vmatprep.mubr.f32.mxu0 0.0
        %3010 = vmatmul.mubr.f32.gmra.mxu0 %v2594
        %v3011 = vpop.f32.mrf.mxu0
        %v3012 = vadd.f32 %v2568, %v3011
        %v3013 = vpop.f32.mrf.mxu0
        %3014 = vmatprep.mubr.f32.mxu0 0.0
        %3015 = vmatmul.mubr.f32.gmra.mxu0 %v2597
        %v3016 = vpop.f32.mrf.mxu0
        %v3017 = vadd.f32 %v2568, %v3016
        %v3018 = vpop.f32.mrf.mxu0
        %3019 = vmatprep.mubr.f32.mxu0 0.0
        %3020 = vmatmul.mubr.f32.gmra.mxu0 %v2600
        %v3021 = vpop.f32.mrf.mxu0
        %v3022 = vadd.f32 %v2568, %v3021
        %v3023 = vpop.f32.mrf.mxu0
        %3024 = vmatprep.mubr.f32.mxu0 0.0
        %3025 = vmatmul.mubr.f32.gmra.mxu0 %v2603
        %v3026 = vpop.f32.mrf.mxu0
        %v3027 = vadd.f32 %v2568, %v3026
        %v3028 = vpop.f32.mrf.mxu0
        %3029 = vmatprep.mubr.f32.mxu0 0.0
        %3030 = vmatmul.mubr.f32.gmra.mxu0 %v2606
        %v3031 = vpop.f32.mrf.mxu0
        %v3032 = vadd.f32 %v2568, %v3031
        %v3033 = vpop.f32.mrf.mxu0
        %3034 = vmatprep.mubr.f32.mxu0 0.0
        %3035 = vmatmul.mubr.f32.gmra.mxu0 %v2609
        %v3036 = vpop.f32.mrf.mxu0
        %v3037 = vadd.f32 %v2568, %v3036
        %v3038 = vpop.f32.mrf.mxu0
        %3039 = vmatprep.mubr.f32.mxu0 0.0
        %3040 = vmatmul.mubr.f32.gmra.mxu0 %v2612
        %v3041 = vpop.f32.mrf.mxu0
        %v3042 = vadd.f32 %v2568, %v3041
        %v3043 = vpop.f32.mrf.mxu0
        %3044 = vmatprep.mubr.f32.mxu0 0.0
        %3045 = vmatmul.mubr.f32.gmra.mxu0 %v2615
        %v3046 = vpop.f32.mrf.mxu0
        %v3047 = vadd.f32 %v2568, %v3046
        %v3048 = vpop.f32.mrf.mxu0
        %3049 = vmatprep.mubr.f32.mxu0 0.0
        %3050 = vmatmul.mubr.f32.gmra.mxu0 %v2618
        %v3051 = vpop.f32.mrf.mxu0
        %v3052 = vadd.f32 %v2568, %v3051
        %v3053 = vpop.f32.mrf.mxu0
        %3054 = vmatprep.mubr.f32.mxu0 0.0
        %3055 = vmatmul.mubr.f32.gmra.mxu0 %v2621
        %v3056 = vpop.f32.mrf.mxu0
        %v3057 = vadd.f32 %v2568, %v3056
        %v3058 = vpop.f32.mrf.mxu0
        %3059 = vmatprep.mubr.f32.mxu0 0.0
        %3060 = vmatmul.mubr.f32.gmra.mxu0 %v2624
        %v3061 = vpop.f32.mrf.mxu0
        %v3062 = vadd.f32 %v2568, %v3061
        %v3063 = vpop.f32.mrf.mxu0
        %3064 = vmatprep.mubr.f32.mxu0 0.0
        %3065 = vmatmul.mubr.f32.gmra.mxu0 %v2627
        %v3066 = vpop.f32.mrf.mxu0
        %v3067 = vadd.f32 %v2568, %v3066
        %v3068 = vpop.f32.mrf.mxu0
        %3069 = vmatprep.mubr.f32.mxu0 0.0
        %3070 = vmatmul.mubr.f32.gmra.mxu0 %v2630
        %v3071 = vpop.f32.mrf.mxu0
        %v3072 = vadd.f32 %v2568, %v3071
        %v3073 = vpop.f32.mrf.mxu0
        %3074 = vmatprep.mubr.f32.mxu0 0.0
        %3075 = vmatmul.mubr.f32.gmra.mxu0 %v2633
        %v3076 = vpop.f32.mrf.mxu0
        %v3077 = vadd.f32 %v2568, %v3076
        %v3078 = vpop.f32.mrf.mxu0
        %3079 = vmatprep.mubr.f32.mxu0 0.0
        %3080 = vmatmul.mubr.f32.gmra.mxu0 %v2636
        %v3081 = vpop.f32.mrf.mxu0
        %v3082 = vadd.f32 %v2568, %v3081
        %v3083 = vpop.f32.mrf.mxu0
        %3084 = vmatprep.mubr.f32.mxu0 0.0
        %3085 = vmatmul.mubr.f32.gmra.mxu0 %v2639
        %v3086 = vpop.f32.mrf.mxu0
        %v3087 = vadd.f32 %v2568, %v3086
        %v3088 = vpop.f32.mrf.mxu0
        %3089 = vmatprep.mubr.f32.mxu0 0.0
        %3090 = vmatmul.mubr.f32.gmra.mxu0 %v2642
        %v3091 = vpop.f32.mrf.mxu0
        %v3092 = vadd.f32 %v2568, %v3091
        %v3093 = vpop.f32.mrf.mxu0
        %3094 = vmatprep.mubr.f32.mxu0 0.0
        %3095 = vmatmul.mubr.f32.gmra.mxu0 %v2645
        %v3096 = vpop.f32.mrf.mxu0
        %v3097 = vadd.f32 %v2568, %v3096
        %v3098 = vpop.f32.mrf.mxu0
        %3099 = vmatprep.mubr.f32.mxu0 0.0
        %3100 = vmatmul.mubr.f32.gmra.mxu0 %v2648
        %v3101 = vpop.f32.mrf.mxu0
        %v3102 = vadd.f32 %v2568, %v3101
        %v3103 = vpop.f32.mrf.mxu0
        %3104 = vmatprep.mubr.f32.mxu0 0.0
        %3105 = vmatmul.mubr.f32.gmra.mxu0 %v2651
        %v3106 = vpop.f32.mrf.mxu0
        %v3107 = vadd.f32 %v2568, %v3106
        %v3108 = vpop.f32.mrf.mxu0
        %3109 = vmatprep.mubr.f32.mxu0 0.0
        %3110 = vmatmul.mubr.f32.gmra.mxu0 %v2654
        %v3111 = vpop.f32.mrf.mxu0
        %v3112 = vadd.f32 %v2568, %v3111
        %v3113 = vpop.f32.mrf.mxu0
        %3114 = vmatprep.mubr.f32.mxu0 0.0
        %3115 = vmatmul.mubr.f32.gmra.mxu0 %v2657
        %v3116 = vpop.f32.mrf.mxu0
        %v3117 = vadd.f32 %v2568, %v3116
        %v3118 = vpop.f32.mrf.mxu0
        %3119 = vmatprep.mubr.f32.mxu0 0.0
        %3120 = vmatmul.mubr.f32.gmra.mxu0 %v2660
        %v3121 = vpop.f32.mrf.mxu0
        %v3122 = vadd.f32 %v2568, %v3121
        %v3123 = vpop.f32.mrf.mxu0
        %3124 = vmatprep.mubr.f32.mxu0 0.0
        %3125 = vmatmul.mubr.f32.gmra.mxu0 %v2663
        %v3126 = vpop.f32.mrf.mxu0
        %v3127 = vadd.f32 %v2568, %v3126
        %v3128 = vpop.f32.mrf.mxu0
        %3129 = vmatprep.mubr.f32.mxu0 0.0
        %3130 = vmatmul.mubr.f32.gmra.mxu0 %v2666
        %v3131 = vpop.f32.mrf.mxu0
        %v3132 = vadd.f32 %v2568, %v3131
        %v3133 = vpop.f32.mrf.mxu0
        %3134 = vmatprep.mubr.f32.mxu0 0.0
        %3135 = vmatmul.mubr.f32.gmra.mxu0 %v2669
        %v3136 = vpop.f32.mrf.mxu0
        %v3137 = vadd.f32 %v2568, %v3136
        %v3138 = vpop.f32.mrf.mxu0
        %3139 = vmatprep.mubr.f32.mxu0 0.0
        %3140 = vmatmul.mubr.f32.gmra.mxu0 %v2672
        %v3141 = vpop.f32.mrf.mxu0
        %v3142 = vadd.f32 %v2568, %v3141
        %v3143 = vpop.f32.mrf.mxu0
        %3144 = vmatprep.mubr.f32.mxu0 0.0
        %3145 = vmatmul.mubr.f32.gmra.mxu0 %v2675
        %v3146 = vpop.f32.mrf.mxu0
        %v3147 = vadd.f32 %v2568, %v3146
        %v3148 = vpop.f32.mrf.mxu0
        %3149 = vmatprep.mubr.f32.mxu0 0.0
        %3150 = vmatmul.mubr.f32.gmra.mxu0 %v2678
        %v3151 = vpop.f32.mrf.mxu0
        %v3152 = vadd.f32 %v2568, %v3151
        %v3153 = vpop.f32.mrf.mxu0
        %3154 = vmatprep.mubr.f32.mxu0 0.0
        %3155 = vmatmul.mubr.f32.gmra.mxu0 %v2681
        %v3156 = vpop.f32.mrf.mxu0
        %v3157 = vadd.f32 %v2568, %v3156
        %v3158 = vpop.f32.mrf.mxu0
        %3159 = vmatprep.mubr.f32.mxu0 0.0
        %3160 = vmatmul.mubr.f32.gmra.mxu0 %v2684
        %v3161 = vpop.f32.mrf.mxu0
        %v3162 = vadd.f32 %v2568, %v3161
        %v3163 = vpop.f32.mrf.mxu0
        %3164 = vmatprep.mubr.f32.mxu0 0.0
        %3165 = vmatmul.mubr.f32.gmra.mxu0 %v2687
        %v3166 = vpop.f32.mrf.mxu0
        %v3167 = vadd.f32 %v2568, %v3166
        %v3168 = vpop.f32.mrf.mxu0
        %3169 = vmatprep.mubr.f32.mxu0 0.0
        %3170 = vmatmul.mubr.f32.gmra.mxu0 %v2690
        %v3171 = vpop.f32.mrf.mxu0
        %v3172 = vadd.f32 %v2568, %v3171
        %v3173 = vpop.f32.mrf.mxu0
        %3174 = vmatprep.mubr.f32.mxu0 0.0
        %3175 = vmatmul.mubr.f32.gmra.mxu0 %v2693
        %v3176 = vpop.f32.mrf.mxu0
        %v3177 = vadd.f32 %v2568, %v3176
        %v3178 = vpop.f32.mrf.mxu0
        %3179 = vmatprep.mubr.f32.mxu0 0.0
        %3180 = vmatmul.mubr.f32.gmra.mxu0 %v2696
        %v3181 = vpop.f32.mrf.mxu0
        %v3182 = vadd.f32 %v2568, %v3181
        %v3183 = vpop.f32.mrf.mxu0
        %3184 = vmatprep.mubr.f32.mxu0 0.0
        %3185 = vmatmul.mubr.f32.gmra.mxu0 %v2699
        %v3186 = vpop.f32.mrf.mxu0
        %v3187 = vadd.f32 %v2568, %v3186
        %v3188 = vpop.f32.mrf.mxu0
        %3189 = vmatprep.mubr.f32.mxu0 0.0
        %3190 = vmatmul.mubr.f32.gmra.mxu0 %v2702
        %v3191 = vpop.f32.mrf.mxu0
        %v3192 = vadd.f32 %v2568, %v3191
        %v3193 = vpop.f32.mrf.mxu0
        %3194 = vmatprep.mubr.f32.mxu0 0.0
        %3195 = vmatmul.mubr.f32.gmra.mxu0 %v2705
        %v3196 = vpop.f32.mrf.mxu0
        %v3197 = vadd.f32 %v2568, %v3196
        %v3198 = vpop.f32.mrf.mxu0
        %3199 = vmatprep.mubr.f32.mxu0 0.0
        %3200 = vmatmul.mubr.f32.gmra.mxu0 %v2708
        %v3201 = vpop.f32.mrf.mxu0
        %v3202 = vadd.f32 %v2568, %v3201
        %v3203 = vpop.f32.mrf.mxu0
        %3204 = vmatprep.mubr.f32.mxu0 0.0
        %3205 = vmatmul.mubr.f32.gmra.mxu0 %v2711
        %v3206 = vpop.f32.mrf.mxu0
        %v3207 = vadd.f32 %v2568, %v3206
        %v3208 = vpop.f32.mrf.mxu0
        %3209 = vmatprep.mubr.f32.mxu0 0.0
        %3210 = vmatmul.mubr.f32.gmra.mxu0 %v2714
        %v3211 = vpop.f32.mrf.mxu0
        %v3212 = vadd.f32 %v2568, %v3211
        %v3213 = vpop.f32.mrf.mxu0
        %3214 = vmatprep.mubr.f32.mxu0 0.0
        %3215 = vmatmul.mubr.f32.gmra.mxu0 %v2717
        %v3216 = vpop.f32.mrf.mxu0
        %v3217 = vadd.f32 %v2568, %v3216
        %v3218 = vpop.f32.mrf.mxu0
        %3219 = vmatprep.mubr.f32.mxu0 0.0
        %3220 = vmatmul.mubr.f32.gmra.mxu0 %v2720
        %v3221 = vpop.f32.mrf.mxu0
        %v3222 = vadd.f32 %v2568, %v3221
        %v3223 = vpop.f32.mrf.mxu0
        %3224 = vmatprep.mubr.f32.mxu0 0.0
        %3225 = vmatmul.mubr.f32.gmra.mxu0 %v2723
        %v3226 = vpop.f32.mrf.mxu0
        %v3227 = vadd.f32 %v2568, %v3226
        %v3228 = vpop.f32.mrf.mxu0
        %3229 = vmatprep.mubr.f32.mxu0 0.0
        %3230 = vmatmul.mubr.f32.gmra.mxu0 %v2726
        %v3231 = vpop.f32.mrf.mxu0
        %v3232 = vadd.f32 %v2568, %v3231
        %v3233 = vpop.f32.mrf.mxu0
        %3234 = vmatprep.mubr.f32.mxu0 0.0
        %3235 = vmatmul.mubr.f32.gmra.mxu0 %v2729
        %v3236 = vpop.f32.mrf.mxu0
        %v3237 = vadd.f32 %v2568, %v3236
        %v3238 = vpop.f32.mrf.mxu0
        %3239 = vmatprep.mubr.f32.mxu0 0.0
        %3240 = vmatmul.mubr.f32.gmra.mxu0 %v2732
        %v3241 = vpop.f32.mrf.mxu0
        %v3242 = vadd.f32 %v2568, %v3241
        %v3243 = vpop.f32.mrf.mxu0
        %3244 = vmatprep.mubr.f32.mxu0 0.0
        %3245 = vmatmul.mubr.f32.gmra.mxu0 %v2735
        %v3246 = vpop.f32.mrf.mxu0
        %v3247 = vadd.f32 %v2568, %v3246
        %v3248 = vpop.f32.mrf.mxu0
        %3249 = vmatprep.mubr.f32.mxu0 0.0
        %3250 = vmatmul.mubr.f32.gmra.mxu0 %v2738
        %v3251 = vpop.f32.mrf.mxu0
        %v3252 = vadd.f32 %v2568, %v3251
        %v3253 = vpop.f32.mrf.mxu0
        %3254 = vmatprep.mubr.f32.mxu0 0.0
        %3255 = vmatmul.mubr.f32.gmra.mxu0 %v2741
        %v3256 = vpop.f32.mrf.mxu0
        %v3257 = vadd.f32 %v2568, %v3256
        %v3258 = vpop.f32.mrf.mxu0
        %3259 = vmatprep.mubr.f32.mxu0 0.0
        %3260 = vmatmul.mubr.f32.gmra.mxu0 %v2744
        %v3261 = vpop.f32.mrf.mxu0
        %v3262 = vadd.f32 %v2568, %v3261
        %v3263 = vpop.f32.mrf.mxu0
        %3264 = vmatprep.mubr.f32.mxu0 0.0
        %3265 = vmatmul.mubr.f32.gmra.mxu0 %v2747
        %v3266 = vpop.f32.mrf.mxu0
        %v3267 = vadd.f32 %v2568, %v3266
        %v3268 = vpop.f32.mrf.mxu0
        %3269 = vmatprep.mubr.f32.mxu0 0.0
        %3270 = vmatmul.mubr.f32.gmra.mxu0 %v2750
        %v3271 = vpop.f32.mrf.mxu0
        %v3272 = vadd.f32 %v2568, %v3271
        %v3273 = vpop.f32.mrf.mxu0
        %3274 = vmatprep.mubr.f32.mxu0 0.0
        %3275 = vmatmul.mubr.f32.gmra.mxu0 %v2753
        %v3276 = vpop.f32.mrf.mxu0
        %v3277 = vadd.f32 %v2568, %v3276
        %v3278 = vpop.f32.mrf.mxu0
        %3279 = vmatprep.mubr.f32.mxu0 0.0
        %3280 = vmatmul.mubr.f32.gmra.mxu0 %v2756
        %v3281 = vpop.f32.mrf.mxu0
        %v3282 = vadd.f32 %v2568, %v3281
        %v3283 = vpop.f32.mrf.mxu0
        %3284 = vmatprep.mubr.f32.mxu0 0.0
        %3285 = vmatmul.mubr.f32.gmra.mxu0 %v2759
        %v3286 = vpop.f32.mrf.mxu0
        %v3287 = vadd.f32 %v2568, %v3286
        %v3288 = vpop.f32.mrf.mxu0
        %3289 = vmatprep.mubr.f32.mxu0 0.0
        %3290 = vmatmul.mubr.f32.gmra.mxu0 %v2762
        %v3291 = vpop.f32.mrf.mxu0
        %v3292 = vadd.f32 %v2568, %v3291
        %v3293 = vpop.f32.mrf.mxu0
        %3294 = vmatprep.mubr.f32.mxu0 0.0
        %3295 = vmatmul.mubr.f32.gmra.mxu0 %v2765
        %v3296 = vpop.f32.mrf.mxu0
        %v3297 = vadd.f32 %v2568, %v3296
        %v3298 = vpop.f32.mrf.mxu0
        %3299 = vmatprep.mubr.f32.mxu0 0.0
        %3300 = vmatmul.mubr.f32.gmra.mxu0 %v2768
        %v3301 = vpop.f32.mrf.mxu0
        %v3302 = vadd.f32 %v2568, %v3301
        %v3303 = vpop.f32.mrf.mxu0
        %3304 = vmatprep.mubr.f32.mxu0 0.0
        %3305 = vmatmul.mubr.f32.gmra.mxu0 %v2771
        %v3306 = vpop.f32.mrf.mxu0
        %v3307 = vadd.f32 %v2568, %v3306
        %v3308 = vpop.f32.mrf.mxu0
        %3309 = vmatprep.mubr.f32.mxu0 0.0
        %3310 = vmatmul.mubr.f32.gmra.mxu0 %v2774
        %v3311 = vpop.f32.mrf.mxu0
        %v3312 = vadd.f32 %v2568, %v3311
        %v3313 = vpop.f32.mrf.mxu0
        %3314 = vmatprep.mubr.f32.mxu0 0.0
        %3315 = vmatmul.mubr.f32.gmra.mxu0 %v2777
        %v3316 = vpop.f32.mrf.mxu0
        %v3317 = vadd.f32 %v2568, %v3316
        %v3318 = vpop.f32.mrf.mxu0
        %3319 = vmatprep.mubr.f32.mxu0 0.0
        %3320 = vmatmul.mubr.f32.gmra.mxu0 %v2780
        %v3321 = vpop.f32.mrf.mxu0
        %v3322 = vadd.f32 %v2568, %v3321
        %v3323 = vpop.f32.mrf.mxu0
        %3324 = vmatprep.mubr.f32.mxu0 0.0
        %3325 = vmatmul.mubr.f32.gmra.mxu0 %v2783
        %v3326 = vpop.f32.mrf.mxu0
        %v3327 = vadd.f32 %v2568, %v3326
        %v3328 = vpop.f32.mrf.mxu0
        %3329 = vmatprep.mubr.f32.mxu0 0.0
        %3330 = vmatmul.mubr.f32.gmra.mxu0 %v2786
        %v3331 = vpop.f32.mrf.mxu0
        %v3332 = vadd.f32 %v2568, %v3331
        %v3333 = vpop.f32.mrf.mxu0
        %3334 = vmatprep.mubr.f32.mxu0 0.0
        %3335 = vmatmul.mubr.f32.gmra.mxu0 %v2789
        %v3336 = vpop.f32.mrf.mxu0
        %v3337 = vadd.f32 %v2568, %v3336
        %v3338 = vpop.f32.mrf.mxu0
        %3339 = vmatprep.mubr.f32.mxu0 0.0
        %3340 = vmatmul.mubr.f32.gmra.mxu0 %v2792
        %v3341 = vpop.f32.mrf.mxu0
        %v3342 = vadd.f32 %v2568, %v3341
        %v3343 = vpop.f32.mrf.mxu0
        %3344 = vmatprep.mubr.f32.mxu0 0.0
        %3345 = vmatmul.mubr.f32.gmra.mxu0 %v2795
        %v3346 = vpop.f32.mrf.mxu0
        %v3347 = vadd.f32 %v2568, %v3346
        %v3348 = vpop.f32.mrf.mxu0
        %3349 = vmatprep.mubr.f32.mxu0 0.0
        %3350 = vmatmul.mubr.f32.gmra.mxu0 %v2798
        %v3351 = vpop.f32.mrf.mxu0
        %v3352 = vadd.f32 %v2568, %v3351
        %v3353 = vpop.f32.mrf.mxu0
        %3354 = vmatprep.mubr.f32.mxu0 0.0
        %3355 = vmatmul.mubr.f32.gmra.mxu0 %v2801
        %v3356 = vpop.f32.mrf.mxu0
        %v3357 = vadd.f32 %v2568, %v3356
        %v3358 = vpop.f32.mrf.mxu0
        %3359 = vmatprep.mubr.f32.mxu0 0.0
        %3360 = vmatmul.mubr.f32.gmra.mxu0 %v2804
        %v3361 = vpop.f32.mrf.mxu0
        %v3362 = vadd.f32 %v2568, %v3361
        %v3363 = vpop.f32.mrf.mxu0
        %3364 = vmatprep.mubr.f32.mxu0 0.0
        %3365 = vmatmul.mubr.f32.gmra.mxu0 %v2807
        %v3366 = vpop.f32.mrf.mxu0
        %v3367 = vadd.f32 %v2568, %v3366
        %v3368 = vpop.f32.mrf.mxu0
        %3369 = vmatprep.mubr.f32.mxu0 0.0
        %3370 = vmatmul.mubr.f32.gmra.mxu0 %v2810
        %v3371 = vpop.f32.mrf.mxu0
        %v3372 = vadd.f32 %v2568, %v3371
        %v3373 = vpop.f32.mrf.mxu0
        %3374 = vmatprep.mubr.f32.mxu0 0.0
        %3375 = vmatmul.mubr.f32.gmra.mxu0 %v2813
        %v3376 = vpop.f32.mrf.mxu0
        %v3377 = vadd.f32 %v2568, %v3376
        %v3378 = vpop.f32.mrf.mxu0
        %3379 = vmatprep.mubr.f32.mxu0 0.0
        %3380 = vmatmul.mubr.f32.gmra.mxu0 %v2816
        %v3381 = vpop.f32.mrf.mxu0
        %v3382 = vadd.f32 %v2568, %v3381
        %v3383 = vpop.f32.mrf.mxu0
        %3384 = vmatprep.mubr.f32.mxu0 0.0
        %3385 = vmatmul.mubr.f32.gmra.mxu0 %v2819
        %v3386 = vpop.f32.mrf.mxu0
        %v3387 = vadd.f32 %v2568, %v3386
        %v3388 = vpop.f32.mrf.mxu0
        %3389 = vmatprep.mubr.f32.mxu0 0.0
        %3390 = vmatmul.mubr.f32.gmra.mxu0 %v2822
        %v3391 = vpop.f32.mrf.mxu0
        %v3392 = vadd.f32 %v2568, %v3391
        %v3393 = vpop.f32.mrf.mxu0
        %3394 = vmatprep.mubr.f32.mxu0 0.0
        %3395 = vmatmul.mubr.f32.gmra.mxu0 %v2825
        %v3396 = vpop.f32.mrf.mxu0
        %v3397 = vadd.f32 %v2568, %v3396
        %v3398 = vpop.f32.mrf.mxu0
        %3399 = vmatprep.mubr.f32.mxu0 0.0
        %3400 = vmatmul.mubr.f32.gmra.mxu0 %v2828
        %v3401 = vpop.f32.mrf.mxu0
        %v3402 = vadd.f32 %v2568, %v3401
        %v3403 = vpop.f32.mrf.mxu0
        %3404 = vmatprep.mubr.f32.mxu0 0.0
        %3405 = vmatmul.mubr.f32.gmra.mxu0 %v2831
        %v3406 = vpop.f32.mrf.mxu0
        %v3407 = vadd.f32 %v2568, %v3406
        %v3408 = vpop.f32.mrf.mxu0
        %3409 = vmatprep.mubr.f32.mxu0 0.0
        %3410 = vmatmul.mubr.f32.gmra.mxu0 %v2834
        %v3411 = vpop.f32.mrf.mxu0
        %v3412 = vadd.f32 %v2568, %v3411
        %v3413 = vpop.f32.mrf.mxu0
        %3414 = vmatprep.mubr.f32.mxu0 0.0
        %3415 = vmatmul.mubr.f32.gmra.mxu0 %v2837
        %v3416 = vpop.f32.mrf.mxu0
        %v3417 = vadd.f32 %v2568, %v3416
        %v3418 = vpop.f32.mrf.mxu0
        %3419 = vmatprep.mubr.f32.mxu0 0.0
        %3420 = vmatmul.mubr.f32.gmra.mxu0 %v2840
        %v3421 = vpop.f32.mrf.mxu0
        %v3422 = vadd.f32 %v2568, %v3421
        %v3423 = vpop.f32.mrf.mxu0
        %3424 = vmatprep.mubr.f32.mxu0 0.0
        %3425 = vmatmul.mubr.f32.gmra.mxu0 %v2843
        %v3426 = vpop.f32.mrf.mxu0
        %v3427 = vadd.f32 %v2568, %v3426
        %v3428 = vpop.f32.mrf.mxu0
        %3429 = vmatprep.mubr.f32.mxu0 0.0
        %3430 = vmatmul.mubr.f32.gmra.mxu0 %v2846
        %v3431 = vpop.f32.mrf.mxu0
        %v3432 = vadd.f32 %v2568, %v3431
        %v3433 = vpop.f32.mrf.mxu0
        %3434 = vmatprep.mubr.f32.mxu0 0.0
        %3435 = vmatmul.mubr.f32.gmra.mxu0 %v2849
        %v3436 = vpop.f32.mrf.mxu0
        %v3437 = vadd.f32 %v2568, %v3436
        %v3438 = vpop.f32.mrf.mxu0
        %3439 = vmatprep.mubr.f32.mxu0 0.0
        %3440 = vmatmul.mubr.f32.gmra.mxu0 %v2852
        %v3441 = vpop.f32.mrf.mxu0
        %v3442 = vadd.f32 %v2568, %v3441
        %v3443 = vpop.f32.mrf.mxu0
        %3444 = vmatprep.mubr.f32.mxu0 0.0
        %3445 = vmatmul.mubr.f32.gmra.mxu0 %v2855
        %v3446 = vpop.f32.mrf.mxu0
        %v3447 = vadd.f32 %v2568, %v3446
        %v3448 = vpop.f32.mrf.mxu0
        %3449 = vmatprep.mubr.f32.mxu0 0.0
        %3450 = vmatmul.mubr.f32.gmra.mxu0 %v2858
        %v3451 = vpop.f32.mrf.mxu0
        %v3452 = vadd.f32 %v2568, %v3451
        %v3453 = vpop.f32.mrf.mxu0
        %3454 = vmatprep.mubr.f32.mxu0 0.0
        %3455 = vmatmul.mubr.f32.gmra.mxu0 %v2861
        %v3456 = vpop.f32.mrf.mxu0
        %v3457 = vadd.f32 %v2568, %v3456
        %v3458 = vpop.f32.mrf.mxu0
        %3459 = vmatprep.mubr.f32.mxu0 0.0
        %3460 = vmatmul.mubr.f32.gmra.mxu0 %v2864
        %v3461 = vpop.f32.mrf.mxu0
        %v3462 = vadd.f32 %v2568, %v3461
        %v3463 = vpop.f32.mrf.mxu0
        %3464 = vmatprep.mubr.f32.mxu0 0.0
        %3465 = vmatmul.mubr.f32.gmra.mxu0 %v2867
        %v3466 = vpop.f32.mrf.mxu0
        %v3467 = vadd.f32 %v2568, %v3466
        %v3468 = vpop.f32.mrf.mxu0
        %3469 = vmatprep.mubr.f32.mxu0 0.0
        %3470 = vmatmul.mubr.f32.gmra.mxu0 %v2870
        %v3471 = vpop.f32.mrf.mxu0
        %v3472 = vadd.f32 %v2568, %v3471
        %v3473 = vpop.f32.mrf.mxu0
        %3474 = vmatprep.mubr.f32.mxu0 0.0
        %3475 = vmatmul.mubr.f32.gmra.mxu0 %v2873
        %v3476 = vpop.f32.mrf.mxu0
        %v3477 = vadd.f32 %v2568, %v3476
        %v3478 = vpop.f32.mrf.mxu0
        %3479 = vmatprep.mubr.f32.mxu0 0.0
        %3480 = vmatmul.mubr.f32.gmra.mxu0 %v2876
        %v3481 = vpop.f32.mrf.mxu0
        %v3482 = vadd.f32 %v2568, %v3481
        %v3483 = vpop.f32.mrf.mxu0
        %3484 = vmatprep.mubr.f32.mxu0 0.0
        %3485 = vmatmul.mubr.f32.gmra.mxu0 %v2879
        %v3486 = vpop.f32.mrf.mxu0
        %v3487 = vadd.f32 %v2568, %v3486
        %v3488 = vpop.f32.mrf.mxu0
        %3489 = vmatprep.mubr.f32.mxu0 0.0
        %3490 = vmatmul.mubr.f32.gmra.mxu0 %v2882
        %v3491 = vpop.f32.mrf.mxu0
        %v3492 = vadd.f32 %v2568, %v3491
        %v3493 = vpop.f32.mrf.mxu0
        %3494 = vmatprep.mubr.f32.mxu0 0.0
        %3495 = vmatmul.mubr.f32.gmra.mxu0 %v2885
        %v3496 = vpop.f32.mrf.mxu0
        %v3497 = vadd.f32 %v2568, %v3496
        %v3498 = vpop.f32.mrf.mxu0
        %3499 = vmatprep.mubr.f32.mxu0 0.0
        %3500 = vmatmul.mubr.f32.gmra.mxu0 %v2888
        %v3501 = vpop.f32.mrf.mxu0
        %v3502 = vadd.f32 %v2568, %v3501
        %v3503 = vpop.f32.mrf.mxu0
        %3504 = vmatprep.mubr.f32.mxu0 0.0
        %3505 = vmatmul.mubr.f32.gmra.mxu0 %v2891
        %v3506 = vpop.f32.mrf.mxu0
        %v3507 = vadd.f32 %v2568, %v3506
        %v3508 = vpop.f32.mrf.mxu0
        %3509 = vmatprep.mubr.f32.mxu0 0.0
        %3510 = vmatmul.mubr.f32.gmra.mxu0 %v2894
        %v3511 = vpop.f32.mrf.mxu0
        %v3512 = vadd.f32 %v2568, %v3511
        %v3513 = vpop.f32.mrf.mxu0
        %3514 = vmatprep.mubr.f32.mxu0 0.0
        %3515 = vmatmul.mubr.f32.gmra.mxu0 %v2897
        %v3516 = vpop.f32.mrf.mxu0
        %v3517 = vadd.f32 %v2568, %v3516
        %v3518 = vpop.f32.mrf.mxu0
        %3519 = vmatprep.mubr.f32.mxu0 0.0
        %3520 = vmatmul.mubr.f32.gmra.mxu0 %v2900
        %v3521 = vpop.f32.mrf.mxu0
        %v3522 = vadd.f32 %v2568, %v3521
        %v3523 = vpop.f32.mrf.mxu0
        %3524 = vmatprep.mubr.f32.mxu0 0.0
        %3525 = vmatmul.mubr.f32.gmra.mxu0 %v2903
        %v3526 = vpop.f32.mrf.mxu0
        %v3527 = vadd.f32 %v2568, %v3526
        %v3528 = vpop.f32.mrf.mxu0
        %3529 = vdwg.mxu0
        %v3530 = vmax.f32 %v2972, 0.0
        %v3531 = vmax.f32 %v2977, 0.0
        %v3532 = vmax.f32 %v2982, 0.0
        %v3533 = vmax.f32 %v2987, 0.0
        %v3534 = vmax.f32 %v2992, 0.0
        %v3535 = vmax.f32 %v2997, 0.0
        %v3536 = vmax.f32 %v3002, 0.0
        %v3537 = vmax.f32 %v3007, 0.0
        %v3538 = vmax.f32 %v3012, 0.0
        %v3539 = vmax.f32 %v3017, 0.0
        %v3540 = vmax.f32 %v3022, 0.0
        %v3541 = vmax.f32 %v3027, 0.0
        %v3542 = vmax.f32 %v3032, 0.0
        %v3543 = vmax.f32 %v3037, 0.0
        %v3544 = vmax.f32 %v3042, 0.0
        %v3545 = vmax.f32 %v3047, 0.0
        %v3546 = vmax.f32 %v3052, 0.0
        %v3547 = vmax.f32 %v3057, 0.0
        %v3548 = vmax.f32 %v3062, 0.0
        %v3549 = vmax.f32 %v3067, 0.0
        %v3550 = vmax.f32 %v3072, 0.0
        %v3551 = vmax.f32 %v3077, 0.0
        %v3552 = vmax.f32 %v3082, 0.0
        %v3553 = vmax.f32 %v3087, 0.0
        %v3554 = vmax.f32 %v3092, 0.0
        %v3555 = vmax.f32 %v3097, 0.0
        %v3556 = vmax.f32 %v3102, 0.0
        %v3557 = vmax.f32 %v3107, 0.0
        %v3558 = vmax.f32 %v3112, 0.0
        %v3559 = vmax.f32 %v3117, 0.0
        %v3560 = vmax.f32 %v3122, 0.0
        %v3561 = vmax.f32 %v3127, 0.0
        %v3562 = vmax.f32 %v3132, 0.0
        %v3563 = vmax.f32 %v3137, 0.0
        %v3564 = vmax.f32 %v3142, 0.0
        %v3565 = vmax.f32 %v3147, 0.0
        %v3566 = vmax.f32 %v3152, 0.0
        %v3567 = vmax.f32 %v3157, 0.0
        %v3568 = vmax.f32 %v3162, 0.0
        %v3569 = vmax.f32 %v3167, 0.0
        %v3570 = vmax.f32 %v3172, 0.0
        %v3571 = vmax.f32 %v3177, 0.0
        %v3572 = vmax.f32 %v3182, 0.0
        %v3573 = vmax.f32 %v3187, 0.0
        %v3574 = vmax.f32 %v3192, 0.0
        %v3575 = vmax.f32 %v3197, 0.0
        %v3576 = vmax.f32 %v3202, 0.0
        %v3577 = vmax.f32 %v3207, 0.0
        %v3578 = vmax.f32 %v3212, 0.0
        %v3579 = vmax.f32 %v3217, 0.0
        %v3580 = vmax.f32 %v3222, 0.0
        %v3581 = vmax.f32 %v3227, 0.0
        %v3582 = vmax.f32 %v3232, 0.0
        %v3583 = vmax.f32 %v3237, 0.0
        %v3584 = vmax.f32 %v3242, 0.0
        %v3585 = vmax.f32 %v3247, 0.0
        %v3586 = vmax.f32 %v3252, 0.0
        %v3587 = vmax.f32 %v3257, 0.0
        %v3588 = vmax.f32 %v3262, 0.0
        %v3589 = vmax.f32 %v3267, 0.0
        %v3590 = vmax.f32 %v3272, 0.0
        %v3591 = vmax.f32 %v3277, 0.0
        %v3592 = vmax.f32 %v3282, 0.0
        %v3593 = vmax.f32 %v3287, 0.0
        %v3594 = vmax.f32 %v3292, 0.0
        %v3595 = vmax.f32 %v3297, 0.0
        %v3596 = vmax.f32 %v3302, 0.0
        %v3597 = vmax.f32 %v3307, 0.0
        %v3598 = vmax.f32 %v3312, 0.0
        %v3599 = vmax.f32 %v3317, 0.0
        %v3600 = vmax.f32 %v3322, 0.0
        %v3601 = vmax.f32 %v3327, 0.0
        %v3602 = vmax.f32 %v3332, 0.0
        %v3603 = vmax.f32 %v3337, 0.0
        %v3604 = vmax.f32 %v3342, 0.0
        %v3605 = vmax.f32 %v3347, 0.0
        %v3606 = vmax.f32 %v3352, 0.0
        %v3607 = vmax.f32 %v3357, 0.0
        %v3608 = vmax.f32 %v3362, 0.0
        %v3609 = vmax.f32 %v3367, 0.0
        %v3610 = vmax.f32 %v3372, 0.0
        %v3611 = vmax.f32 %v3377, 0.0
        %v3612 = vmax.f32 %v3382, 0.0
        %v3613 = vmax.f32 %v3387, 0.0
        %v3614 = vmax.f32 %v3392, 0.0
        %v3615 = vmax.f32 %v3397, 0.0
        %v3616 = vmax.f32 %v3402, 0.0
        %v3617 = vmax.f32 %v3407, 0.0
        %v3618 = vmax.f32 %v3412, 0.0
        %v3619 = vmax.f32 %v3417, 0.0
        %v3620 = vmax.f32 %v3422, 0.0
        %v3621 = vmax.f32 %v3427, 0.0
        %v3622 = vmax.f32 %v3432, 0.0
        %v3623 = vmax.f32 %v3437, 0.0
        %v3624 = vmax.f32 %v3442, 0.0
        %v3625 = vmax.f32 %v3447, 0.0
        %v3626 = vmax.f32 %v3452, 0.0
        %v3627 = vmax.f32 %v3457, 0.0
        %v3628 = vmax.f32 %v3462, 0.0
        %v3629 = vmax.f32 %v3467, 0.0
        %v3630 = vmax.f32 %v3472, 0.0
        %v3631 = vmax.f32 %v3477, 0.0
        %v3632 = vmax.f32 %v3482, 0.0
        %v3633 = vmax.f32 %v3487, 0.0
        %v3634 = vmax.f32 %v3492, 0.0
        %v3635 = vmax.f32 %v3497, 0.0
        %v3636 = vmax.f32 %v3502, 0.0
        %v3637 = vmax.f32 %v3507, 0.0
        %v3638 = vmax.f32 %v3512, 0.0
        %v3639 = vmax.f32 %v3517, 0.0
        %v3640 = vmax.f32 %v3522, 0.0
        %v3641 = vmax.f32 %v3527, 0.0
        %3649 = vrot.lane.b32.xlu0 %v3586, 5
        %v3650 = vpop.permute.xlu0 %3649
        %3651 = vrot.lane.b32.xlu0 %v3587, 5
        %v3652 = vpop.permute.xlu0 %3651
        %3653 = vrot.lane.b32.xlu0 %v3588, 5
        %v3654 = vpop.permute.xlu0 %3653
        %3655 = vrot.lane.b32.xlu0 %v3589, 5
        %v3656 = vpop.permute.xlu0 %3655
        %3657 = vrot.lane.b32.xlu0 %v3590, 5
        %v3658 = vpop.permute.xlu0 %3657
        %3659 = vrot.lane.b32.xlu0 %v3591, 5
        %v3660 = vpop.permute.xlu0 %3659
        %3661 = vrot.lane.b32.xlu0 %v3592, 5
        %v3662 = vpop.permute.xlu0 %3661
        %3677 = vrot.lane.b32.xlu0 %v3537, 10
        %v3678 = vpop.permute.xlu0 %3677
        %3679 = vrot.lane.b32.xlu0 %v3538, 10
        %v3680 = vpop.permute.xlu0 %3679
        %3681 = vrot.lane.b32.xlu0 %v3539, 10
        %v3682 = vpop.permute.xlu0 %3681
        %3683 = vrot.lane.b32.xlu0 %v3540, 10
        %v3684 = vpop.permute.xlu0 %3683
        %3685 = vrot.lane.b32.xlu0 %v3541, 10
        %v3686 = vpop.permute.xlu0 %3685
        %3687 = vrot.lane.b32.xlu0 %v3542, 10
        %v3688 = vpop.permute.xlu0 %3687
        %3689 = vrot.lane.b32.xlu0 %v3543, 10
        %v3690 = vpop.permute.xlu0 %3689
        %3705 = vrot.lane.b32.xlu0 %v3593, 15
        %v3706 = vpop.permute.xlu0 %3705
        %3707 = vrot.lane.b32.xlu0 %v3594, 15
        %v3708 = vpop.permute.xlu0 %3707
        %3709 = vrot.lane.b32.xlu0 %v3595, 15
        %v3710 = vpop.permute.xlu0 %3709
        %3711 = vrot.lane.b32.xlu0 %v3596, 15
        %v3712 = vpop.permute.xlu0 %3711
        %3713 = vrot.lane.b32.xlu0 %v3597, 15
        %v3714 = vpop.permute.xlu0 %3713
        %3715 = vrot.lane.b32.xlu0 %v3598, 15
        %v3716 = vpop.permute.xlu0 %3715
        %3717 = vrot.lane.b32.xlu0 %v3599, 15
        %v3718 = vpop.permute.xlu0 %3717
        %3733 = vrot.lane.b32.xlu0 %v3544, 20
        %v3734 = vpop.permute.xlu0 %3733
        %3735 = vrot.lane.b32.xlu0 %v3545, 20
        %v3736 = vpop.permute.xlu0 %3735
        %3737 = vrot.lane.b32.xlu0 %v3546, 20
        %v3738 = vpop.permute.xlu0 %3737
        %3739 = vrot.lane.b32.xlu0 %v3547, 20
        %v3740 = vpop.permute.xlu0 %3739
        %3741 = vrot.lane.b32.xlu0 %v3548, 20
        %v3742 = vpop.permute.xlu0 %3741
        %3743 = vrot.lane.b32.xlu0 %v3549, 20
        %v3744 = vpop.permute.xlu0 %3743
        %3745 = vrot.lane.b32.xlu0 %v3550, 20
        %v3746 = vpop.permute.xlu0 %3745
        %3761 = vrot.lane.b32.xlu0 %v3600, 25
        %v3762 = vpop.permute.xlu0 %3761
        %3763 = vrot.lane.b32.xlu0 %v3601, 25
        %v3764 = vpop.permute.xlu0 %3763
        %3765 = vrot.lane.b32.xlu0 %v3602, 25
        %v3766 = vpop.permute.xlu0 %3765
        %3767 = vrot.lane.b32.xlu0 %v3603, 25
        %v3768 = vpop.permute.xlu0 %3767
        %3769 = vrot.lane.b32.xlu0 %v3604, 25
        %v3770 = vpop.permute.xlu0 %3769
        %3771 = vrot.lane.b32.xlu0 %v3605, 25
        %v3772 = vpop.permute.xlu0 %3771
        %3773 = vrot.lane.b32.xlu0 %v3606, 25
        %v3774 = vpop.permute.xlu0 %3773
        %3789 = vrot.lane.b32.xlu0 %v3551, 30
        %v3790 = vpop.permute.xlu0 %3789
        %3791 = vrot.lane.b32.xlu0 %v3552, 30
        %v3792 = vpop.permute.xlu0 %3791
        %3793 = vrot.lane.b32.xlu0 %v3553, 30
        %v3794 = vpop.permute.xlu0 %3793
        %3795 = vrot.lane.b32.xlu0 %v3554, 30
        %v3796 = vpop.permute.xlu0 %3795
        %3797 = vrot.lane.b32.xlu0 %v3555, 30
        %v3798 = vpop.permute.xlu0 %3797
        %3799 = vrot.lane.b32.xlu0 %v3556, 30
        %v3800 = vpop.permute.xlu0 %3799
        %3801 = vrot.lane.b32.xlu0 %v3557, 30
        %v3802 = vpop.permute.xlu0 %3801
        %3817 = vrot.lane.b32.xlu0 %v3607, 35
        %v3818 = vpop.permute.xlu0 %3817
        %3819 = vrot.lane.b32.xlu0 %v3608, 35
        %v3820 = vpop.permute.xlu0 %3819
        %3821 = vrot.lane.b32.xlu0 %v3609, 35
        %v3822 = vpop.permute.xlu0 %3821
        %3823 = vrot.lane.b32.xlu0 %v3610, 35
        %v3824 = vpop.permute.xlu0 %3823
        %3825 = vrot.lane.b32.xlu0 %v3611, 35
        %v3826 = vpop.permute.xlu0 %3825
        %3827 = vrot.lane.b32.xlu0 %v3612, 35
        %v3828 = vpop.permute.xlu0 %3827
        %3829 = vrot.lane.b32.xlu0 %v3613, 35
        %v3830 = vpop.permute.xlu0 %3829
        %3845 = vrot.lane.b32.xlu0 %v3558, 40
        %v3846 = vpop.permute.xlu0 %3845
        %3847 = vrot.lane.b32.xlu0 %v3559, 40
        %v3848 = vpop.permute.xlu0 %3847
        %3849 = vrot.lane.b32.xlu0 %v3560, 40
        %v3850 = vpop.permute.xlu0 %3849
        %3851 = vrot.lane.b32.xlu0 %v3561, 40
        %v3852 = vpop.permute.xlu0 %3851
        %3853 = vrot.lane.b32.xlu0 %v3562, 40
        %v3854 = vpop.permute.xlu0 %3853
        %3855 = vrot.lane.b32.xlu0 %v3563, 40
        %v3856 = vpop.permute.xlu0 %3855
        %3857 = vrot.lane.b32.xlu0 %v3564, 40
        %v3858 = vpop.permute.xlu0 %3857
        %3873 = vrot.lane.b32.xlu0 %v3614, 45
        %v3874 = vpop.permute.xlu0 %3873
        %3875 = vrot.lane.b32.xlu0 %v3615, 45
        %v3876 = vpop.permute.xlu0 %3875
        %3877 = vrot.lane.b32.xlu0 %v3616, 45
        %v3878 = vpop.permute.xlu0 %3877
        %3879 = vrot.lane.b32.xlu0 %v3617, 45
        %v3880 = vpop.permute.xlu0 %3879
        %3881 = vrot.lane.b32.xlu0 %v3618, 45
        %v3882 = vpop.permute.xlu0 %3881
        %3883 = vrot.lane.b32.xlu0 %v3619, 45
        %v3884 = vpop.permute.xlu0 %3883
        %3885 = vrot.lane.b32.xlu0 %v3620, 45
        %v3886 = vpop.permute.xlu0 %3885
        %3901 = vrot.lane.b32.xlu0 %v3565, 50
        %v3902 = vpop.permute.xlu0 %3901
        %3903 = vrot.lane.b32.xlu0 %v3566, 50
        %v3904 = vpop.permute.xlu0 %3903
        %3905 = vrot.lane.b32.xlu0 %v3567, 50
        %v3906 = vpop.permute.xlu0 %3905
        %3907 = vrot.lane.b32.xlu0 %v3568, 50
        %v3908 = vpop.permute.xlu0 %3907
        %3909 = vrot.lane.b32.xlu0 %v3569, 50
        %v3910 = vpop.permute.xlu0 %3909
        %3911 = vrot.lane.b32.xlu0 %v3570, 50
        %v3912 = vpop.permute.xlu0 %3911
        %3913 = vrot.lane.b32.xlu0 %v3571, 50
        %v3914 = vpop.permute.xlu0 %3913
        %3929 = vrot.lane.b32.xlu0 %v3621, 55
        %v3930 = vpop.permute.xlu0 %3929
        %3931 = vrot.lane.b32.xlu0 %v3622, 55
        %v3932 = vpop.permute.xlu0 %3931
        %3933 = vrot.lane.b32.xlu0 %v3623, 55
        %v3934 = vpop.permute.xlu0 %3933
        %3935 = vrot.lane.b32.xlu0 %v3624, 55
        %v3936 = vpop.permute.xlu0 %3935
        %3937 = vrot.lane.b32.xlu0 %v3625, 55
        %v3938 = vpop.permute.xlu0 %3937
        %3939 = vrot.lane.b32.xlu0 %v3626, 55
        %v3940 = vpop.permute.xlu0 %3939
        %3941 = vrot.lane.b32.xlu0 %v3627, 55
        %v3942 = vpop.permute.xlu0 %3941
        %3957 = vrot.lane.b32.xlu0 %v3572, 60
        %v3958 = vpop.permute.xlu0 %3957
        %3959 = vrot.lane.b32.xlu0 %v3573, 60
        %v3960 = vpop.permute.xlu0 %3959
        %3961 = vrot.lane.b32.xlu0 %v3574, 60
        %v3962 = vpop.permute.xlu0 %3961
        %3963 = vrot.lane.b32.xlu0 %v3575, 60
        %v3964 = vpop.permute.xlu0 %3963
        %3965 = vrot.lane.b32.xlu0 %v3576, 60
        %v3966 = vpop.permute.xlu0 %3965
        %3967 = vrot.lane.b32.xlu0 %v3577, 60
        %v3968 = vpop.permute.xlu0 %3967
        %3969 = vrot.lane.b32.xlu0 %v3578, 60
        %v3970 = vpop.permute.xlu0 %3969
        %3985 = vrot.lane.b32.xlu0 %v3628, 65
        %v3986 = vpop.permute.xlu0 %3985
        %3987 = vrot.lane.b32.xlu0 %v3629, 65
        %v3988 = vpop.permute.xlu0 %3987
        %3989 = vrot.lane.b32.xlu0 %v3630, 65
        %v3990 = vpop.permute.xlu0 %3989
        %3991 = vrot.lane.b32.xlu0 %v3631, 65
        %v3992 = vpop.permute.xlu0 %3991
        %3993 = vrot.lane.b32.xlu0 %v3632, 65
        %v3994 = vpop.permute.xlu0 %3993
        %3995 = vrot.lane.b32.xlu0 %v3633, 65
        %v3996 = vpop.permute.xlu0 %3995
        %3997 = vrot.lane.b32.xlu0 %v3634, 65
        %v3998 = vpop.permute.xlu0 %3997
        %4013 = vrot.lane.b32.xlu0 %v3579, 70
        %v4014 = vpop.permute.xlu0 %4013
        %4015 = vrot.lane.b32.xlu0 %v3580, 70
        %v4016 = vpop.permute.xlu0 %4015
        %4017 = vrot.lane.b32.xlu0 %v3581, 70
        %v4018 = vpop.permute.xlu0 %4017
        %4019 = vrot.lane.b32.xlu0 %v3582, 70
        %v4020 = vpop.permute.xlu0 %4019
        %4021 = vrot.lane.b32.xlu0 %v3583, 70
        %v4022 = vpop.permute.xlu0 %4021
        %4023 = vrot.lane.b32.xlu0 %v3584, 70
        %v4024 = vpop.permute.xlu0 %4023
        %4025 = vrot.lane.b32.xlu0 %v3585, 70
        %v4026 = vpop.permute.xlu0 %4025
        %4041 = vrot.lane.b32.xlu0 %v3635, 75
        %v4042 = vpop.permute.xlu0 %4041
        %4043 = vrot.lane.b32.xlu0 %v3636, 75
        %v4044 = vpop.permute.xlu0 %4043
        %4045 = vrot.lane.b32.xlu0 %v3637, 75
        %v4046 = vpop.permute.xlu0 %4045
        %4047 = vrot.lane.b32.xlu0 %v3638, 75
        %v4048 = vpop.permute.xlu0 %4047
        %4049 = vrot.lane.b32.xlu0 %v3639, 75
        %v4050 = vpop.permute.xlu0 %4049
        %4051 = vrot.lane.b32.xlu0 %v3640, 75
        %v4052 = vpop.permute.xlu0 %4051
        %4053 = vrot.lane.b32.xlu0 %v3641, 75
        %v4054 = vpop.permute.xlu0 %4053
        %vm4062 = vcmask 39936
        %v4063 = vsel %vm4062, %v3530, %v3650
        %v4064 = vsel %vm4062, %v3531, %v3652
        %v4065 = vsel %vm4062, %v3532, %v3654
        %v4066 = vsel %vm4062, %v3533, %v3656
        %v4067 = vsel %vm4062, %v3534, %v3658
        %v4068 = vsel %vm4062, %v3535, %v3660
        %v4069 = vsel %vm4062, %v3536, %v3662
        %vm4070 = vcmask 80896
        %v4071 = vsel %vm4070, %v4063, %v3678
        %v4072 = vsel %vm4070, %v4064, %v3680
        %v4073 = vsel %vm4070, %v4065, %v3682
        %v4074 = vsel %vm4070, %v4066, %v3684
        %v4075 = vsel %vm4070, %v4067, %v3686
        %v4076 = vsel %vm4070, %v4068, %v3688
        %v4077 = vsel %vm4070, %v4069, %v3690
        %vm4078 = vcmask 121856
        %v4079 = vsel %vm4078, %v4071, %v3706
        %v4080 = vsel %vm4078, %v4072, %v3708
        %v4081 = vsel %vm4078, %v4073, %v3710
        %v4082 = vsel %vm4078, %v4074, %v3712
        %v4083 = vsel %vm4078, %v4075, %v3714
        %v4084 = vsel %vm4078, %v4076, %v3716
        %v4085 = vsel %vm4078, %v4077, %v3718
        %vm4086 = vcmask 162816
        %v4087 = vsel %vm4086, %v4079, %v3734
        %v4088 = vsel %vm4086, %v4080, %v3736
        %v4089 = vsel %vm4086, %v4081, %v3738
        %v4090 = vsel %vm4086, %v4082, %v3740
        %v4091 = vsel %vm4086, %v4083, %v3742
        %v4092 = vsel %vm4086, %v4084, %v3744
        %v4093 = vsel %vm4086, %v4085, %v3746
        %vm4094 = vcmask 203776
        %v4095 = vsel %vm4094, %v4087, %v3762
        %v4096 = vsel %vm4094, %v4088, %v3764
        %v4097 = vsel %vm4094, %v4089, %v3766
        %v4098 = vsel %vm4094, %v4090, %v3768
        %v4099 = vsel %vm4094, %v4091, %v3770
        %v4100 = vsel %vm4094, %v4092, %v3772
        %v4101 = vsel %vm4094, %v4093, %v3774
        %vm4102 = vcmask 244736
        %v4103 = vsel %vm4102, %v4095, %v3790
        %v4104 = vsel %vm4102, %v4096, %v3792
        %v4105 = vsel %vm4102, %v4097, %v3794
        %v4106 = vsel %vm4102, %v4098, %v3796
        %v4107 = vsel %vm4102, %v4099, %v3798
        %v4108 = vsel %vm4102, %v4100, %v3800
        %v4109 = vsel %vm4102, %v4101, %v3802
        %vm4110 = vcmask 285696
        %v4111 = vsel %vm4110, %v4103, %v3818
        %v4112 = vsel %vm4110, %v4104, %v3820
        %v4113 = vsel %vm4110, %v4105, %v3822
        %v4114 = vsel %vm4110, %v4106, %v3824
        %v4115 = vsel %vm4110, %v4107, %v3826
        %v4116 = vsel %vm4110, %v4108, %v3828
        %v4117 = vsel %vm4110, %v4109, %v3830
        %vm4118 = vcmask 326656
        %v4119 = vsel %vm4118, %v4111, %v3846
        %v4120 = vsel %vm4118, %v4112, %v3848
        %v4121 = vsel %vm4118, %v4113, %v3850
        %v4122 = vsel %vm4118, %v4114, %v3852
        %v4123 = vsel %vm4118, %v4115, %v3854
        %v4124 = vsel %vm4118, %v4116, %v3856
        %v4125 = vsel %vm4118, %v4117, %v3858
        %vm4126 = vcmask 367616
        %v4127 = vsel %vm4126, %v4119, %v3874
        %v4128 = vsel %vm4126, %v4120, %v3876
        %v4129 = vsel %vm4126, %v4121, %v3878
        %v4130 = vsel %vm4126, %v4122, %v3880
        %v4131 = vsel %vm4126, %v4123, %v3882
        %v4132 = vsel %vm4126, %v4124, %v3884
        %v4133 = vsel %vm4126, %v4125, %v3886
        %vm4134 = vcmask 408576
        %v4135 = vsel %vm4134, %v4127, %v3902
        %v4136 = vsel %vm4134, %v4128, %v3904
        %v4137 = vsel %vm4134, %v4129, %v3906
        %v4138 = vsel %vm4134, %v4130, %v3908
        %v4139 = vsel %vm4134, %v4131, %v3910
        %v4140 = vsel %vm4134, %v4132, %v3912
        %v4141 = vsel %vm4134, %v4133, %v3914
        %vm4142 = vcmask 449536
        %v4143 = vsel %vm4142, %v4135, %v3930
        %v4144 = vsel %vm4142, %v4136, %v3932
        %v4145 = vsel %vm4142, %v4137, %v3934
        %v4146 = vsel %vm4142, %v4138, %v3936
        %v4147 = vsel %vm4142, %v4139, %v3938
        %v4148 = vsel %vm4142, %v4140, %v3940
        %v4149 = vsel %vm4142, %v4141, %v3942
        %vm4150 = vcmask 490496
        %v4151 = vsel %vm4150, %v4143, %v3958
        %v4152 = vsel %vm4150, %v4144, %v3960
        %v4153 = vsel %vm4150, %v4145, %v3962
        %v4154 = vsel %vm4150, %v4146, %v3964
        %v4155 = vsel %vm4150, %v4147, %v3966
        %v4156 = vsel %vm4150, %v4148, %v3968
        %v4157 = vsel %vm4150, %v4149, %v3970
        %vm4158 = vcmask 531456
        %v4159 = vsel %vm4158, %v4151, %v3986
        %v4160 = vsel %vm4158, %v4152, %v3988
        %v4161 = vsel %vm4158, %v4153, %v3990
        %v4162 = vsel %vm4158, %v4154, %v3992
        %v4163 = vsel %vm4158, %v4155, %v3994
        %v4164 = vsel %vm4158, %v4156, %v3996
        %v4165 = vsel %vm4158, %v4157, %v3998
        %vm4166 = vcmask 572416
        %v4167 = vsel %vm4166, %v4159, %v4014
        %v4168 = vsel %vm4166, %v4160, %v4016
        %v4169 = vsel %vm4166, %v4161, %v4018
        %v4170 = vsel %vm4166, %v4162, %v4020
        %v4171 = vsel %vm4166, %v4163, %v4022
        %v4172 = vsel %vm4166, %v4164, %v4024
        %v4173 = vsel %vm4166, %v4165, %v4026
        %vm4174 = vcmask 613376
        %v4175 = vsel %vm4174, %v4167, %v4042
        %v4176 = vsel %vm4174, %v4168, %v4044
        %v4177 = vsel %vm4174, %v4169, %v4046
        %v4178 = vsel %vm4174, %v4170, %v4048
        %v4179 = vsel %vm4174, %v4171, %v4050
        %v4180 = vsel %vm4174, %v4172, %v4052
        %v4181 = vsel %vm4174, %v4173, %v4054
        %v4182 = vld [vmem:[%s3] sm:$0xff]
        %vm4183 = vcmask 457728
        %v4185 = vsel %vm4183, %v4182, 0
        %4187 = vmatprep.subr.mxu0 0.0
        %4188 = vmatpush1.msra.mxu0 0.0
        %4189 = vmatprep.subr.mxu0 0.0
        %4190 = vmatpush1.msra.mxu0 0.0
        %4191 = vmatprep.subr.mxu0 0.0
        %4192 = vmatpush1.msra.mxu0 0.0
        %4193 = vmatprep.subr.mxu0 0.0
        %4194 = vmatpush1.msra.mxu0 0.0
        %4195 = vmatprep.subr.mxu0 0.0
        %4196 = vmatpush1.msra.mxu0 0.0
        %4197 = vmatprep.subr.mxu0 0.0
        %4198 = vmatpush1.msra.mxu0 0.0
        %4199 = vmatprep.subr.mxu0 0.0
        %4200 = vmatpush1.msra.mxu0 0.0
        %4201 = vmatprep.subr.mxu0 0.0
        %4202 = vmatpush1.msra.mxu0 0.0
        %4203 = vmatprep.subr.mxu0 0.0
        %4204 = vmatpush1.msra.mxu0 0.0
        %4205 = vmatprep.subr.mxu0 0.0
        %4206 = vmatpush1.msra.mxu0 %v4181
        %4207 = vmatprep.subr.mxu0 0.0
        %4208 = vmatpush1.msra.mxu0 %v4180
        %4209 = vmatprep.subr.mxu0 0.0
        %4210 = vmatpush1.msra.mxu0 %v4179
        %4211 = vmatprep.subr.mxu0 0.0
        %4212 = vmatpush1.msra.mxu0 %v4178
        %4213 = vmatprep.subr.mxu0 0.0
        %4214 = vmatpush1.msra.mxu0 %v4177
        %4215 = vmatprep.subr.mxu0 0.0
        %4216 = vmatpush1.msra.mxu0 %v4176
        %4217 = vmatprep.subr.mxu0 0.0
        %4218 = vmatpush1.msra.mxu0 %v4175
        %4219 = vmatprep.subr.mxu0 0.0
        %4220 = vmatpush2.msra.mxu0 0.0
        %4221 = vmatprep.subr.mxu0 0.0
        %4222 = vmatpush2.msra.mxu0 0.0
        %4223 = vmatprep.subr.mxu0 0.0
        %4224 = vmatpush2.msra.mxu0 0.0
        %4225 = vmatprep.subr.mxu0 0.0
        %4226 = vmatpush2.msra.mxu0 0.0
        %4227 = vmatprep.subr.mxu0 0.0
        %4228 = vmatpush2.msra.mxu0 0.0
        %4229 = vmatprep.subr.mxu0 0.0
        %4230 = vmatpush2.msra.mxu0 0.0
        %4231 = vmatprep.subr.mxu0 0.0
        %4232 = vmatpush2.msra.mxu0 0.0
        %4233 = vmatprep.subr.mxu0 0.0
        %4234 = vmatpush2.msra.mxu0 0.0
        %4235 = vmatprep.subr.mxu0 0.0
        %4236 = vmatpush2.msra.mxu0 0.0
        %4237 = vmatprep.subr.mxu0 0.0
        %4238 = vmatpush2.msra.mxu0 0.0
        %4239 = vmatprep.subr.mxu0 0.0
        %4240 = vmatpush2.msra.mxu0 0.0
        %4241 = vmatprep.subr.mxu0 0.0
        %4242 = vmatpush2.msra.mxu0 0.0
        %4243 = vmatprep.subr.mxu0 0.0
        %4244 = vmatpush2.msra.mxu0 0.0
        %4245 = vmatprep.subr.mxu0 0.0
        %4246 = vmatpush2.msra.mxu0 0.0
        %4247 = vmatprep.subr.mxu0 0.0
        %4248 = vmatpush2.msra.mxu0 0.0
        %4249 = vmatprep.subr.mxu0 0.0
        %4250 = vmatpush2.msra.mxu0 0.0
        %4251 = vmatprep.mubr.f32.mxu0 0.0
        %4252 = vmatmul.mubr.f32.gmra.mxu0 %v4185
        %v4253 = vpop.f32.mrf.mxu0
        %v4254 = vadd.f32 0.0, %v4253
        %v4255 = vpop.f32.mrf.mxu0
        %4256 = vdwg.mxu0
        %4258 = vrot.lane.b32.xlu0 %v4254, 118
        %v4259 = vpop.permute.xlu0 %4258
        %4260 = vrot.lane.b32.xlu0 %v4254, 108
        %v4261 = vpop.permute.xlu0 %4260
        %4262 = vrot.lane.b32.xlu0 %v4254, 98
        %v4263 = vpop.permute.xlu0 %4262
        %4264 = vrot.lane.b32.xlu0 %v4254, 88
        %v4265 = vpop.permute.xlu0 %4264
        %4266 = vrot.lane.b32.xlu0 %v4254, 78
        %v4267 = vpop.permute.xlu0 %4266
        %4268 = vrot.lane.b32.xlu0 %v4254, 68
        %v4269 = vpop.permute.xlu0 %4268
        %4270 = vrot.lane.b32.xlu0 %v4254, 58
        %v4271 = vpop.permute.xlu0 %4270
        %v4272 = vsel %vm4070, %v4254, 0
        %v4274 = vsel %vm4070, %v4259, 0
        %v4276 = vsel %vm4070, %v4261, 0
        %v4278 = vsel %vm4070, %v4263, 0
        %v4280 = vsel %vm4070, %v4265, 0
        %v4282 = vsel %vm4070, %v4267, 0
        %v4284 = vsel %vm4070, %v4269, 0
        %v4286 = vsel %vm4070, %v4271, 0
        %vm4288 = vcmask 1041408
        %v4290 = vsel %vm4288, %v300, 0
        %4292 = vmatprep.subr.mxu0 0.0
        %4293 = vmatpush1.msra.mxu0 0.0
        %4294 = vmatprep.subr.mxu0 0.0
        %4295 = vmatpush1.msra.mxu0 0.0
        %4296 = vmatprep.subr.mxu0 0.0
        %4297 = vmatpush1.msra.mxu0 0.0
        %4298 = vmatprep.subr.mxu0 0.0
        %4299 = vmatpush1.msra.mxu0 0.0
        %4300 = vmatprep.subr.mxu0 0.0
        %4301 = vmatpush1.msra.mxu0 0.0
        %4302 = vmatprep.subr.mxu0 0.0
        %4303 = vmatpush1.msra.mxu0 0.0
        %4304 = vmatprep.subr.mxu0 0.0
        %4305 = vmatpush1.msra.mxu0 0.0
        %4306 = vmatprep.subr.mxu0 0.0
        %4307 = vmatpush1.msra.mxu0 0.0
        %4308 = vmatprep.subr.mxu0 0.0
        %4309 = vmatpush1.msra.mxu0 0.0
        %4310 = vmatprep.subr.mxu0 0.0
        %4311 = vmatpush1.msra.mxu0 0.0
        %4312 = vmatprep.subr.mxu0 0.0
        %4313 = vmatpush1.msra.mxu0 0.0
        %4314 = vmatprep.subr.mxu0 0.0
        %4315 = vmatpush1.msra.mxu0 0.0
        %4316 = vmatprep.subr.mxu0 0.0
        %4317 = vmatpush1.msra.mxu0 0.0
        %4318 = vmatprep.subr.mxu0 0.0
        %4319 = vmatpush1.msra.mxu0 0.0
        %4320 = vmatprep.subr.mxu0 0.0
        %4321 = vmatpush1.msra.mxu0 %v4290
        %4322 = vmatprep.subr.mxu0 0.0
        %4323 = vmatpush1.msra.mxu0 %v294
        %4324 = vmatprep.subr.mxu0 0.0
        %4325 = vmatpush2.msra.mxu0 0.0
        %4326 = vmatprep.subr.mxu0 0.0
        %4327 = vmatpush2.msra.mxu0 0.0
        %4328 = vmatprep.subr.mxu0 0.0
        %4329 = vmatpush2.msra.mxu0 0.0
        %4330 = vmatprep.subr.mxu0 0.0
        %4331 = vmatpush2.msra.mxu0 0.0
        %4332 = vmatprep.subr.mxu0 0.0
        %4333 = vmatpush2.msra.mxu0 0.0
        %4334 = vmatprep.subr.mxu0 0.0
        %4335 = vmatpush2.msra.mxu0 0.0
        %4336 = vmatprep.subr.mxu0 0.0
        %4337 = vmatpush2.msra.mxu0 0.0
        %4338 = vmatprep.subr.mxu0 0.0
        %4339 = vmatpush2.msra.mxu0 0.0
        %4340 = vmatprep.subr.mxu0 0.0
        %4341 = vmatpush2.msra.mxu0 0.0
        %4342 = vmatprep.subr.mxu0 0.0
        %4343 = vmatpush2.msra.mxu0 0.0
        %4344 = vmatprep.subr.mxu0 0.0
        %4345 = vmatpush2.msra.mxu0 0.0
        %4346 = vmatprep.subr.mxu0 0.0
        %4347 = vmatpush2.msra.mxu0 0.0
        %4348 = vmatprep.subr.mxu0 0.0
        %4349 = vmatpush2.msra.mxu0 0.0
        %4350 = vmatprep.subr.mxu0 0.0
        %4351 = vmatpush2.msra.mxu0 0.0
        %4352 = vmatprep.subr.mxu0 0.0
        %4353 = vmatpush2.msra.mxu0 0.0
        %4354 = vmatprep.subr.mxu0 0.0
        %4355 = vmatpush2.msra.mxu0 0.0
        %4356 = vmatprep.mubr.f32.mxu0 0.0
        %4357 = vmatmul.mubr.f32.gmra.mxu0 %v4272
        %v4358 = vpop.f32.mrf.mxu0
        %v4359 = vadd.f32 0.0, %v4358
        %v4360 = vpop.f32.mrf.mxu0
        %4361 = vmatprep.mubr.f32.mxu0 0.0
        %4362 = vmatmul.mubr.f32.gmra.mxu0 %v4274
        %v4363 = vpop.f32.mrf.mxu0
        %v4364 = vadd.f32 0.0, %v4363
        %v4365 = vpop.f32.mrf.mxu0
        %4366 = vmatprep.mubr.f32.mxu0 0.0
        %4367 = vmatmul.mubr.f32.gmra.mxu0 %v4276
        %v4368 = vpop.f32.mrf.mxu0
        %v4369 = vadd.f32 0.0, %v4368
        %v4370 = vpop.f32.mrf.mxu0
        %4371 = vmatprep.mubr.f32.mxu0 0.0
        %4372 = vmatmul.mubr.f32.gmra.mxu0 %v4278
        %v4373 = vpop.f32.mrf.mxu0
        %v4374 = vadd.f32 0.0, %v4373
        %v4375 = vpop.f32.mrf.mxu0
        %4376 = vmatprep.mubr.f32.mxu0 0.0
        %4377 = vmatmul.mubr.f32.gmra.mxu0 %v4280
        %v4378 = vpop.f32.mrf.mxu0
        %v4379 = vadd.f32 0.0, %v4378
        %v4380 = vpop.f32.mrf.mxu0
        %4381 = vmatprep.mubr.f32.mxu0 0.0
        %4382 = vmatmul.mubr.f32.gmra.mxu0 %v4282
        %v4383 = vpop.f32.mrf.mxu0
        %v4384 = vadd.f32 0.0, %v4383
        %v4385 = vpop.f32.mrf.mxu0
        %4386 = vmatprep.mubr.f32.mxu0 0.0
        %4387 = vmatmul.mubr.f32.gmra.mxu0 %v4284
        %v4388 = vpop.f32.mrf.mxu0
        %v4389 = vadd.f32 0.0, %v4388
        %v4390 = vpop.f32.mrf.mxu0
        %4391 = vmatprep.mubr.f32.mxu0 0.0
        %4392 = vmatmul.mubr.f32.gmra.mxu0 %v4286
        %v4393 = vpop.f32.mrf.mxu0
        %v4394 = vadd.f32 0.0, %v4393
        %v4395 = vpop.f32.mrf.mxu0
        %4396 = vdwg.mxu0
        %v4398 = vsel %vm349, %v293, 0
        %4400 = vmatprep.subr.mxu0 0.0
        %4401 = vmatpush1.msra.mxu0 0.0
        %4402 = vmatprep.subr.mxu0 0.0
        %4403 = vmatpush1.msra.mxu0 0.0
        %4404 = vmatprep.subr.mxu0 0.0
        %4405 = vmatpush1.msra.mxu0 0.0
        %4406 = vmatprep.subr.mxu0 0.0
        %4407 = vmatpush1.msra.mxu0 0.0
        %4408 = vmatprep.subr.mxu0 0.0
        %4409 = vmatpush1.msra.mxu0 0.0
        %4410 = vmatprep.subr.mxu0 0.0
        %4411 = vmatpush1.msra.mxu0 0.0
        %4412 = vmatprep.subr.mxu0 0.0
        %4413 = vmatpush1.msra.mxu0 0.0
        %4414 = vmatprep.subr.mxu0 0.0
        %4415 = vmatpush1.msra.mxu0 0.0
        %4416 = vmatprep.subr.mxu0 0.0
        %4417 = vmatpush1.msra.mxu0 0.0
        %4418 = vmatprep.subr.mxu0 0.0
        %4419 = vmatpush1.msra.mxu0 0.0
        %4420 = vmatprep.subr.mxu0 0.0
        %4421 = vmatpush1.msra.mxu0 0.0
        %4422 = vmatprep.subr.mxu0 0.0
        %4423 = vmatpush1.msra.mxu0 0.0
        %4424 = vmatprep.subr.mxu0 0.0
        %4425 = vmatpush1.msra.mxu0 0.0
        %4426 = vmatprep.subr.mxu0 0.0
        %4427 = vmatpush1.msra.mxu0 0.0
        %4428 = vmatprep.subr.mxu0 0.0
        %4429 = vmatpush1.msra.mxu0 0.0
        %4430 = vmatprep.subr.mxu0 0.0
        %4431 = vmatpush1.msra.mxu0 %v4398
        %4432 = vmatprep.subr.mxu0 0.0
        %4433 = vmatpush2.msra.mxu0 0.0
        %4434 = vmatprep.subr.mxu0 0.0
        %4435 = vmatpush2.msra.mxu0 0.0
        %4436 = vmatprep.subr.mxu0 0.0
        %4437 = vmatpush2.msra.mxu0 0.0
        %4438 = vmatprep.subr.mxu0 0.0
        %4439 = vmatpush2.msra.mxu0 0.0
        %4440 = vmatprep.subr.mxu0 0.0
        %4441 = vmatpush2.msra.mxu0 0.0
        %4442 = vmatprep.subr.mxu0 0.0
        %4443 = vmatpush2.msra.mxu0 0.0
        %4444 = vmatprep.subr.mxu0 0.0
        %4445 = vmatpush2.msra.mxu0 0.0
        %4446 = vmatprep.subr.mxu0 0.0
        %4447 = vmatpush2.msra.mxu0 0.0
        %4448 = vmatprep.subr.mxu0 0.0
        %4449 = vmatpush2.msra.mxu0 0.0
        %4450 = vmatprep.subr.mxu0 0.0
        %4451 = vmatpush2.msra.mxu0 0.0
        %4452 = vmatprep.subr.mxu0 0.0
        %4453 = vmatpush2.msra.mxu0 0.0
        %4454 = vmatprep.subr.mxu0 0.0
        %4455 = vmatpush2.msra.mxu0 0.0
        %4456 = vmatprep.subr.mxu0 0.0
        %4457 = vmatpush2.msra.mxu0 0.0
        %4458 = vmatprep.subr.mxu0 0.0
        %4459 = vmatpush2.msra.mxu0 0.0
        %4460 = vmatprep.subr.mxu0 0.0
        %4461 = vmatpush2.msra.mxu0 0.0
        %4462 = vmatprep.subr.mxu0 0.0
        %4463 = vmatpush2.msra.mxu0 0.0
        %4464 = vmatprep.mubr.f32.mxu0 0.0
        %4465 = vmatmul.mubr.f32.gmra.mxu0 %v326
        %v4466 = vpop.f32.mrf.mxu0
        %v4467 = vadd.f32 %v4359, %v4466
        %v4468 = vpop.f32.mrf.mxu0
        %4469 = vmatprep.mubr.f32.mxu0 0.0
        %4470 = vmatmul.mubr.f32.gmra.mxu0 %v329
        %v4471 = vpop.f32.mrf.mxu0
        %v4472 = vadd.f32 %v4364, %v4471
        %v4473 = vpop.f32.mrf.mxu0
        %4474 = vmatprep.mubr.f32.mxu0 0.0
        %4475 = vmatmul.mubr.f32.gmra.mxu0 %v332
        %v4476 = vpop.f32.mrf.mxu0
        %v4477 = vadd.f32 %v4369, %v4476
        %v4478 = vpop.f32.mrf.mxu0
        %4479 = vmatprep.mubr.f32.mxu0 0.0
        %4480 = vmatmul.mubr.f32.gmra.mxu0 %v335
        %v4481 = vpop.f32.mrf.mxu0
        %v4482 = vadd.f32 %v4374, %v4481
        %v4483 = vpop.f32.mrf.mxu0
        %4484 = vmatprep.mubr.f32.mxu0 0.0
        %4485 = vmatmul.mubr.f32.gmra.mxu0 %v338
        %v4486 = vpop.f32.mrf.mxu0
        %v4487 = vadd.f32 %v4379, %v4486
        %v4488 = vpop.f32.mrf.mxu0
        %4489 = vmatprep.mubr.f32.mxu0 0.0
        %4490 = vmatmul.mubr.f32.gmra.mxu0 %v341
        %v4491 = vpop.f32.mrf.mxu0
        %v4492 = vadd.f32 %v4384, %v4491
        %v4493 = vpop.f32.mrf.mxu0
        %4494 = vmatprep.mubr.f32.mxu0 0.0
        %4495 = vmatmul.mubr.f32.gmra.mxu0 %v344
        %v4496 = vpop.f32.mrf.mxu0
        %v4497 = vadd.f32 %v4389, %v4496
        %v4498 = vpop.f32.mrf.mxu0
        %4499 = vmatprep.mubr.f32.mxu0 0.0
        %4500 = vmatmul.mubr.f32.gmra.mxu0 %v347
        %v4501 = vpop.f32.mrf.mxu0
        %v4502 = vadd.f32 %v4394, %v4501
        %v4503 = vpop.f32.mrf.mxu0
        %4504 = vdwg.mxu0
        %v4505 = vlaneseq
        %v4506 = vshrl.u32 %v4505, 7
        %v4507 = vsub.s32 4, %v4506
        %v4508 = vrot.slane %v307, %v4507
        %v4509 = vadd.f32 %v4467, %v4508
        %v4510 = vadd.f32 %v4472, %v4508
        %v4511 = vadd.f32 %v4477, %v4508
        %v4512 = vadd.f32 %v4482, %v4508
        %v4513 = vadd.f32 %v4487, %v4508
        %v4514 = vadd.f32 %v4492, %v4508
        %v4515 = vadd.f32 %v4497, %v4508
        %v4516 = vadd.f32 %v4502, %v4508
        %v4517 = vmax.f32 %v4509, 0.0
        %v4518 = vmax.f32 %v4510, 0.0
        %v4519 = vmax.f32 %v4511, 0.0
        %v4520 = vmax.f32 %v4512, 0.0
        %v4521 = vmax.f32 %v4513, 0.0
        %v4522 = vmax.f32 %v4514, 0.0
        %v4523 = vmax.f32 %v4515, 0.0
        %v4524 = vmax.f32 %v4516, 0.0
        %v4525 = vlaneseq
        %v4526 = vshrl.u32 %v4525, 7
        %v4527 = vsub.s32 5, %v4526
        %v4528 = vrot.slane %v307, %v4527
        %v4530 = vsel %vm630, %v4517, 0
        %v4533 = vsel %vm630, %v4518, 0
        %v4536 = vsel %vm630, %v4519, 0
        %v4539 = vsel %vm630, %v4520, 0
        %v4542 = vsel %vm630, %v4521, 0
        %v4545 = vsel %vm630, %v4522, 0
        %v4548 = vsel %vm630, %v4523, 0
        %v4551 = vsel %vm630, %v4524, 0
        %4553 = vmatprep.subr.mxu0 0.0
        %4554 = vmatpush1.msra.mxu0 0.0
        %4555 = vmatprep.subr.mxu0 0.0
        %4556 = vmatpush1.msra.mxu0 0.0
        %4557 = vmatprep.subr.mxu0 0.0
        %4558 = vmatpush1.msra.mxu0 0.0
        %4559 = vmatprep.subr.mxu0 0.0
        %4560 = vmatpush1.msra.mxu0 0.0
        %4561 = vmatprep.subr.mxu0 0.0
        %4562 = vmatpush1.msra.mxu0 0.0
        %4563 = vmatprep.subr.mxu0 0.0
        %4564 = vmatpush1.msra.mxu0 0.0
        %4565 = vmatprep.subr.mxu0 0.0
        %4566 = vmatpush1.msra.mxu0 0.0
        %4567 = vmatprep.subr.mxu0 0.0
        %4568 = vmatpush1.msra.mxu0 0.0
        %4569 = vmatprep.subr.mxu0 0.0
        %4570 = vmatpush1.msra.mxu0 0.0
        %4571 = vmatprep.subr.mxu0 0.0
        %4572 = vmatpush1.msra.mxu0 0.0
        %4573 = vmatprep.subr.mxu0 0.0
        %4574 = vmatpush1.msra.mxu0 0.0
        %4575 = vmatprep.subr.mxu0 0.0
        %4576 = vmatpush1.msra.mxu0 0.0
        %4577 = vmatprep.subr.mxu0 0.0
        %4578 = vmatpush1.msra.mxu0 %v306
        %4579 = vmatprep.subr.mxu0 0.0
        %4580 = vmatpush1.msra.mxu0 %v304
        %4581 = vmatprep.subr.mxu0 0.0
        %4582 = vmatpush1.msra.mxu0 %v301
        %4583 = vmatprep.subr.mxu0 0.0
        %4584 = vmatpush1.msra.mxu0 %v295
        %4585 = vmatprep.subr.mxu0 0.0
        %4586 = vmatpush2.msra.mxu0 0.0
        %4587 = vmatprep.subr.mxu0 0.0
        %4588 = vmatpush2.msra.mxu0 0.0
        %4589 = vmatprep.subr.mxu0 0.0
        %4590 = vmatpush2.msra.mxu0 0.0
        %4591 = vmatprep.subr.mxu0 0.0
        %4592 = vmatpush2.msra.mxu0 0.0
        %4593 = vmatprep.subr.mxu0 0.0
        %4594 = vmatpush2.msra.mxu0 0.0
        %4595 = vmatprep.subr.mxu0 0.0
        %4596 = vmatpush2.msra.mxu0 0.0
        %4597 = vmatprep.subr.mxu0 0.0
        %4598 = vmatpush2.msra.mxu0 0.0
        %4599 = vmatprep.subr.mxu0 0.0
        %4600 = vmatpush2.msra.mxu0 0.0
        %4601 = vmatprep.subr.mxu0 0.0
        %4602 = vmatpush2.msra.mxu0 0.0
        %4603 = vmatprep.subr.mxu0 0.0
        %4604 = vmatpush2.msra.mxu0 0.0
        %4605 = vmatprep.subr.mxu0 0.0
        %4606 = vmatpush2.msra.mxu0 0.0
        %4607 = vmatprep.subr.mxu0 0.0
        %4608 = vmatpush2.msra.mxu0 0.0
        %4609 = vmatprep.subr.mxu0 0.0
        %4610 = vmatpush2.msra.mxu0 0.0
        %4611 = vmatprep.subr.mxu0 0.0
        %4612 = vmatpush2.msra.mxu0 0.0
        %4613 = vmatprep.subr.mxu0 0.0
        %4614 = vmatpush2.msra.mxu0 0.0
        %4615 = vmatprep.subr.mxu0 0.0
        %4616 = vmatpush2.msra.mxu0 0.0
        %4617 = vmatprep.mubr.f32.mxu0 0.0
        %4618 = vmatmul.mubr.f32.gmra.mxu0 %v4530
        %v4619 = vpop.f32.mrf.mxu0
        %v4620 = vadd.f32 %v4528, %v4619
        %v4621 = vpop.f32.mrf.mxu0
        %4622 = vmatprep.mubr.f32.mxu0 0.0
        %4623 = vmatmul.mubr.f32.gmra.mxu0 %v4533
        %v4624 = vpop.f32.mrf.mxu0
        %v4625 = vadd.f32 %v4528, %v4624
        %v4626 = vpop.f32.mrf.mxu0
        %4627 = vmatprep.mubr.f32.mxu0 0.0
        %4628 = vmatmul.mubr.f32.gmra.mxu0 %v4536
        %v4629 = vpop.f32.mrf.mxu0
        %v4630 = vadd.f32 %v4528, %v4629
        %v4631 = vpop.f32.mrf.mxu0
        %4632 = vmatprep.mubr.f32.mxu0 0.0
        %4633 = vmatmul.mubr.f32.gmra.mxu0 %v4539
        %v4634 = vpop.f32.mrf.mxu0
        %v4635 = vadd.f32 %v4528, %v4634
        %v4636 = vpop.f32.mrf.mxu0
        %4637 = vmatprep.mubr.f32.mxu0 0.0
        %4638 = vmatmul.mubr.f32.gmra.mxu0 %v4542
        %v4639 = vpop.f32.mrf.mxu0
        %v4640 = vadd.f32 %v4528, %v4639
        %v4641 = vpop.f32.mrf.mxu0
        %4642 = vmatprep.mubr.f32.mxu0 0.0
        %4643 = vmatmul.mubr.f32.gmra.mxu0 %v4545
        %v4644 = vpop.f32.mrf.mxu0
        %v4645 = vadd.f32 %v4528, %v4644
        %v4646 = vpop.f32.mrf.mxu0
        %4647 = vmatprep.mubr.f32.mxu0 0.0
        %4648 = vmatmul.mubr.f32.gmra.mxu0 %v4548
        %v4649 = vpop.f32.mrf.mxu0
        %v4650 = vadd.f32 %v4528, %v4649
        %v4651 = vpop.f32.mrf.mxu0
        %4652 = vmatprep.mubr.f32.mxu0 0.0
        %4653 = vmatmul.mubr.f32.gmra.mxu0 %v4551
        %v4654 = vpop.f32.mrf.mxu0
        %v4655 = vadd.f32 %v4528, %v4654
        %v4656 = vpop.f32.mrf.mxu0
        %4657 = vdwg.mxu0
        %v4658 = vmax.f32 %v4620, 0.0
        %v4659 = vmax.f32 %v4625, 0.0
        %v4660 = vmax.f32 %v4630, 0.0
        %v4661 = vmax.f32 %v4635, 0.0
        %v4662 = vmax.f32 %v4640, 0.0
        %v4663 = vmax.f32 %v4645, 0.0
        %v4664 = vmax.f32 %v4650, 0.0
        %v4665 = vmax.f32 %v4655, 0.0
        %v4666 = vlaneseq
        %v4667 = vshrl.u32 %v4666, 7
        %v4668 = vsub.s32 6, %v4667
        %v4669 = vrot.slane %v307, %v4668
        %v4671 = vsel %vm719, %v4658, 0
        %v4674 = vsel %vm719, %v4659, 0
        %v4677 = vsel %vm719, %v4660, 0
        %v4680 = vsel %vm719, %v4661, 0
        %v4683 = vsel %vm719, %v4662, 0
        %v4686 = vsel %vm719, %v4663, 0
        %v4689 = vsel %vm719, %v4664, 0
        %v4692 = vsel %vm719, %v4665, 0
        %4694 = vmatprep.subr.mxu0 0.0
        %4695 = vmatpush1.msra.mxu0 0.0
        %4696 = vmatprep.subr.mxu0 0.0
        %4697 = vmatpush1.msra.mxu0 0.0
        %4698 = vmatprep.subr.mxu0 0.0
        %4699 = vmatpush1.msra.mxu0 0.0
        %4700 = vmatprep.subr.mxu0 0.0
        %4701 = vmatpush1.msra.mxu0 0.0
        %4702 = vmatprep.subr.mxu0 0.0
        %4703 = vmatpush1.msra.mxu0 0.0
        %4704 = vmatprep.subr.mxu0 0.0
        %4705 = vmatpush1.msra.mxu0 0.0
        %4706 = vmatprep.subr.mxu0 0.0
        %4707 = vmatpush1.msra.mxu0 0.0
        %4708 = vmatprep.subr.mxu0 0.0
        %4709 = vmatpush1.msra.mxu0 0.0
        %4710 = vmatprep.subr.mxu0 0.0
        %4711 = vmatpush1.msra.mxu0 0.0
        %4712 = vmatprep.subr.mxu0 0.0
        %4713 = vmatpush1.msra.mxu0 0.0
        %4714 = vmatprep.subr.mxu0 0.0
        %4715 = vmatpush1.msra.mxu0 0.0
        %4716 = vmatprep.subr.mxu0 0.0
        %4717 = vmatpush1.msra.mxu0 0.0
        %4718 = vmatprep.subr.mxu0 0.0
        %4719 = vmatpush1.msra.mxu0 0.0
        %4720 = vmatprep.subr.mxu0 0.0
        %4721 = vmatpush1.msra.mxu0 0.0
        %4722 = vmatprep.subr.mxu0 0.0
        %4723 = vmatpush1.msra.mxu0 %v302
        %4724 = vmatprep.subr.mxu0 0.0
        %4725 = vmatpush1.msra.mxu0 %v296
        %4726 = vmatprep.subr.mxu0 0.0
        %4727 = vmatpush2.msra.mxu0 0.0
        %4728 = vmatprep.subr.mxu0 0.0
        %4729 = vmatpush2.msra.mxu0 0.0
        %4730 = vmatprep.subr.mxu0 0.0
        %4731 = vmatpush2.msra.mxu0 0.0
        %4732 = vmatprep.subr.mxu0 0.0
        %4733 = vmatpush2.msra.mxu0 0.0
        %4734 = vmatprep.subr.mxu0 0.0
        %4735 = vmatpush2.msra.mxu0 0.0
        %4736 = vmatprep.subr.mxu0 0.0
        %4737 = vmatpush2.msra.mxu0 0.0
        %4738 = vmatprep.subr.mxu0 0.0
        %4739 = vmatpush2.msra.mxu0 0.0
        %4740 = vmatprep.subr.mxu0 0.0
        %4741 = vmatpush2.msra.mxu0 0.0
        %4742 = vmatprep.subr.mxu0 0.0
        %4743 = vmatpush2.msra.mxu0 0.0
        %4744 = vmatprep.subr.mxu0 0.0
        %4745 = vmatpush2.msra.mxu0 0.0
        %4746 = vmatprep.subr.mxu0 0.0
        %4747 = vmatpush2.msra.mxu0 0.0
        %4748 = vmatprep.subr.mxu0 0.0
        %4749 = vmatpush2.msra.mxu0 0.0
        %4750 = vmatprep.subr.mxu0 0.0
        %4751 = vmatpush2.msra.mxu0 0.0
        %4752 = vmatprep.subr.mxu0 0.0
        %4753 = vmatpush2.msra.mxu0 0.0
        %4754 = vmatprep.subr.mxu0 0.0
        %4755 = vmatpush2.msra.mxu0 0.0
        %4756 = vmatprep.subr.mxu0 0.0
        %4757 = vmatpush2.msra.mxu0 0.0
        %4758 = vmatprep.mubr.f32.mxu0 0.0
        %4759 = vmatmul.mubr.f32.gmra.mxu0 %v4671
        %v4760 = vpop.f32.mrf.mxu0
        %v4761 = vadd.f32 %v4669, %v4760
        %v4762 = vpop.f32.mrf.mxu0
        %4763 = vmatprep.mubr.f32.mxu0 0.0
        %4764 = vmatmul.mubr.f32.gmra.mxu0 %v4674
        %v4765 = vpop.f32.mrf.mxu0
        %v4766 = vadd.f32 %v4669, %v4765
        %v4767 = vpop.f32.mrf.mxu0
        %4768 = vmatprep.mubr.f32.mxu0 0.0
        %4769 = vmatmul.mubr.f32.gmra.mxu0 %v4677
        %v4770 = vpop.f32.mrf.mxu0
        %v4771 = vadd.f32 %v4669, %v4770
        %v4772 = vpop.f32.mrf.mxu0
        %4773 = vmatprep.mubr.f32.mxu0 0.0
        %4774 = vmatmul.mubr.f32.gmra.mxu0 %v4680
        %v4775 = vpop.f32.mrf.mxu0
        %v4776 = vadd.f32 %v4669, %v4775
        %v4777 = vpop.f32.mrf.mxu0
        %4778 = vmatprep.mubr.f32.mxu0 0.0
        %4779 = vmatmul.mubr.f32.gmra.mxu0 %v4683
        %v4780 = vpop.f32.mrf.mxu0
        %v4781 = vadd.f32 %v4669, %v4780
        %v4782 = vpop.f32.mrf.mxu0
        %4783 = vmatprep.mubr.f32.mxu0 0.0
        %4784 = vmatmul.mubr.f32.gmra.mxu0 %v4686
        %v4785 = vpop.f32.mrf.mxu0
        %v4786 = vadd.f32 %v4669, %v4785
        %v4787 = vpop.f32.mrf.mxu0
        %4788 = vmatprep.mubr.f32.mxu0 0.0
        %4789 = vmatmul.mubr.f32.gmra.mxu0 %v4689
        %v4790 = vpop.f32.mrf.mxu0
        %v4791 = vadd.f32 %v4669, %v4790
        %v4792 = vpop.f32.mrf.mxu0
        %4793 = vmatprep.mubr.f32.mxu0 0.0
        %4794 = vmatmul.mubr.f32.gmra.mxu0 %v4692
        %v4795 = vpop.f32.mrf.mxu0
        %v4796 = vadd.f32 %v4669, %v4795
        %v4797 = vpop.f32.mrf.mxu0
        %4798 = vdwg.mxu0
        %v4799 = vmax.f32 %v4761, 0.0
        %v4800 = vmax.f32 %v4766, 0.0
        %v4801 = vmax.f32 %v4771, 0.0
        %v4802 = vmax.f32 %v4776, 0.0
        %v4803 = vmax.f32 %v4781, 0.0
        %v4804 = vmax.f32 %v4786, 0.0
        %v4805 = vmax.f32 %v4791, 0.0
        %v4806 = vmax.f32 %v4796, 0.0
        %v4807 = vsel %vm324, %v4799, 0.0
        %v4808 = vrot.slane %v4807, 4
        %v4809 = vadd.f32 %v4807, %v4808
        %v4810 = vrot.slane %v4809, 2
        %v4811 = vadd.f32 %v4809, %v4810
        %v4812 = vrot.slane %v4811, 1
        %v4813 = vadd.f32 %v4811, %v4812
        %v4814 = vsel %vm324, %v4800, 0.0
        %v4815 = vrot.slane %v4814, 4
        %v4816 = vadd.f32 %v4814, %v4815
        %v4817 = vrot.slane %v4816, 2
        %v4818 = vadd.f32 %v4816, %v4817
        %v4819 = vrot.slane %v4818, 1
        %v4820 = vadd.f32 %v4818, %v4819
        %v4821 = vsel %vm324, %v4801, 0.0
        %v4822 = vrot.slane %v4821, 4
        %v4823 = vadd.f32 %v4821, %v4822
        %v4824 = vrot.slane %v4823, 2
        %v4825 = vadd.f32 %v4823, %v4824
        %v4826 = vrot.slane %v4825, 1
        %v4827 = vadd.f32 %v4825, %v4826
        %v4828 = vsel %vm324, %v4802, 0.0
        %v4829 = vrot.slane %v4828, 4
        %v4830 = vadd.f32 %v4828, %v4829
        %v4831 = vrot.slane %v4830, 2
        %v4832 = vadd.f32 %v4830, %v4831
        %v4833 = vrot.slane %v4832, 1
        %v4834 = vadd.f32 %v4832, %v4833
        %v4835 = vsel %vm324, %v4803, 0.0
        %v4836 = vrot.slane %v4835, 4
        %v4837 = vadd.f32 %v4835, %v4836
        %v4838 = vrot.slane %v4837, 2
        %v4839 = vadd.f32 %v4837, %v4838
        %v4840 = vrot.slane %v4839, 1
        %v4841 = vadd.f32 %v4839, %v4840
        %v4842 = vsel %vm324, %v4804, 0.0
        %v4843 = vrot.slane %v4842, 4
        %v4844 = vadd.f32 %v4842, %v4843
        %v4845 = vrot.slane %v4844, 2
        %v4846 = vadd.f32 %v4844, %v4845
        %v4847 = vrot.slane %v4846, 1
        %v4848 = vadd.f32 %v4846, %v4847
        %v4849 = vsel %vm324, %v4805, 0.0
        %v4850 = vrot.slane %v4849, 4
        %v4851 = vadd.f32 %v4849, %v4850
        %v4852 = vrot.slane %v4851, 2
        %v4853 = vadd.f32 %v4851, %v4852
        %v4854 = vrot.slane %v4853, 1
        %v4855 = vadd.f32 %v4853, %v4854
        %v4856 = vsel %vm324, %v4806, 0.0
        %v4857 = vrot.slane %v4856, 4
        %v4858 = vadd.f32 %v4856, %v4857
        %v4859 = vrot.slane %v4858, 2
        %v4860 = vadd.f32 %v4858, %v4859
        %v4861 = vrot.slane %v4860, 1
        %v4862 = vadd.f32 %v4860, %v4861
        %v4863 = vlaneseq
        %v4864 = vshrl.u32 %v4863, 7
        %v4865 = vsub.s32 7, %v4864
        %v4866 = vrot.slane %v307, %v4865
        %vm4875 = vcmask 1041409
        %v4876 = vsel %vm4875, %v4820, %v4813
        %vm4877 = vcmask 1042434
        %v4878 = vsel %vm4877, %v4827, %v4876
        %vm4879 = vcmask 1043459
        %v4880 = vsel %vm4879, %v4834, %v4878
        %vm4881 = vcmask 1044484
        %v4882 = vsel %vm4881, %v4841, %v4880
        %vm4883 = vcmask 1045509
        %v4884 = vsel %vm4883, %v4848, %v4882
        %vm4885 = vcmask 1046534
        %v4886 = vsel %vm4885, %v4855, %v4884
        %vm4887 = vcmask 1047559
        %v4888 = vsel %vm4887, %v4862, %v4886
        %v4889 = vsel %vm324, %v4888, 0
        %v4892 = vsel %vm349, %v297, 0
        %4894 = vmatprep.subr.mxu0 0.0
        %4895 = vmatpush1.msra.mxu0 0.0
        %4896 = vmatprep.subr.mxu0 0.0
        %4897 = vmatpush1.msra.mxu0 0.0
        %4898 = vmatprep.subr.mxu0 0.0
        %4899 = vmatpush1.msra.mxu0 0.0
        %4900 = vmatprep.subr.mxu0 0.0
        %4901 = vmatpush1.msra.mxu0 0.0
        %4902 = vmatprep.subr.mxu0 0.0
        %4903 = vmatpush1.msra.mxu0 0.0
        %4904 = vmatprep.subr.mxu0 0.0
        %4905 = vmatpush1.msra.mxu0 0.0
        %4906 = vmatprep.subr.mxu0 0.0
        %4907 = vmatpush1.msra.mxu0 0.0
        %4908 = vmatprep.subr.mxu0 0.0
        %4909 = vmatpush1.msra.mxu0 0.0
        %4910 = vmatprep.subr.mxu0 0.0
        %4911 = vmatpush1.msra.mxu0 0.0
        %4912 = vmatprep.subr.mxu0 0.0
        %4913 = vmatpush1.msra.mxu0 0.0
        %4914 = vmatprep.subr.mxu0 0.0
        %4915 = vmatpush1.msra.mxu0 0.0
        %4916 = vmatprep.subr.mxu0 0.0
        %4917 = vmatpush1.msra.mxu0 0.0
        %4918 = vmatprep.subr.mxu0 0.0
        %4919 = vmatpush1.msra.mxu0 0.0
        %4920 = vmatprep.subr.mxu0 0.0
        %4921 = vmatpush1.msra.mxu0 0.0
        %4922 = vmatprep.subr.mxu0 0.0
        %4923 = vmatpush1.msra.mxu0 0.0
        %4924 = vmatprep.subr.mxu0 0.0
        %4925 = vmatpush1.msra.mxu0 %v4892
        %4926 = vmatprep.subr.mxu0 0.0
        %4927 = vmatpush2.msra.mxu0 0.0
        %4928 = vmatprep.subr.mxu0 0.0
        %4929 = vmatpush2.msra.mxu0 0.0
        %4930 = vmatprep.subr.mxu0 0.0
        %4931 = vmatpush2.msra.mxu0 0.0
        %4932 = vmatprep.subr.mxu0 0.0
        %4933 = vmatpush2.msra.mxu0 0.0
        %4934 = vmatprep.subr.mxu0 0.0
        %4935 = vmatpush2.msra.mxu0 0.0
        %4936 = vmatprep.subr.mxu0 0.0
        %4937 = vmatpush2.msra.mxu0 0.0
        %4938 = vmatprep.subr.mxu0 0.0
        %4939 = vmatpush2.msra.mxu0 0.0
        %4940 = vmatprep.subr.mxu0 0.0
        %4941 = vmatpush2.msra.mxu0 0.0
        %4942 = vmatprep.subr.mxu0 0.0
        %4943 = vmatpush2.msra.mxu0 0.0
        %4944 = vmatprep.subr.mxu0 0.0
        %4945 = vmatpush2.msra.mxu0 0.0
        %4946 = vmatprep.subr.mxu0 0.0
        %4947 = vmatpush2.msra.mxu0 0.0
        %4948 = vmatprep.subr.mxu0 0.0
        %4949 = vmatpush2.msra.mxu0 0.0
        %4950 = vmatprep.subr.mxu0 0.0
        %4951 = vmatpush2.msra.mxu0 0.0
        %4952 = vmatprep.subr.mxu0 0.0
        %4953 = vmatpush2.msra.mxu0 0.0
        %4954 = vmatprep.subr.mxu0 0.0
        %4955 = vmatpush2.msra.mxu0 0.0
        %4956 = vmatprep.subr.mxu0 0.0
        %4957 = vmatpush2.msra.mxu0 0.0
        %4958 = vmatprep.mubr.f32.mxu0 0.0
        %4959 = vmatmul.mubr.f32.gmra.mxu0 %v4889
        %v4960 = vpop.f32.mrf.mxu0
        %v4961 = vadd.f32 %v4866, %v4960
        %v4962 = vpop.f32.mrf.mxu0
        %4963 = vdwg.mxu0
        %v4964 = vmax.f32 %v4961, 0.0
        %4965 = vst [vmem:[%s276] sm:$0xff] %v4964
        %s4966 = sand.u32 %s165, 1
        %s4967 = scalar_lea.sflag [#allocation4], %s4966
        %s4968 = sand.u32 %s165, 1
        %s4969 = smul.addr %s4968, 8
        %s4970 = scalar_lea.vmem [#allocation5], %s4969
        // Predicated region
        $region49: #{tpu_custom_call.1} parent=43 // pred_check
          %p4971 = pneg %p175
        $region50: #{tpu_custom_call.1} parent=43 // pred_check_branch
          %4973 = sbr.rel (%p4971) target = $region52
        $region51: #{tpu_custom_call.1} parent=43 // pred_region
          %s4975 = ssub.s32 128, 128
          %4976 = vsyncadd %s4967, %s4975
          %s4977 = smul.addr %s21, 128
          %s4978 = scalar_lea.hbm %s6, %s4977
          %s4980 = sshll.u32 %s4970, 4
          %s4981 = int_to_ptr.vmem [resolvable:$true] %s4980
          %4983 = dma.vmem_to_hbm [thread:$0]  %s4981, 128, %s4978, %s4967
        $region52: #{tpu_custom_call.1} parent=43 // pred_fallthru
          _
      $region44: #{tpu_custom_call.1} parent=5 // pred_fallthru
        _
      %p4984 = scmp.le.s32.totalorder 2, %s16
      // Predicated region
      $region53: #{tpu_custom_call.1} parent=5 // pred_check
        %p4985 = pneg %p4984
      $region54: #{tpu_custom_call.1} parent=5 // pred_check_branch
        %4987 = sbr.rel (%p4985) target = $region56
      $region55: #{tpu_custom_call.1} parent=5 // pred_region
        %s4988 = ssub.s32 %s16, 2
        // Predicated region
        $region57: #{tpu_custom_call.1} parent=55 // pred_check
          %p4989 = pneg %p181
        $region58: #{tpu_custom_call.1} parent=55 // pred_check_branch
          %4991 = sbr.rel (%p4989) target = $region60
        $region59: #{tpu_custom_call.1} parent=55 // pred_region
          %s4992 = sand.u32 %s166, 1
          %s4993 = scalar_lea.sflag [#allocation4], %s4992
          %s4994 = sand.u32 %s166, 1
          %s4995 = smul.addr %s4994, 8
          %s4996 = scalar_lea.vmem [#allocation5], %s4995
          %4997 = dma.done %s4993, 128
        $region60: #{tpu_custom_call.1} parent=55 // pred_fallthru
          _
      $region56: #{tpu_custom_call.1} parent=5 // pred_fallthru
        _
    $region6: #{tpu_custom_call.1} parent=1 // loop_footer
      %s20 = sadd.s32 1, %s16
    $region7: #{tpu_custom_call.1} parent=1 // loop_footer_branch
      %15 = sbr.rel target = $region3
    $region8: #{tpu_custom_call.1} parent=1 // loop_exit
      _
    %4998 = vsyncpa [#allocation3], 1
    %s4999 = scalar_lea.sflag [#allocation3], 1
    %5000 = vsyncpa %s4999, 1
    %5001 = vsyncpa [#allocation4], 1
    %s5002 = scalar_lea.sflag [#allocation4], 1
    %5003 = vsyncpa %s5002, 1

</llo_original>
